<compile_context>
chip_gen: v7x
topology: tpu7x:2x2x1
jax: 0.10.0
libtpu: 0.0.40
codegen_flags: <defaults>
</compile_context>

<pallas_src>
import functools

import jax
import jax.numpy as jnp
from jax import lax
from jax.experimental import pallas as pl
from jax.experimental.pallas import tpu as pltpu


# ----------------------------- shared math helpers -----------------------------
def _mm(x, w):
    """x: [B, T, Din] (f32 or bf16), w: [Din, Dout] bf16  ->  f32 [B, T, Dout]."""
    B, T, Din = x.shape
    y = jnp.dot(x.reshape(B * T, Din).astype(jnp.bfloat16), w,
                preferred_element_type=jnp.float32)
    return y.reshape(B, T, w.shape[-1])


def _layer_norm(x, w, b, eps=1e-5):
    mu = jnp.mean(x, axis=-1, keepdims=True)
    var = jnp.mean(jnp.square(x - mu), axis=-1, keepdims=True)
    return (x - mu) * jax.lax.rsqrt(var + eps) * w + b


# ----------------------------------- kernel ------------------------------------
def _block_encoder_kernel(
    ge_ref, ev_ref, mask_ref,                 # per-block activations
    wcg_ref, wec_ref, bce_ref,                # fused combine / expr-path params
    wqkv_ref, bqkv_ref, wo_ref, bo_ref,       # attention weights (fused QKV, [L,...])
    w1_ref, b1_ref, w2_ref, b2_ref,           # feed-forward weights
    ln_ref, lnf_ref,                          # per-layer LN params, final encoder LN
    out_ref,                                  # [TB, 1, H] accumulator / final output
    valid_sc,                                 # VMEM scratch [TB, 1] valid-length acc
    *, n_layers, n_heads, ff_chunk,
):
    blk = pl.program_id(1)
    n_blk = pl.num_programs(1)

    @pl.when(blk == 0)
    def _init():
        out_ref[...] = jnp.zeros_like(out_ref)
        valid_sc[...] = jnp.zeros_like(valid_sc)

    ge = ge_ref[...]                          # [TB, T, H] bf16 gene embeddings
    ev = ev_ref[...]                          # [TB, T, 1] f32 expression values
    mk = mask_ref[...][:, 0]                  # [TB, 1, T] f32, 1.0 == padding (lane-dense)
    TB, T, H = ge.shape
    F = w1_ref.shape[-1]
    dh = H // n_heads
    scale = 1.0 / (float(dh) ** 0.5)

    # combine_layer on concat([gene_emb, expr_emb]) with the expr path folded:
    #   combine(cat(ge, ev*we+be)) = ge@Wcg + ev*(we@Wce) + (be@Wce + bc)
    x = _mm(ge, wcg_ref[...]) + ev * wec_ref[...][None] + bce_ref[...][None]

    # fully padded blocks: zero the input, force the output to 1e-5 at the end
    # (PyTorch: NaN from all-masked softmax -> nan_to_num(nan=1e-5)).
    all_masked = jnp.sum(mk, axis=-1) >= jnp.float32(T)       # [TB, 1] bool
    x = jnp.where(all_masked[:, :, None], 0.0, x)
    neg = mk * jnp.float32(-1e9)                              # [TB, 1, T] key-padding bias

    def layer(l, x):
        # ---- fused QKV projection (one [BT,H] x [H,3H] matmul) ----
        qkv = _mm(x, wqkv_ref[l]) + bqkv_ref[l][None]          # [TB, T, 3H] f32
        qb = (qkv[:, :, 0:H] * scale).astype(jnp.bfloat16)
        kb = qkv[:, :, H:2 * H].astype(jnp.bfloat16)
        vb = qkv[:, :, 2 * H:3 * H].astype(jnp.bfloat16)

        # ---- per-head attention; output projection hoisted out of the loop ----
        ctx = []
        for h in range(n_heads):
            lo, hi = h * dh, (h + 1) * dh
            s = jnp.einsum('bqd,bkd->bqk', qb[:, :, lo:hi], kb[:, :, lo:hi],
                           preferred_element_type=jnp.float32) + neg
            m = jnp.max(s, axis=-1, keepdims=True)
            p = jnp.exp(s - m)
            p = p * pl.reciprocal(jnp.sum(p, axis=-1, keepdims=True), approx=True)
            ctx.append(jnp.einsum('bqk,bkd->bqd', p.astype(jnp.bfloat16),
                                  vb[:, :, lo:hi],
                                  preferred_element_type=jnp.float32))
        ctx = jnp.concatenate(ctx, axis=-1)                    # [TB, T, H]
        attn = _mm(ctx, wo_ref[l]) + bo_ref[l][None]

        ln = ln_ref[l]                                         # [4, H]
        # post-norm encoder layer (PyTorch norm_first=False, relu activation)
        x = _layer_norm(x + attn, ln[0:1][None], ln[1:2][None])

        # ---- FFN, chunked over F to bound the live [BT, F] intermediate ----
        x2 = x.reshape(TB * T, H).astype(jnp.bfloat16)
        ff = jnp.zeros((TB * T, H), jnp.float32)
        for f0 in range(0, F, ff_chunk):
            fc = min(ff_chunk, F - f0)
            h1 = jnp.dot(x2, w1_ref[l, :, f0:f0 + fc],
                         preferred_element_type=jnp.float32) + b1_ref[l, :, f0:f0 + fc]
            h1 = jnp.maximum(h1, 0.0).astype(jnp.bfloat16)
            ff = ff + jnp.dot(h1, w2_ref[l, f0:f0 + fc, :],
                              preferred_element_type=jnp.float32)
        ff = ff.reshape(TB, T, H) + b2_ref[l][None]
        x = _layer_norm(x + ff, ln[2:3][None], ln[3:4][None])
        return x

    x = lax.fori_loop(0, n_layers, layer, x)

    # nn.Transformer adds a final encoder LayerNorm
    lnf = lnf_ref[...]
    x = _layer_norm(x, lnf[0:1][None], lnf[1:2][None])

    # nan_to_num(nan=1e-5): only fully-masked blocks produce NaN in the reference
    x = jnp.where(all_masked[:, :, None], jnp.float32(1e-5), x)

    out_ref[...] = out_ref[...] + jnp.sum(x, axis=1, keepdims=True)       # [TB,1,H]
    valid_sc[...] = valid_sc[...] + jnp.sum(1.0 - mk, axis=-1)            # [TB,1]

    @pl.when(blk == n_blk - 1)
    def _final():
        # Guard against divide-by-zero for a fully-padded row (PyTorch would give
        # inf/NaN there); only changes behavior in that degenerate case.
        denom = jnp.maximum(valid_sc[...], 1.0)
        out_ref[...] = out_ref[...] / denom[:, :, None]


# ---------------------------------- wrapper -------------------------------------
def block_gene_transformer(gene_ids, expr_values, mask, params, *,
                           block_size, n_heads, n_layers,
                           batch_block=None, ff_chunk=512):
    B, S = gene_ids.shape
    H = params['emb'].shape[1]
    F = params['w1'].shape[-1]
    L = n_layers
    assert S % block_size == 0, "kernel assumes S divisible by block_size"
    assert block_size % 8 == 0, "block_size must be a multiple of 8 (sublane tiling)"
    assert H % n_heads == 0
    TB = B if batch_block is None else batch_block
    assert B % TB == 0
    NB = S // block_size
    T = block_size
    ff_chunk = min(ff_chunk, F)

    # glue: embedding gather + layout / dtype prep
    # TODO(synk): the embedding gather has no clean rectangular BlockSpec pattern,
    # so it stays in XLA glue (a DMA-gather kernel would be the next step).
    ge = params['emb'][gene_ids].astype(jnp.bfloat16)             # [B, S, H]
    ev = expr_values.astype(jnp.float32)[..., None]               # [B, S, 1]
    maskf = mask.astype(jnp.float32).reshape(B, NB, 1, T)         # [B, NB, 1, T], 1.0 = pad

    bf16 = lambda a: a.astype(jnp.bfloat16)
    f32 = lambda a: a.astype(jnp.float32)

    wcg = bf16(params['wcg'])
    # expr path folded algebraically:  ee @ Wce = ev*(we@Wce) + be@Wce
    wec = f32(params['we'] @ params['wce'])                       # [1, H]
    bce = f32(params['be'] @ params['wce'] + params['bc'])        # [1, H]
    # fused QKV: [L, 3, H, H] (in,out) -> [L, H, 3H]
    wqkvf = bf16(jnp.transpose(params['wqkv'], (0, 2, 1, 3)).reshape(L, H, 3 * H))
    bqkvf = f32(params['bqkv'].reshape(L, 1, 3 * H))
    wo = bf16(params['wo'])
    bo = f32(params['bo'])
    w1 = bf16(params['w1'])
    b1 = f32(params['b1'])
    w2 = bf16(params['w2'])
    b2 = f32(params['b2'])
    ln = f32(params['ln'])
    lnf = f32(params['lnf'])

    args = (ge, ev, maskf, wcg, wec, bce, wqkvf, bqkvf, wo, bo,
            w1, b1, w2, b2, ln, lnf)

    kernel = functools.partial(_block_encoder_kernel,
                               n_layers=n_layers, n_heads=n_heads,
                               ff_chunk=ff_chunk)

    def run(buffered_weights):
        def wspec(shape):
            zeros = (0,) * len(shape)
            if buffered_weights:
                # constant index_map -> weights stay resident; single-buffer them
                # so they are not pointlessly double-buffered (halves weight VMEM).
                return pl.BlockSpec(shape, lambda bi, blk: zeros,
                                    pipeline_mode=pl.Buffered(1))
            return pl.BlockSpec(shape, lambda bi, blk: zeros)

        grid_spec = pltpu.PrefetchScalarGridSpec(
            num_scalar_prefetch=0,
            grid=(B // TB, NB),
            in_specs=[
                pl.BlockSpec((TB, T, H), lambda bi, blk: (bi, blk, 0)),     # gene emb
                pl.BlockSpec((TB, T, 1), lambda bi, blk: (bi, blk, 0)),     # expr vals
                pl.BlockSpec((TB, 1, 1, T), lambda bi, blk: (bi, blk, 0, 0)),  # mask
                wspec((H, H)), wspec((1, H)), wspec((1, H)),                # combine
                wspec((L, H, 3 * H)), wspec((L, 1, 3 * H)),                 # fused QKV
                wspec((L, H, H)), wspec((L, 1, H)),                         # out proj
                wspec((L, H, F)), wspec((L, 1, F)),                         # ffn 1
                wspec((L, F, H)), wspec((L, 1, H)),                         # ffn 2
                wspec((L, 4, H)),                                           # per-layer LN
                wspec((2, H)),                                              # final LN
            ],
            out_specs=pl.BlockSpec((TB, 1, H), lambda bi, blk: (bi, 0, 0)),
            scratch_shapes=[pltpu.VMEM((TB, 1), jnp.float32)],
        )
        out = pl.pallas_call(
            kernel,
            out_shape=jax.ShapeDtypeStruct((B, 1, H), jnp.float32),
            grid_spec=grid_spec,
            compiler_params=pltpu.CompilerParams(
                dimension_semantics=("parallel", "arbitrary"),
                vmem_limit_bytes=48 * 1024 * 1024),
        )(*args)
        return jax.block_until_ready(out)

    try:
        out = run(True)
    except Exception:
        # TODO(synk): pl.Buffered(1) single-buffering not supported on this jax
        # version; fall back to default double-buffered weight specs.
        out = run(False)
    return out[:, 0, :]


# ------------------------------- pure-JAX reference ------------------------------
def _ref_linear(x, w, b=None):
    y = jnp.einsum('btd,do->bto', x, w, preferred_element_type=jnp.float32)
    if b is not None:
        y = y + b
    return y


def reference_forward(params, gene_ids, expr_values, mask, *,
                      block_size, n_heads, n_layers):
    ge = params['emb'][gene_ids]
    ee = expr_values[..., None] * params['we'][None] + params['be'][None]
    x = _ref_linear(ge, params['wcg']) + _ref_linear(ee, params['wce']) + params['bc'][None]
    B, S, H = x.shape
    dh = H // n_heads
    maskf = mask.astype(jnp.float32)
    nb = S // block_size

    out_sum = jnp.zeros((B, H), jnp.float32)
    valid = jnp.zeros((B, 1), jnp.float32)
    for bi in range(nb):
        xb = x[:, bi * block_size:(bi + 1) * block_size]
        mb = maskf[:, bi * block_size:(bi + 1) * block_size]
        all_masked = jnp.sum(mb, axis=1, keepdims=True) >= float(block_size)
        xb = jnp.where(all_masked[:, :, None], 0.0, xb)
        neg = mb[:, None, :] * (-1e9)
        h = xb
        for l in range(n_layers):
            wqkv = params['wqkv'][l]
            bqkv = params['bqkv'][l]
            q = _ref_linear(h, wqkv[0], bqkv[0:1][None])
            k = _ref_linear(h, wqkv[1], bqkv[1:2][None])
            v = _ref_linear(h, wqkv[2], bqkv[2:3][None])
            attn = jnp.zeros_like(h)
            for hd in range(n_heads):
                sl = slice(hd * dh, (hd + 1) * dh)
                s = jnp.einsum('bqd,bkd->bqk', q[..., sl] / (dh ** 0.5), k[..., sl]) + neg
                p = jax.nn.softmax(s, axis=-1)
                ctx = jnp.einsum('bqk,bkd->bqd', p, v[..., sl])
                attn = attn + _ref_linear(ctx, params['wo'][l][sl, :])
            attn = attn + params['bo'][l][None]
            ln = params['ln'][l]
            h = _layer_norm(h + attn, ln[0:1][None], ln[1:2][None])
            ff = jax.nn.relu(_ref_linear(h, params['w1'][l], params['b1'][l][None]))
            ff = _ref_linear(ff, params['w2'][l], params['b2'][l][None])
            h = _layer_norm(h + ff, ln[2:3][None], ln[3:4][None])
        h = _layer_norm(h, params['lnf'][0:1][None], params['lnf'][1:2][None])
        h = jnp.where(all_masked[:, :, None], 1e-5, h)
        out_sum = out_sum + jnp.sum(h, axis=1)
        valid = valid + jnp.sum(1.0 - mb, axis=1, keepdims=True)
    return out_sum / valid


# --------------------------------- params init ----------------------------------
def init_params(key, vocab_size, H, F, L):
    ks = jax.random.split(key, 16)
    s = 0.1
    p = {
        'emb':  jax.random.normal(ks[0], (vocab_size, H), jnp.float32) * s,
        'we':   jax.random.normal(ks[1], (1, H), jnp.float32) * s,
        'be':   jax.random.normal(ks[2], (1, H), jnp.float32) * s,
        'wcg':  jax.random.normal(ks[3], (H, H), jnp.float32) * s,
        'wce':  jax.random.normal(ks[4], (H, H), jnp.float32) * s,
        'bc':   jax.random.normal(ks[5], (1, H), jnp.float32) * s,
        'wqkv': jax.random.normal(ks[6], (L, 3, H, H), jnp.float32) * s,
        'bqkv': jax.random.normal(ks[7], (L, 3, H), jnp.float32) * s,
        'wo':   jax.random.normal(ks[8], (L, H, H), jnp.float32) * s,
        'bo':   jax.random.normal(ks[9], (L, 1, H), jnp.float32) * s,
        'w1':   jax.random.normal(ks[10], (L, H, F), jnp.float32) * s,
        'b1':   jax.random.normal(ks[11], (L, 1, F), jnp.float32) * s,
        'w2':   jax.random.normal(ks[12], (L, F, H), jnp.float32) * s,
        'b2':   jax.random.normal(ks[13], (L, 1, H), jnp.float32) * s,
        'ln':   jnp.stack([jnp.ones((L, H)), jnp.zeros((L, H)),
                           jnp.ones((L, H)), jnp.zeros((L, H))], axis=1),   # [L,4,H]
        'lnf':  jnp.stack([jnp.ones((H,)), jnp.zeros((H,))], axis=0),       # [2,H]
    }
    return p


# ------------------------------------ main --------------------------------------
if __name__ == "__main__":
    # small shapes: batch=2, seq=16, hidden=32, heads=4, layers=3, ffn=64, block=8
    # (PyTorch defaults are block_size=200, hidden=128, dim_feedforward=2048;
    #  shrunk here but fully parameterized.)
    B, S, H, F = 2, 16, 32, 64
    n_heads, n_layers, block_size = 4, 3, 8
    vocab_size = 50

    key = jax.random.PRNGKey(0)
    kp, kg, ke = jax.random.split(key, 3)
    params = init_params(kp, vocab_size, H, F, n_layers)

    gene_ids = jax.random.randint(kg, (B, S), 0, vocab_size)
    expr_values = jax.random.normal(ke, (B, S), jnp.float32)
    # mask: True == padding. batch 0: last 3 positions padded.
    # batch 1: entire second block padded (exercises the all-masked / nan_to_num path).
    mask = jnp.zeros((B, S), jnp.bool_)
    mask = mask.at[0, S - 3:].set(True)
    mask = mask.at[1, block_size:].set(True)

    out = block_gene_transformer(gene_ids, expr_values, mask, params,
                                 block_size=block_size, n_heads=n_heads,
                                 n_layers=n_layers,
                                 batch_block=1,      # exercise the parallel batch axis
                                 ff_chunk=512)
    out = jax.block_until_ready(out)

    ref = reference_forward(params, gene_ids, expr_values, mask,
                            block_size=block_size, n_heads=n_heads,
                            n_layers=n_layers)
    err = float(jnp.max(jnp.abs(out - ref)))
    assert bool(jnp.all(jnp.isfinite(out))), "non-finite output"
    # tolerance accounts for bf16 MXU matmuls vs the all-f32 reference
    assert err < 8e-2, f"kernel vs reference max abs diff too large: {err}"
    print("KERNEL_OK")
</pallas_src>

<mosaic_0001>
module attributes {stable_mosaic.version = 11 : i64} {
  func.func @_block_encoder_kernel(%arg0: i32, %arg1: i32, %arg2: memref<1x8x32xbf16, #tpu.memory_space<vmem>>, %arg3: memref<1x8x1xf32, #tpu.memory_space<vmem>>, %arg4: memref<1x1x1x8xf32, #tpu.memory_space<vmem>>, %arg5: memref<32x32xbf16, #tpu.memory_space<vmem>>, %arg6: memref<1x32xf32, #tpu.memory_space<vmem>>, %arg7: memref<1x32xf32, #tpu.memory_space<vmem>>, %arg8: memref<3x32x96xbf16, #tpu.memory_space<vmem>>, %arg9: memref<3x1x96xf32, #tpu.memory_space<vmem>>, %arg10: memref<3x32x32xbf16, #tpu.memory_space<vmem>>, %arg11: memref<3x1x32xf32, #tpu.memory_space<vmem>>, %arg12: memref<3x32x64xbf16, #tpu.memory_space<vmem>>, %arg13: memref<3x1x64xf32, #tpu.memory_space<vmem>>, %arg14: memref<3x64x32xbf16, #tpu.memory_space<vmem>>, %arg15: memref<3x1x32xf32, #tpu.memory_space<vmem>>, %arg16: memref<3x4x32xf32, #tpu.memory_space<vmem>>, %arg17: memref<2x32xf32, #tpu.memory_space<vmem>>, %arg18: memref<1x1x32xf32, #tpu.memory_space<vmem>>, %arg19: memref<1x1xf32, #tpu.memory_space<vmem>>) attributes {dimension_semantics = [#tpu.dimension_semantics<parallel>, #tpu.dimension_semantics<arbitrary>], iteration_bounds = array<i64: 2, 2>, scalar_prefetch = 0 : i64, scratch_operands = 1 : i64, tpu.core_type = #tpu.core_type<tc>, window_params = [{transform_indices = @transform_0, window_bounds = array<i64: 1, 8, 32>}, {transform_indices = @transform_1, window_bounds = array<i64: 1, 8, 1>}, {transform_indices = @transform_2, window_bounds = array<i64: 1, 1, 1, 8>}, {pipeline_mode = #tpu.pipeline_mode<synchronous>, transform_indices = @transform_3, window_bounds = array<i64: 32, 32>}, {pipeline_mode = #tpu.pipeline_mode<synchronous>, transform_indices = @transform_4, window_bounds = array<i64: 1, 32>}, {pipeline_mode = #tpu.pipeline_mode<synchronous>, transform_indices = @transform_5, window_bounds = array<i64: 1, 32>}, {pipeline_mode = #tpu.pipeline_mode<synchronous>, transform_indices = @transform_6, window_bounds = array<i64: 3, 32, 96>}, {pipeline_mode = #tpu.pipeline_mode<synchronous>, transform_indices = @transform_7, window_bounds = array<i64: 3, 1, 96>}, {pipeline_mode = #tpu.pipeline_mode<synchronous>, transform_indices = @transform_8, window_bounds = array<i64: 3, 32, 32>}, {pipeline_mode = #tpu.pipeline_mode<synchronous>, transform_indices = @transform_9, window_bounds = array<i64: 3, 1, 32>}, {pipeline_mode = #tpu.pipeline_mode<synchronous>, transform_indices = @transform_10, window_bounds = array<i64: 3, 32, 64>}, {pipeline_mode = #tpu.pipeline_mode<synchronous>, transform_indices = @transform_11, window_bounds = array<i64: 3, 1, 64>}, {pipeline_mode = #tpu.pipeline_mode<synchronous>, transform_indices = @transform_12, window_bounds = array<i64: 3, 64, 32>}, {pipeline_mode = #tpu.pipeline_mode<synchronous>, transform_indices = @transform_13, window_bounds = array<i64: 3, 1, 32>}, {pipeline_mode = #tpu.pipeline_mode<synchronous>, transform_indices = @transform_14, window_bounds = array<i64: 3, 4, 32>}, {pipeline_mode = #tpu.pipeline_mode<synchronous>, transform_indices = @transform_15, window_bounds = array<i64: 2, 32>}, {transform_indices = @transform_16, window_bounds = array<i64: 1, 1, 32>}]} {
    %c0_i32 = arith.constant 0 : i32
    %0 = arith.cmpi eq, %arg1, %c0_i32 : i32
    %1 = arith.extui %0 : i1 to i32
    %c0_i32_0 = arith.constant 0 : i32
    %2 = arith.cmpi ne, %1, %c0_i32_0 : i32
    scf.if %2 {
      %cst_45 = arith.constant 0.000000e+00 : f32
      %79 = vector.broadcast %cst_45 : f32 to vector<1x1x32xf32>
      %c0_46 = arith.constant 0 : index
      %c0_47 = arith.constant 0 : index
      %c0_48 = arith.constant 0 : index
      %80 = vector.load %arg18[%c0_46, %c0_47, %c0_48] : memref<1x1x32xf32, #tpu.memory_space<vmem>>, vector<1x1x32xf32>
      tpu.vector_store %arg18[%c0_46, %c0_47, %c0_48], %79 {strides = array<i32>} : memref<1x1x32xf32, #tpu.memory_space<vmem>>, vector<1x1x32xf32>,
      %cst_49 = arith.constant 0.000000e+00 : f32
      %81 = vector.broadcast %cst_49 : f32 to vector<1x1xf32>
      %c0_50 = arith.constant 0 : index
      %c0_51 = arith.constant 0 : index
      %82 = vector.load %arg19[%c0_50, %c0_51] : memref<1x1xf32, #tpu.memory_space<vmem>>, vector<1x1xf32>
      tpu.vector_store %arg19[%c0_50, %c0_51], %81 {strides = array<i32>} : memref<1x1xf32, #tpu.memory_space<vmem>>, vector<1x1xf32>,
    } else {
    }
    %c0 = arith.constant 0 : index
    %c0_1 = arith.constant 0 : index
    %c0_2 = arith.constant 0 : index
    %3 = vector.load %arg2[%c0, %c0_1, %c0_2] : memref<1x8x32xbf16, #tpu.memory_space<vmem>>, vector<1x8x32xbf16>
    %c0_3 = arith.constant 0 : index
    %c0_4 = arith.constant 0 : index
    %c0_5 = arith.constant 0 : index
    %4 = vector.load %arg3[%c0_3, %c0_4, %c0_5] : memref<1x8x1xf32, #tpu.memory_space<vmem>>, vector<1x8x1xf32>
    %c0_6 = arith.constant 0 : index
    %c0_7 = arith.constant 0 : index
    %c0_8 = arith.constant 0 : index
    %c0_9 = arith.constant 0 : index
    %5 = vector.load %arg4[%c0_6, %c0_7, %c0_8, %c0_9] : memref<1x1x1x8xf32, #tpu.memory_space<vmem>>, vector<1x1x1x8xf32>
    %6 = vector.shape_cast %5 : vector<1x1x1x8xf32> to vector<1x1x8xf32>
    %c0_10 = arith.constant 0 : index
    %c0_11 = arith.constant 0 : index
    %7 = vector.load %arg5[%c0_10, %c0_11] : memref<32x32xbf16, #tpu.memory_space<vmem>>, vector<32x32xbf16>
    %8 = vector.shape_cast %3 : vector<1x8x32xbf16> to vector<8x32xbf16>
    %cst = arith.constant dense<0.000000e+00> : vector<8x32xf32>
    %9 = tpu.matmul %8, %7, %cst {dimension_numbers = #tpu.dot_dimension_numbers<[1], [0], [0], [1], [0, 0, 1, 1], [], []>} : vector<8x32xbf16>, vector<32x32xbf16>, vector<8x32xf32> -> vector<8x32xf32>
    %10 = vector.shape_cast %9 : vector<8x32xf32> to vector<1x8x32xf32>
    %c0_12 = arith.constant 0 : index
    %c0_13 = arith.constant 0 : index
    %11 = vector.load %arg6[%c0_12, %c0_13] : memref<1x32xf32, #tpu.memory_space<vmem>>, vector<1x32xf32>
    %12 = vector.shape_cast %11 : vector<1x32xf32> to vector<1x1x32xf32>
    %13 = vector.broadcast %4 : vector<1x8x1xf32> to vector<1x8x32xf32>
    %14 = vector.broadcast %12 : vector<1x1x32xf32> to vector<1x8x32xf32>
    %15 = arith.mulf %13, %14 : vector<1x8x32xf32>
    %16 = arith.addf %10, %15 : vector<1x8x32xf32>
    %c0_14 = arith.constant 0 : index
    %c0_15 = arith.constant 0 : index
    %17 = vector.load %arg7[%c0_14, %c0_15] : memref<1x32xf32, #tpu.memory_space<vmem>>, vector<1x32xf32>
    %18 = vector.shape_cast %17 : vector<1x32xf32> to vector<1x1x32xf32>
    %19 = vector.broadcast %18 : vector<1x1x32xf32> to vector<1x8x32xf32>
    %20 = arith.addf %16, %19 : vector<1x8x32xf32>
    %cst_16 = arith.constant dense<0.000000e+00> : vector<1x1xf32>
    %21 = vector.multi_reduction <add>, %6, %cst_16 [2] : vector<1x1x8xf32> to vector<1x1xf32>
    %cst_17 = arith.constant 8.000000e+00 : f32
    %22 = vector.broadcast %cst_17 : f32 to vector<1x1xf32>
    %23 = arith.cmpf oge, %21, %22 : vector<1x1xf32>
    %24 = vector.shape_cast %23 : vector<1x1xi1> to vector<1x1x1xi1>
    %cst_18 = arith.constant 0.000000e+00 : f32
    %25 = vector.shape_cast %24 : vector<1x1x1xi1> to vector<1x1x1xi1>
    %26 = vector.broadcast %25 : vector<1x1x1xi1> to vector<1x8x32xi1>
    %27 = vector.broadcast %cst_18 : f32 to vector<1x8x32xf32>
    %28 = arith.select %26, %27, %20 : vector<1x8x32xi1>, vector<1x8x32xf32>
    %cst_19 = arith.constant -1.000000e+09 : f32
    %29 = vector.broadcast %cst_19 : f32 to vector<1x1x8xf32>
    %30 = arith.mulf %6, %29 : vector<1x1x8xf32>
    %c0_i32_20 = arith.constant 0 : i32
    %c3_i32 = arith.constant 3 : i32
    %31 = arith.addi %c0_i32_20, %c3_i32 : i32
    %c1_i32 = arith.constant 1 : i32
    %32 = scf.for %arg20 = %c0_i32_20 to %31 step %c1_i32 iter_args(%arg21 = %28) -> (vector<1x8x32xf32>)  : i32 {
      %79 = arith.index_cast %arg20 : i32 to index
      %c0_45 = arith.constant 0 : index
      %c0_46 = arith.constant 0 : index
      %80 = vector.load %arg8[%79, %c0_45, %c0_46] : memref<3x32x96xbf16, #tpu.memory_space<vmem>>, vector<1x32x96xbf16>
      %81 = vector.shape_cast %80 : vector<1x32x96xbf16> to vector<32x96xbf16>
      %82 = vector.shape_cast %arg21 : vector<1x8x32xf32> to vector<8x32xf32>
      %83 = arith.truncf %82 : vector<8x32xf32> to vector<8x32xbf16>
      %cst_47 = arith.constant dense<0.000000e+00> : vector<8x96xf32>
      %84 = tpu.matmul %83, %81, %cst_47 {dimension_numbers = #tpu.dot_dimension_numbers<[1], [0], [0], [1], [0, 0, 1, 1], [], []>} : vector<8x32xbf16>, vector<32x96xbf16>, vector<8x96xf32> -> vector<8x96xf32>
      %85 = vector.shape_cast %84 : vector<8x96xf32> to vector<1x8x96xf32>
      %86 = arith.index_cast %arg20 : i32 to index
      %c0_48 = arith.constant 0 : index
      %c0_49 = arith.constant 0 : index
      %87 = vector.load %arg9[%86, %c0_48, %c0_49] : memref<3x1x96xf32, #tpu.memory_space<vmem>>, vector<1x1x96xf32>
      %88 = vector.shape_cast %87 : vector<1x1x96xf32> to vector<1x96xf32>
      %89 = vector.shape_cast %88 : vector<1x96xf32> to vector<1x1x96xf32>
      %90 = vector.broadcast %89 : vector<1x1x96xf32> to vector<1x8x96xf32>
      %91 = arith.addf %85, %90 : vector<1x8x96xf32>
      %92 = vector.extract_strided_slice %91 {offsets = [0, 0, 0], sizes = [1, 8, 32], strides = [1, 1, 1]} : vector<1x8x96xf32> to vector<1x8x32xf32>
      %cst_50 = arith.constant 0.353553385 : f32
      %93 = vector.broadcast %cst_50 : f32 to vector<1x8x32xf32>
      %94 = arith.mulf %92, %93 : vector<1x8x32xf32>
      %95 = arith.truncf %94 : vector<1x8x32xf32> to vector<1x8x32xbf16>
      %96 = vector.extract_strided_slice %91 {offsets = [0, 0, 32], sizes = [1, 8, 32], strides = [1, 1, 1]} : vector<1x8x96xf32> to vector<1x8x32xf32>
      %97 = arith.truncf %96 : vector<1x8x32xf32> to vector<1x8x32xbf16>
      %98 = vector.extract_strided_slice %91 {offsets = [0, 0, 64], sizes = [1, 8, 32], strides = [1, 1, 1]} : vector<1x8x96xf32> to vector<1x8x32xf32>
      %99 = arith.truncf %98 : vector<1x8x32xf32> to vector<1x8x32xbf16>
      %100 = vector.extract_strided_slice %95 {offsets = [0, 0, 0], sizes = [1, 8, 8], strides = [1, 1, 1]} : vector<1x8x32xbf16> to vector<1x8x8xbf16>
      %101 = vector.extract_strided_slice %97 {offsets = [0, 0, 0], sizes = [1, 8, 8], strides = [1, 1, 1]} : vector<1x8x32xbf16> to vector<1x8x8xbf16>
      "tpu.trace_start"() <{level = 10 : i32, message = "bqd,bkd->bqk"}> : () -> ()
      %cst_51 = arith.constant dense<0.000000e+00> : vector<1x8x8xf32>
      %102 = tpu.matmul %100, %101, %cst_51 {dimension_numbers = #tpu.dot_dimension_numbers<[2], [2], [1], [1], [0, 0, 0, 1, 1, 1], [0], [0]>} : vector<1x8x8xbf16>, vector<1x8x8xbf16>, vector<1x8x8xf32> -> vector<1x8x8xf32>
      "tpu.trace_stop"() : () -> ()
      %103 = vector.broadcast %30 : vector<1x1x8xf32> to vector<1x8x8xf32>
      %104 = arith.addf %102, %103 : vector<1x8x8xf32>
      %cst_52 = arith.constant dense<0xFF800000> : vector<1x8xf32>
      %105 = vector.multi_reduction <maximumf>, %104, %cst_52 [2] : vector<1x8x8xf32> to vector<1x8xf32>
      %106 = vector.shape_cast %105 : vector<1x8xf32> to vector<1x8x1xf32>
      %107 = vector.broadcast %106 : vector<1x8x1xf32> to vector<1x8x8xf32>
      %108 = arith.subf %104, %107 : vector<1x8x8xf32>
      %109 = math.exp %108 : vector<1x8x8xf32>
      %cst_53 = arith.constant dense<0.000000e+00> : vector<1x8xf32>
      %110 = vector.multi_reduction <add>, %109, %cst_53 [2] : vector<1x8x8xf32> to vector<1x8xf32>
      %111 = vector.shape_cast %110 : vector<1x8xf32> to vector<1x8x1xf32>
      %112 = tpu.reciprocal %111 {approx = true} : vector<1x8x1xf32> -> vector<1x8x1xf32>
      %113 = vector.broadcast %112 : vector<1x8x1xf32> to vector<1x8x8xf32>
      %114 = arith.mulf %109, %113 : vector<1x8x8xf32>
      %115 = arith.truncf %114 : vector<1x8x8xf32> to vector<1x8x8xbf16>
      %116 = vector.extract_strided_slice %99 {offsets = [0, 0, 0], sizes = [1, 8, 8], strides = [1, 1, 1]} : vector<1x8x32xbf16> to vector<1x8x8xbf16>
      "tpu.trace_start"() <{level = 10 : i32, message = "bqk,bkd->bqd"}> : () -> ()
      %cst_54 = arith.constant dense<0.000000e+00> : vector<1x8x8xf32>
      %117 = tpu.matmul %115, %116, %cst_54 {dimension_numbers = #tpu.dot_dimension_numbers<[2], [1], [1], [2], [0, 0, 0, 1, 1, 2], [0], [0]>} : vector<1x8x8xbf16>, vector<1x8x8xbf16>, vector<1x8x8xf32> -> vector<1x8x8xf32>
      "tpu.trace_stop"() : () -> ()
      %118 = vector.extract_strided_slice %95 {offsets = [0, 0, 8], sizes = [1, 8, 8], strides = [1, 1, 1]} : vector<1x8x32xbf16> to vector<1x8x8xbf16>
      %119 = vector.extract_strided_slice %97 {offsets = [0, 0, 8], sizes = [1, 8, 8], strides = [1, 1, 1]} : vector<1x8x32xbf16> to vector<1x8x8xbf16>
      "tpu.trace_start"() <{level = 10 : i32, message = "bqd,bkd->bqk"}> : () -> ()
      %cst_55 = arith.constant dense<0.000000e+00> : vector<1x8x8xf32>
      %120 = tpu.matmul %118, %119, %cst_55 {dimension_numbers = #tpu.dot_dimension_numbers<[2], [2], [1], [1], [0, 0, 0, 1, 1, 1], [0], [0]>} : vector<1x8x8xbf16>, vector<1x8x8xbf16>, vector<1x8x8xf32> -> vector<1x8x8xf32>
      "tpu.trace_stop"() : () -> ()
      %121 = vector.broadcast %30 : vector<1x1x8xf32> to vector<1x8x8xf32>
      %122 = arith.addf %120, %121 : vector<1x8x8xf32>
      %cst_56 = arith.constant dense<0xFF800000> : vector<1x8xf32>
      %123 = vector.multi_reduction <maximumf>, %122, %cst_56 [2] : vector<1x8x8xf32> to vector<1x8xf32>
      %124 = vector.shape_cast %123 : vector<1x8xf32> to vector<1x8x1xf32>
      %125 = vector.broadcast %124 : vector<1x8x1xf32> to vector<1x8x8xf32>
      %126 = arith.subf %122, %125 : vector<1x8x8xf32>
      %127 = math.exp %126 : vector<1x8x8xf32>
      %cst_57 = arith.constant dense<0.000000e+00> : vector<1x8xf32>
      %128 = vector.multi_reduction <add>, %127, %cst_57 [2] : vector<1x8x8xf32> to vector<1x8xf32>
      %129 = vector.shape_cast %128 : vector<1x8xf32> to vector<1x8x1xf32>
      %130 = tpu.reciprocal %129 {approx = true} : vector<1x8x1xf32> -> vector<1x8x1xf32>
      %131 = vector.broadcast %130 : vector<1x8x1xf32> to vector<1x8x8xf32>
      %132 = arith.mulf %127, %131 : vector<1x8x8xf32>
      %133 = arith.truncf %132 : vector<1x8x8xf32> to vector<1x8x8xbf16>
      %134 = vector.extract_strided_slice %99 {offsets = [0, 0, 8], sizes = [1, 8, 8], strides = [1, 1, 1]} : vector<1x8x32xbf16> to vector<1x8x8xbf16>
      "tpu.trace_start"() <{level = 10 : i32, message = "bqk,bkd->bqd"}> : () -> ()
      %cst_58 = arith.constant dense<0.000000e+00> : vector<1x8x8xf32>
      %135 = tpu.matmul %133, %134, %cst_58 {dimension_numbers = #tpu.dot_dimension_numbers<[2], [1], [1], [2], [0, 0, 0, 1, 1, 2], [0], [0]>} : vector<1x8x8xbf16>, vector<1x8x8xbf16>, vector<1x8x8xf32> -> vector<1x8x8xf32>
      "tpu.trace_stop"() : () -> ()
      %136 = vector.extract_strided_slice %95 {offsets = [0, 0, 16], sizes = [1, 8, 8], strides = [1, 1, 1]} : vector<1x8x32xbf16> to vector<1x8x8xbf16>
      %137 = vector.extract_strided_slice %97 {offsets = [0, 0, 16], sizes = [1, 8, 8], strides = [1, 1, 1]} : vector<1x8x32xbf16> to vector<1x8x8xbf16>
      "tpu.trace_start"() <{level = 10 : i32, message = "bqd,bkd->bqk"}> : () -> ()
      %cst_59 = arith.constant dense<0.000000e+00> : vector<1x8x8xf32>
      %138 = tpu.matmul %136, %137, %cst_59 {dimension_numbers = #tpu.dot_dimension_numbers<[2], [2], [1], [1], [0, 0, 0, 1, 1, 1], [0], [0]>} : vector<1x8x8xbf16>, vector<1x8x8xbf16>, vector<1x8x8xf32> -> vector<1x8x8xf32>
      "tpu.trace_stop"() : () -> ()
      %139 = vector.broadcast %30 : vector<1x1x8xf32> to vector<1x8x8xf32>
      %140 = arith.addf %138, %139 : vector<1x8x8xf32>
      %cst_60 = arith.constant dense<0xFF800000> : vector<1x8xf32>
      %141 = vector.multi_reduction <maximumf>, %140, %cst_60 [2] : vector<1x8x8xf32> to vector<1x8xf32>
      %142 = vector.shape_cast %141 : vector<1x8xf32> to vector<1x8x1xf32>
      %143 = vector.broadcast %142 : vector<1x8x1xf32> to vector<1x8x8xf32>
      %144 = arith.subf %140, %143 : vector<1x8x8xf32>
      %145 = math.exp %144 : vector<1x8x8xf32>
      %cst_61 = arith.constant dense<0.000000e+00> : vector<1x8xf32>
      %146 = vector.multi_reduction <add>, %145, %cst_61 [2] : vector<1x8x8xf32> to vector<1x8xf32>
      %147 = vector.shape_cast %146 : vector<1x8xf32> to vector<1x8x1xf32>
      %148 = tpu.reciprocal %147 {approx = true} : vector<1x8x1xf32> -> vector<1x8x1xf32>
      %149 = vector.broadcast %148 : vector<1x8x1xf32> to vector<1x8x8xf32>
      %150 = arith.mulf %145, %149 : vector<1x8x8xf32>
      %151 = arith.truncf %150 : vector<1x8x8xf32> to vector<1x8x8xbf16>
      %152 = vector.extract_strided_slice %99 {offsets = [0, 0, 16], sizes = [1, 8, 8], strides = [1, 1, 1]} : vector<1x8x32xbf16> to vector<1x8x8xbf16>
      "tpu.trace_start"() <{level = 10 : i32, message = "bqk,bkd->bqd"}> : () -> ()
      %cst_62 = arith.constant dense<0.000000e+00> : vector<1x8x8xf32>
      %153 = tpu.matmul %151, %152, %cst_62 {dimension_numbers = #tpu.dot_dimension_numbers<[2], [1], [1], [2], [0, 0, 0, 1, 1, 2], [0], [0]>} : vector<1x8x8xbf16>, vector<1x8x8xbf16>, vector<1x8x8xf32> -> vector<1x8x8xf32>
      "tpu.trace_stop"() : () -> ()
      %154 = vector.extract_strided_slice %95 {offsets = [0, 0, 24], sizes = [1, 8, 8], strides = [1, 1, 1]} : vector<1x8x32xbf16> to vector<1x8x8xbf16>
      %155 = vector.extract_strided_slice %97 {offsets = [0, 0, 24], sizes = [1, 8, 8], strides = [1, 1, 1]} : vector<1x8x32xbf16> to vector<1x8x8xbf16>
      "tpu.trace_start"() <{level = 10 : i32, message = "bqd,bkd->bqk"}> : () -> ()
      %cst_63 = arith.constant dense<0.000000e+00> : vector<1x8x8xf32>
      %156 = tpu.matmul %154, %155, %cst_63 {dimension_numbers = #tpu.dot_dimension_numbers<[2], [2], [1], [1], [0, 0, 0, 1, 1, 1], [0], [0]>} : vector<1x8x8xbf16>, vector<1x8x8xbf16>, vector<1x8x8xf32> -> vector<1x8x8xf32>
      "tpu.trace_stop"() : () -> ()
      %157 = vector.broadcast %30 : vector<1x1x8xf32> to vector<1x8x8xf32>
      %158 = arith.addf %156, %157 : vector<1x8x8xf32>
      %cst_64 = arith.constant dense<0xFF800000> : vector<1x8xf32>
      %159 = vector.multi_reduction <maximumf>, %158, %cst_64 [2] : vector<1x8x8xf32> to vector<1x8xf32>
      %160 = vector.shape_cast %159 : vector<1x8xf32> to vector<1x8x1xf32>
      %161 = vector.broadcast %160 : vector<1x8x1xf32> to vector<1x8x8xf32>
      %162 = arith.subf %158, %161 : vector<1x8x8xf32>
      %163 = math.exp %162 : vector<1x8x8xf32>
      %cst_65 = arith.constant dense<0.000000e+00> : vector<1x8xf32>
      %164 = vector.multi_reduction <add>, %163, %cst_65 [2] : vector<1x8x8xf32> to vector<1x8xf32>
      %165 = vector.shape_cast %164 : vector<1x8xf32> to vector<1x8x1xf32>
      %166 = tpu.reciprocal %165 {approx = true} : vector<1x8x1xf32> -> vector<1x8x1xf32>
      %167 = vector.broadcast %166 : vector<1x8x1xf32> to vector<1x8x8xf32>
      %168 = arith.mulf %163, %167 : vector<1x8x8xf32>
      %169 = arith.truncf %168 : vector<1x8x8xf32> to vector<1x8x8xbf16>
      %170 = vector.extract_strided_slice %99 {offsets = [0, 0, 24], sizes = [1, 8, 8], strides = [1, 1, 1]} : vector<1x8x32xbf16> to vector<1x8x8xbf16>
      "tpu.trace_start"() <{level = 10 : i32, message = "bqk,bkd->bqd"}> : () -> ()
      %cst_66 = arith.constant dense<0.000000e+00> : vector<1x8x8xf32>
      %171 = tpu.matmul %169, %170, %cst_66 {dimension_numbers = #tpu.dot_dimension_numbers<[2], [1], [1], [2], [0, 0, 0, 1, 1, 2], [0], [0]>} : vector<1x8x8xbf16>, vector<1x8x8xbf16>, vector<1x8x8xf32> -> vector<1x8x8xf32>
      "tpu.trace_stop"() : () -> ()
      %172 = tpu.concatenate %117, %135, %153, %171 in 2 : vector<1x8x8xf32>, vector<1x8x8xf32>, vector<1x8x8xf32>, vector<1x8x8xf32> -> vector<1x8x32xf32>
      %173 = arith.index_cast %arg20 : i32 to index
      %c0_67 = arith.constant 0 : index
      %c0_68 = arith.constant 0 : index
      %174 = vector.load %arg10[%173, %c0_67, %c0_68] : memref<3x32x32xbf16, #tpu.memory_space<vmem>>, vector<1x32x32xbf16>
      %175 = vector.shape_cast %174 : vector<1x32x32xbf16> to vector<32x32xbf16>
      %176 = vector.shape_cast %172 : vector<1x8x32xf32> to vector<8x32xf32>
      %177 = arith.truncf %176 : vector<8x32xf32> to vector<8x32xbf16>
      %cst_69 = arith.constant dense<0.000000e+00> : vector<8x32xf32>
      %178 = tpu.matmul %177, %175, %cst_69 {dimension_numbers = #tpu.dot_dimension_numbers<[1], [0], [0], [1], [0, 0, 1, 1], [], []>} : vector<8x32xbf16>, vector<32x32xbf16>, vector<8x32xf32> -> vector<8x32xf32>
      %179 = vector.shape_cast %178 : vector<8x32xf32> to vector<1x8x32xf32>
      %180 = arith.index_cast %arg20 : i32 to index
      %c0_70 = arith.constant 0 : index
      %c0_71 = arith.constant 0 : index
      %181 = vector.load %arg11[%180, %c0_70, %c0_71] : memref<3x1x32xf32, #tpu.memory_space<vmem>>, vector<1x1x32xf32>
      %182 = vector.shape_cast %181 : vector<1x1x32xf32> to vector<1x32xf32>
      %183 = vector.shape_cast %182 : vector<1x32xf32> to vector<1x1x32xf32>
      %184 = vector.broadcast %183 : vector<1x1x32xf32> to vector<1x8x32xf32>
      %185 = arith.addf %179, %184 : vector<1x8x32xf32>
      %186 = arith.index_cast %arg20 : i32 to index
      %c0_72 = arith.constant 0 : index
      %c0_73 = arith.constant 0 : index
      %187 = vector.load %arg16[%186, %c0_72, %c0_73] : memref<3x4x32xf32, #tpu.memory_space<vmem>>, vector<1x4x32xf32>
      %188 = vector.shape_cast %187 : vector<1x4x32xf32> to vector<4x32xf32>
      %189 = arith.addf %arg21, %185 : vector<1x8x32xf32>
      %190 = vector.extract_strided_slice %188 {offsets = [0, 0], sizes = [1, 32], strides = [1, 1]} : vector<4x32xf32> to vector<1x32xf32>
      %191 = vector.shape_cast %190 : vector<1x32xf32> to vector<1x1x32xf32>
      %192 = vector.extract_strided_slice %188 {offsets = [1, 0], sizes = [1, 32], strides = [1, 1]} : vector<4x32xf32> to vector<1x32xf32>
      %193 = vector.shape_cast %192 : vector<1x32xf32> to vector<1x1x32xf32>
      %cst_74 = arith.constant dense<0.000000e+00> : vector<1x8xf32>
      %194 = vector.multi_reduction <add>, %189, %cst_74 [2] : vector<1x8x32xf32> to vector<1x8xf32>
      %195 = vector.shape_cast %194 : vector<1x8xf32> to vector<1x8x1xf32>
      %cst_75 = arith.constant 3.200000e+01 : f32
      %196 = vector.broadcast %cst_75 : f32 to vector<1x8x1xf32>
      %197 = arith.divf %195, %196 : vector<1x8x1xf32>
      %198 = vector.broadcast %197 : vector<1x8x1xf32> to vector<1x8x32xf32>
      %199 = arith.subf %189, %198 : vector<1x8x32xf32>
      %200 = arith.mulf %199, %199 : vector<1x8x32xf32>
      %cst_76 = arith.constant dense<0.000000e+00> : vector<1x8xf32>
      %201 = vector.multi_reduction <add>, %200, %cst_76 [2] : vector<1x8x32xf32> to vector<1x8xf32>
      %202 = vector.shape_cast %201 : vector<1x8xf32> to vector<1x8x1xf32>
      %cst_77 = arith.constant 3.200000e+01 : f32
      %203 = vector.broadcast %cst_77 : f32 to vector<1x8x1xf32>
      %204 = arith.divf %202, %203 : vector<1x8x1xf32>
      %205 = vector.broadcast %197 : vector<1x8x1xf32> to vector<1x8x32xf32>
      %206 = arith.subf %189, %205 : vector<1x8x32xf32>
      %cst_78 = arith.constant 9.99999974E-6 : f32
      %207 = vector.broadcast %cst_78 : f32 to vector<1x8x1xf32>
      %208 = arith.addf %204, %207 : vector<1x8x1xf32>
      %209 = math.rsqrt %208 : vector<1x8x1xf32>
      %210 = vector.broadcast %209 : vector<1x8x1xf32> to vector<1x8x32xf32>
      %211 = arith.mulf %206, %210 : vector<1x8x32xf32>
      %212 = vector.broadcast %191 : vector<1x1x32xf32> to vector<1x8x32xf32>
      %213 = arith.mulf %211, %212 : vector<1x8x32xf32>
      %214 = vector.broadcast %193 : vector<1x1x32xf32> to vector<1x8x32xf32>
      %215 = arith.addf %213, %214 : vector<1x8x32xf32>
      %216 = vector.shape_cast %215 : vector<1x8x32xf32> to vector<8x32xf32>
      %217 = arith.truncf %216 : vector<8x32xf32> to vector<8x32xbf16>
      %cst_79 = arith.constant 0.000000e+00 : f32
      %218 = vector.broadcast %cst_79 : f32 to vector<8x32xf32>
      %219 = arith.index_cast %arg20 : i32 to index
      %c0_80 = arith.constant 0 : index
      %c0_81 = arith.constant 0 : index
      %220 = vector.load %arg12[%219, %c0_80, %c0_81] : memref<3x32x64xbf16, #tpu.memory_space<vmem>>, vector<1x32x64xbf16>
      %221 = vector.shape_cast %220 : vector<1x32x64xbf16> to vector<32x64xbf16>
      %cst_82 = arith.constant dense<0.000000e+00> : vector<8x64xf32>
      %222 = tpu.matmul %217, %221, %cst_82 {dimension_numbers = #tpu.dot_dimension_numbers<[1], [0], [0], [1], [0, 0, 1, 1], [], []>} : vector<8x32xbf16>, vector<32x64xbf16>, vector<8x64xf32> -> vector<8x64xf32>
      %223 = arith.index_cast %arg20 : i32 to index
      %c0_83 = arith.constant 0 : index
      %c0_84 = arith.constant 0 : index
      %224 = vector.load %arg13[%223, %c0_83, %c0_84] : memref<3x1x64xf32, #tpu.memory_space<vmem>>, vector<1x1x64xf32>
      %225 = vector.shape_cast %224 : vector<1x1x64xf32> to vector<1x64xf32>
      %226 = vector.broadcast %225 : vector<1x64xf32> to vector<8x64xf32>
      %227 = arith.addf %222, %226 : vector<8x64xf32>
      %cst_85 = arith.constant 0.000000e+00 : f32
      %228 = vector.broadcast %cst_85 : f32 to vector<8x64xf32>
      %229 = arith.maximumf %227, %228 : vector<8x64xf32>
      %230 = arith.truncf %229 : vector<8x64xf32> to vector<8x64xbf16>
      %231 = arith.index_cast %arg20 : i32 to index
      %c0_86 = arith.constant 0 : index
      %c0_87 = arith.constant 0 : index
      %232 = vector.load %arg14[%231, %c0_86, %c0_87] : memref<3x64x32xbf16, #tpu.memory_space<vmem>>, vector<1x64x32xbf16>
      %233 = vector.shape_cast %232 : vector<1x64x32xbf16> to vector<64x32xbf16>
      %cst_88 = arith.constant dense<0.000000e+00> : vector<8x32xf32>
      %234 = tpu.matmul %230, %233, %cst_88 {dimension_numbers = #tpu.dot_dimension_numbers<[1], [0], [0], [1], [0, 0, 1, 1], [], []>} : vector<8x64xbf16>, vector<64x32xbf16>, vector<8x32xf32> -> vector<8x32xf32>
      %235 = arith.addf %218, %234 : vector<8x32xf32>
      %236 = vector.shape_cast %235 : vector<8x32xf32> to vector<1x8x32xf32>
      %237 = arith.index_cast %arg20 : i32 to index
      %c0_89 = arith.constant 0 : index
      %c0_90 = arith.constant 0 : index
      %238 = vector.load %arg15[%237, %c0_89, %c0_90] : memref<3x1x32xf32, #tpu.memory_space<vmem>>, vector<1x1x32xf32>
      %239 = vector.shape_cast %238 : vector<1x1x32xf32> to vector<1x32xf32>
      %240 = vector.shape_cast %239 : vector<1x32xf32> to vector<1x1x32xf32>
      %241 = vector.broadcast %240 : vector<1x1x32xf32> to vector<1x8x32xf32>
      %242 = arith.addf %236, %241 : vector<1x8x32xf32>
      %243 = arith.addf %215, %242 : vector<1x8x32xf32>
      %244 = vector.extract_strided_slice %188 {offsets = [2, 0], sizes = [1, 32], strides = [1, 1]} : vector<4x32xf32> to vector<1x32xf32>
      %245 = vector.shape_cast %244 : vector<1x32xf32> to vector<1x1x32xf32>
      %246 = vector.extract_strided_slice %188 {offsets = [3, 0], sizes = [1, 32], strides = [1, 1]} : vector<4x32xf32> to vector<1x32xf32>
      %247 = vector.shape_cast %246 : vector<1x32xf32> to vector<1x1x32xf32>
      %cst_91 = arith.constant dense<0.000000e+00> : vector<1x8xf32>
      %248 = vector.multi_reduction <add>, %243, %cst_91 [2] : vector<1x8x32xf32> to vector<1x8xf32>
      %249 = vector.shape_cast %248 : vector<1x8xf32> to vector<1x8x1xf32>
      %cst_92 = arith.constant 3.200000e+01 : f32
      %250 = vector.broadcast %cst_92 : f32 to vector<1x8x1xf32>
      %251 = arith.divf %249, %250 : vector<1x8x1xf32>
      %252 = vector.broadcast %251 : vector<1x8x1xf32> to vector<1x8x32xf32>
      %253 = arith.subf %243, %252 : vector<1x8x32xf32>
      %254 = arith.mulf %253, %253 : vector<1x8x32xf32>
      %cst_93 = arith.constant dense<0.000000e+00> : vector<1x8xf32>
      %255 = vector.multi_reduction <add>, %254, %cst_93 [2] : vector<1x8x32xf32> to vector<1x8xf32>
      %256 = vector.shape_cast %255 : vector<1x8xf32> to vector<1x8x1xf32>
      %cst_94 = arith.constant 3.200000e+01 : f32
      %257 = vector.broadcast %cst_94 : f32 to vector<1x8x1xf32>
      %258 = arith.divf %256, %257 : vector<1x8x1xf32>
      %259 = vector.broadcast %251 : vector<1x8x1xf32> to vector<1x8x32xf32>
      %260 = arith.subf %243, %259 : vector<1x8x32xf32>
      %cst_95 = arith.constant 9.99999974E-6 : f32
      %261 = vector.broadcast %cst_95 : f32 to vector<1x8x1xf32>
      %262 = arith.addf %258, %261 : vector<1x8x1xf32>
      %263 = math.rsqrt %262 : vector<1x8x1xf32>
      %264 = vector.broadcast %263 : vector<1x8x1xf32> to vector<1x8x32xf32>
      %265 = arith.mulf %260, %264 : vector<1x8x32xf32>
      %266 = vector.broadcast %245 : vector<1x1x32xf32> to vector<1x8x32xf32>
      %267 = arith.mulf %265, %266 : vector<1x8x32xf32>
      %268 = vector.broadcast %247 : vector<1x1x32xf32> to vector<1x8x32xf32>
      %269 = arith.addf %267, %268 : vector<1x8x32xf32>
      scf.yield %269 : vector<1x8x32xf32>
    }
    %c3_i32_21 = arith.constant 3 : i32
    %c0_22 = arith.constant 0 : index
    %c0_23 = arith.constant 0 : index
    %33 = vector.load %arg17[%c0_22, %c0_23] : memref<2x32xf32, #tpu.memory_space<vmem>>, vector<2x32xf32>
    %34 = vector.extract_strided_slice %33 {offsets = [0, 0], sizes = [1, 32], strides = [1, 1]} : vector<2x32xf32> to vector<1x32xf32>
    %35 = vector.shape_cast %34 : vector<1x32xf32> to vector<1x1x32xf32>
    %36 = vector.extract_strided_slice %33 {offsets = [1, 0], sizes = [1, 32], strides = [1, 1]} : vector<2x32xf32> to vector<1x32xf32>
    %37 = vector.shape_cast %36 : vector<1x32xf32> to vector<1x1x32xf32>
    %cst_24 = arith.constant dense<0.000000e+00> : vector<1x8xf32>
    %38 = vector.multi_reduction <add>, %32, %cst_24 [2] : vector<1x8x32xf32> to vector<1x8xf32>
    %39 = vector.shape_cast %38 : vector<1x8xf32> to vector<1x8x1xf32>
    %cst_25 = arith.constant 3.200000e+01 : f32
    %40 = vector.broadcast %cst_25 : f32 to vector<1x8x1xf32>
    %41 = arith.divf %39, %40 : vector<1x8x1xf32>
    %42 = vector.broadcast %41 : vector<1x8x1xf32> to vector<1x8x32xf32>
    %43 = arith.subf %32, %42 : vector<1x8x32xf32>
    %44 = arith.mulf %43, %43 : vector<1x8x32xf32>
    %cst_26 = arith.constant dense<0.000000e+00> : vector<1x8xf32>
    %45 = vector.multi_reduction <add>, %44, %cst_26 [2] : vector<1x8x32xf32> to vector<1x8xf32>
    %46 = vector.shape_cast %45 : vector<1x8xf32> to vector<1x8x1xf32>
    %cst_27 = arith.constant 3.200000e+01 : f32
    %47 = vector.broadcast %cst_27 : f32 to vector<1x8x1xf32>
    %48 = arith.divf %46, %47 : vector<1x8x1xf32>
    %49 = vector.broadcast %41 : vector<1x8x1xf32> to vector<1x8x32xf32>
    %50 = arith.subf %32, %49 : vector<1x8x32xf32>
    %cst_28 = arith.constant 9.99999974E-6 : f32
    %51 = vector.broadcast %cst_28 : f32 to vector<1x8x1xf32>
    %52 = arith.addf %48, %51 : vector<1x8x1xf32>
    %53 = math.rsqrt %52 : vector<1x8x1xf32>
    %54 = vector.broadcast %53 : vector<1x8x1xf32> to vector<1x8x32xf32>
    %55 = arith.mulf %50, %54 : vector<1x8x32xf32>
    %56 = vector.broadcast %35 : vector<1x1x32xf32> to vector<1x8x32xf32>
    %57 = arith.mulf %55, %56 : vector<1x8x32xf32>
    %58 = vector.broadcast %37 : vector<1x1x32xf32> to vector<1x8x32xf32>
    %59 = arith.addf %57, %58 : vector<1x8x32xf32>
    %60 = vector.shape_cast %23 : vector<1x1xi1> to vector<1x1x1xi1>
    %cst_29 = arith.constant 9.99999974E-6 : f32
    %61 = vector.shape_cast %60 : vector<1x1x1xi1> to vector<1x1x1xi1>
    %62 = vector.broadcast %61 : vector<1x1x1xi1> to vector<1x8x32xi1>
    %63 = vector.broadcast %cst_29 : f32 to vector<1x8x32xf32>
    %64 = arith.select %62, %63, %59 : vector<1x8x32xi1>, vector<1x8x32xf32>
    %c0_30 = arith.constant 0 : index
    %c0_31 = arith.constant 0 : index
    %c0_32 = arith.constant 0 : index
    %65 = vector.load %arg18[%c0_30, %c0_31, %c0_32] : memref<1x1x32xf32, #tpu.memory_space<vmem>>, vector<1x1x32xf32>
    %cst_33 = arith.constant dense<0.000000e+00> : vector<1x32xf32>
    %66 = vector.multi_reduction <add>, %64, %cst_33 [1] : vector<1x8x32xf32> to vector<1x32xf32>
    %67 = vector.shape_cast %66 : vector<1x32xf32> to vector<1x1x32xf32>
    %68 = arith.addf %65, %67 : vector<1x1x32xf32>
    %c0_34 = arith.constant 0 : index
    %c0_35 = arith.constant 0 : index
    %c0_36 = arith.constant 0 : index
    %69 = vector.load %arg18[%c0_34, %c0_35, %c0_36] : memref<1x1x32xf32, #tpu.memory_space<vmem>>, vector<1x1x32xf32>
    tpu.vector_store %arg18[%c0_34, %c0_35, %c0_36], %68 {strides = array<i32>} : memref<1x1x32xf32, #tpu.memory_space<vmem>>, vector<1x1x32xf32>,
    %c0_37 = arith.constant 0 : index
    %c0_38 = arith.constant 0 : index
    %70 = vector.load %arg19[%c0_37, %c0_38] : memref<1x1xf32, #tpu.memory_space<vmem>>, vector<1x1xf32>
    %cst_39 = arith.constant 1.000000e+00 : f32
    %71 = vector.broadcast %cst_39 : f32 to vector<1x1x8xf32>
    %72 = arith.subf %71, %6 : vector<1x1x8xf32>
    %cst_40 = arith.constant dense<0.000000e+00> : vector<1x1xf32>
    %73 = vector.multi_reduction <add>, %72, %cst_40 [2] : vector<1x1x8xf32> to vector<1x1xf32>
    %74 = arith.addf %70, %73 : vector<1x1xf32>
    %c0_41 = arith.constant 0 : index
    %c0_42 = arith.constant 0 : index
    %75 = vector.load %arg19[%c0_41, %c0_42] : memref<1x1xf32, #tpu.memory_space<vmem>>, vector<1x1xf32>
    tpu.vector_store %arg19[%c0_41, %c0_42], %74 {strides = array<i32>} : memref<1x1xf32, #tpu.memory_space<vmem>>, vector<1x1xf32>,
    %c1_i32_43 = arith.constant 1 : i32
    %76 = arith.cmpi eq, %arg1, %c1_i32_43 : i32
    %77 = arith.extui %76 : i1 to i32
    %c0_i32_44 = arith.constant 0 : i32
    %78 = arith.cmpi ne, %77, %c0_i32_44 : i32
    scf.if %78 {
      %c0_45 = arith.constant 0 : index
      %c0_46 = arith.constant 0 : index
      %79 = vector.load %arg19[%c0_45, %c0_46] : memref<1x1xf32, #tpu.memory_space<vmem>>, vector<1x1xf32>
      %cst_47 = arith.constant 1.000000e+00 : f32
      %80 = vector.broadcast %cst_47 : f32 to vector<1x1xf32>
      %81 = arith.maximumf %79, %80 : vector<1x1xf32>
      %c0_48 = arith.constant 0 : index
      %c0_49 = arith.constant 0 : index
      %c0_50 = arith.constant 0 : index
      %82 = vector.load %arg18[%c0_48, %c0_49, %c0_50] : memref<1x1x32xf32, #tpu.memory_space<vmem>>, vector<1x1x32xf32>
      %83 = vector.shape_cast %81 : vector<1x1xf32> to vector<1x1x1xf32>
      %84 = vector.broadcast %83 : vector<1x1x1xf32> to vector<1x1x32xf32>
      %85 = arith.divf %82, %84 : vector<1x1x32xf32>
      %c0_51 = arith.constant 0 : index
      %c0_52 = arith.constant 0 : index
      %c0_53 = arith.constant 0 : index
      %86 = vector.load %arg18[%c0_51, %c0_52, %c0_53] : memref<1x1x32xf32, #tpu.memory_space<vmem>>, vector<1x1x32xf32>
      tpu.vector_store %arg18[%c0_51, %c0_52, %c0_53], %85 {strides = array<i32>} : memref<1x1x32xf32, #tpu.memory_space<vmem>>, vector<1x1x32xf32>,
    } else {
    }
    return
  }
  func.func @transform_0(%arg0: i32, %arg1: i32) -> (i32, i32, i32) {
    %c0_i32 = arith.constant 0 : i32
    %c0_i32_0 = arith.constant 0 : i32
    return %arg0, %arg1, %c0_i32 : i32, i32, i32
  }
  func.func @transform_1(%arg0: i32, %arg1: i32) -> (i32, i32, i32) {
    %c0_i32 = arith.constant 0 : i32
    %c0_i32_0 = arith.constant 0 : i32
    return %arg0, %arg1, %c0_i32 : i32, i32, i32
  }
  func.func @transform_2(%arg0: i32, %arg1: i32) -> (i32, i32, i32, i32) {
    %c0_i32 = arith.constant 0 : i32
    %c0_i32_0 = arith.constant 0 : i32
    %c0_i32_1 = arith.constant 0 : i32
    return %arg0, %arg1, %c0_i32, %c0_i32_0 : i32, i32, i32, i32
  }
  func.func @transform_3(%arg0: i32, %arg1: i32) -> (i32, i32) {
    %c0_i32 = arith.constant 0 : i32
    %c0_i32_0 = arith.constant 0 : i32
    %c0_i32_1 = arith.constant 0 : i32
    return %c0_i32, %c0_i32_0 : i32, i32
  }
  func.func @transform_4(%arg0: i32, %arg1: i32) -> (i32, i32) {
    %c0_i32 = arith.constant 0 : i32
    %c0_i32_0 = arith.constant 0 : i32
    %c0_i32_1 = arith.constant 0 : i32
    return %c0_i32, %c0_i32_0 : i32, i32
  }
  func.func @transform_5(%arg0: i32, %arg1: i32) -> (i32, i32) {
    %c0_i32 = arith.constant 0 : i32
    %c0_i32_0 = arith.constant 0 : i32
    %c0_i32_1 = arith.constant 0 : i32
    return %c0_i32, %c0_i32_0 : i32, i32
  }
  func.func @transform_6(%arg0: i32, %arg1: i32) -> (i32, i32, i32) {
    %c0_i32 = arith.constant 0 : i32
    %c0_i32_0 = arith.constant 0 : i32
    %c0_i32_1 = arith.constant 0 : i32
    %c0_i32_2 = arith.constant 0 : i32
    return %c0_i32, %c0_i32_0, %c0_i32_1 : i32, i32, i32
  }
  func.func @transform_7(%arg0: i32, %arg1: i32) -> (i32, i32, i32) {
    %c0_i32 = arith.constant 0 : i32
    %c0_i32_0 = arith.constant 0 : i32
    %c0_i32_1 = arith.constant 0 : i32
    %c0_i32_2 = arith.constant 0 : i32
    return %c0_i32, %c0_i32_0, %c0_i32_1 : i32, i32, i32
  }
  func.func @transform_8(%arg0: i32, %arg1: i32) -> (i32, i32, i32) {
    %c0_i32 = arith.constant 0 : i32
    %c0_i32_0 = arith.constant 0 : i32
    %c0_i32_1 = arith.constant 0 : i32
    %c0_i32_2 = arith.constant 0 : i32
    return %c0_i32, %c0_i32_0, %c0_i32_1 : i32, i32, i32
  }
  func.func @transform_9(%arg0: i32, %arg1: i32) -> (i32, i32, i32) {
    %c0_i32 = arith.constant 0 : i32
    %c0_i32_0 = arith.constant 0 : i32
    %c0_i32_1 = arith.constant 0 : i32
    %c0_i32_2 = arith.constant 0 : i32
    return %c0_i32, %c0_i32_0, %c0_i32_1 : i32, i32, i32
  }
  func.func @transform_10(%arg0: i32, %arg1: i32) -> (i32, i32, i32) {
    %c0_i32 = arith.constant 0 : i32
    %c0_i32_0 = arith.constant 0 : i32
    %c0_i32_1 = arith.constant 0 : i32
    %c0_i32_2 = arith.constant 0 : i32
    return %c0_i32, %c0_i32_0, %c0_i32_1 : i32, i32, i32
  }
  func.func @transform_11(%arg0: i32, %arg1: i32) -> (i32, i32, i32) {
    %c0_i32 = arith.constant 0 : i32
    %c0_i32_0 = arith.constant 0 : i32
    %c0_i32_1 = arith.constant 0 : i32
    %c0_i32_2 = arith.constant 0 : i32
    return %c0_i32, %c0_i32_0, %c0_i32_1 : i32, i32, i32
  }
  func.func @transform_12(%arg0: i32, %arg1: i32) -> (i32, i32, i32) {
    %c0_i32 = arith.constant 0 : i32
    %c0_i32_0 = arith.constant 0 : i32
    %c0_i32_1 = arith.constant 0 : i32
    %c0_i32_2 = arith.constant 0 : i32
    return %c0_i32, %c0_i32_0, %c0_i32_1 : i32, i32, i32
  }
  func.func @transform_13(%arg0: i32, %arg1: i32) -> (i32, i32, i32) {
    %c0_i32 = arith.constant 0 : i32
    %c0_i32_0 = arith.constant 0 : i32
    %c0_i32_1 = arith.constant 0 : i32
    %c0_i32_2 = arith.constant 0 : i32
    return %c0_i32, %c0_i32_0, %c0_i32_1 : i32, i32, i32
  }
  func.func @transform_14(%arg0: i32, %arg1: i32) -> (i32, i32, i32) {
    %c0_i32 = arith.constant 0 : i32
    %c0_i32_0 = arith.constant 0 : i32
    %c0_i32_1 = arith.constant 0 : i32
    %c0_i32_2 = arith.constant 0 : i32
    return %c0_i32, %c0_i32_0, %c0_i32_1 : i32, i32, i32
  }
  func.func @transform_15(%arg0: i32, %arg1: i32) -> (i32, i32) {
    %c0_i32 = arith.constant 0 : i32
    %c0_i32_0 = arith.constant 0 : i32
    %c0_i32_1 = arith.constant 0 : i32
    return %c0_i32, %c0_i32_0 : i32, i32
  }
  func.func @transform_16(%arg0: i32, %arg1: i32) -> (i32, i32, i32) {
    %c0_i32 = arith.constant 0 : i32
    %c0_i32_0 = arith.constant 0 : i32
    %c0_i32_1 = arith.constant 0 : i32
    return %arg0, %c0_i32, %c0_i32_0 : i32, i32, i32
  }
}

module attributes {stable_mosaic.version = 11 : i64} {
  func.func @_block_encoder_kernel(%arg0: i32, %arg1: i32, %arg2: memref<1x8x32xbf16, #tpu.memory_space<vmem>>, %arg3: memref<1x8x1xf32, #tpu.memory_space<vmem>>, %arg4: memref<1x1x1x8xf32, #tpu.memory_space<vmem>>, %arg5: memref<32x32xbf16, #tpu.memory_space<vmem>>, %arg6: memref<1x32xf32, #tpu.memory_space<vmem>>, %arg7: memref<1x32xf32, #tpu.memory_space<vmem>>, %arg8: memref<3x32x96xbf16, #tpu.memory_space<vmem>>, %arg9: memref<3x1x96xf32, #tpu.memory_space<vmem>>, %arg10: memref<3x32x32xbf16, #tpu.memory_space<vmem>>, %arg11: memref<3x1x32xf32, #tpu.memory_space<vmem>>, %arg12: memref<3x32x64xbf16, #tpu.memory_space<vmem>>, %arg13: memref<3x1x64xf32, #tpu.memory_space<vmem>>, %arg14: memref<3x64x32xbf16, #tpu.memory_space<vmem>>, %arg15: memref<3x1x32xf32, #tpu.memory_space<vmem>>, %arg16: memref<3x4x32xf32, #tpu.memory_space<vmem>>, %arg17: memref<2x32xf32, #tpu.memory_space<vmem>>, %arg18: memref<1x1x32xf32, #tpu.memory_space<vmem>>, %arg19: memref<1x1xf32, #tpu.memory_space<vmem>>) attributes {dimension_semantics = [#tpu.dimension_semantics<parallel>, #tpu.dimension_semantics<arbitrary>], iteration_bounds = array<i64: 2, 2>, scalar_prefetch = 0 : i64, scratch_operands = 1 : i64, tpu.core_type = #tpu.core_type<tc>, window_params = [{transform_indices = @transform_0, window_bounds = array<i64: 1, 8, 32>}, {transform_indices = @transform_1, window_bounds = array<i64: 1, 8, 1>}, {transform_indices = @transform_2, window_bounds = array<i64: 1, 1, 1, 8>}, {pipeline_mode = #tpu.pipeline_mode<synchronous>, transform_indices = @transform_3, window_bounds = array<i64: 32, 32>}, {pipeline_mode = #tpu.pipeline_mode<synchronous>, transform_indices = @transform_4, window_bounds = array<i64: 1, 32>}, {pipeline_mode = #tpu.pipeline_mode<synchronous>, transform_indices = @transform_5, window_bounds = array<i64: 1, 32>}, {pipeline_mode = #tpu.pipeline_mode<synchronous>, transform_indices = @transform_6, window_bounds = array<i64: 3, 32, 96>}, {pipeline_mode = #tpu.pipeline_mode<synchronous>, transform_indices = @transform_7, window_bounds = array<i64: 3, 1, 96>}, {pipeline_mode = #tpu.pipeline_mode<synchronous>, transform_indices = @transform_8, window_bounds = array<i64: 3, 32, 32>}, {pipeline_mode = #tpu.pipeline_mode<synchronous>, transform_indices = @transform_9, window_bounds = array<i64: 3, 1, 32>}, {pipeline_mode = #tpu.pipeline_mode<synchronous>, transform_indices = @transform_10, window_bounds = array<i64: 3, 32, 64>}, {pipeline_mode = #tpu.pipeline_mode<synchronous>, transform_indices = @transform_11, window_bounds = array<i64: 3, 1, 64>}, {pipeline_mode = #tpu.pipeline_mode<synchronous>, transform_indices = @transform_12, window_bounds = array<i64: 3, 64, 32>}, {pipeline_mode = #tpu.pipeline_mode<synchronous>, transform_indices = @transform_13, window_bounds = array<i64: 3, 1, 32>}, {pipeline_mode = #tpu.pipeline_mode<synchronous>, transform_indices = @transform_14, window_bounds = array<i64: 3, 4, 32>}, {pipeline_mode = #tpu.pipeline_mode<synchronous>, transform_indices = @transform_15, window_bounds = array<i64: 2, 32>}, {transform_indices = @transform_16, window_bounds = array<i64: 1, 1, 32>}]} {
    %c0_i32 = arith.constant 0 : i32
    %0 = arith.cmpi eq, %arg1, %c0_i32 : i32
    %1 = arith.extui %0 : i1 to i32
    %c0_i32_0 = arith.constant 0 : i32
    %2 = arith.cmpi ne, %1, %c0_i32_0 : i32
    scf.if %2 {
      %cst_45 = arith.constant 0.000000e+00 : f32
      %79 = vector.broadcast %cst_45 : f32 to vector<1x1x32xf32>
      %c0_46 = arith.constant 0 : index
      %c0_47 = arith.constant 0 : index
      %c0_48 = arith.constant 0 : index
      %80 = vector.load %arg18[%c0_46, %c0_47, %c0_48] : memref<1x1x32xf32, #tpu.memory_space<vmem>>, vector<1x1x32xf32>
      tpu.vector_store %arg18[%c0_46, %c0_47, %c0_48], %79 {strides = array<i32>} : memref<1x1x32xf32, #tpu.memory_space<vmem>>, vector<1x1x32xf32>,
      %cst_49 = arith.constant 0.000000e+00 : f32
      %81 = vector.broadcast %cst_49 : f32 to vector<1x1xf32>
      %c0_50 = arith.constant 0 : index
      %c0_51 = arith.constant 0 : index
      %82 = vector.load %arg19[%c0_50, %c0_51] : memref<1x1xf32, #tpu.memory_space<vmem>>, vector<1x1xf32>
      tpu.vector_store %arg19[%c0_50, %c0_51], %81 {strides = array<i32>} : memref<1x1xf32, #tpu.memory_space<vmem>>, vector<1x1xf32>,
    } else {
    }
    %c0 = arith.constant 0 : index
    %c0_1 = arith.constant 0 : index
    %c0_2 = arith.constant 0 : index
    %3 = vector.load %arg2[%c0, %c0_1, %c0_2] : memref<1x8x32xbf16, #tpu.memory_space<vmem>>, vector<1x8x32xbf16>
    %c0_3 = arith.constant 0 : index
    %c0_4 = arith.constant 0 : index
    %c0_5 = arith.constant 0 : index
    %4 = vector.load %arg3[%c0_3, %c0_4, %c0_5] : memref<1x8x1xf32, #tpu.memory_space<vmem>>, vector<1x8x1xf32>
    %c0_6 = arith.constant 0 : index
    %c0_7 = arith.constant 0 : index
    %c0_8 = arith.constant 0 : index
    %c0_9 = arith.constant 0 : index
    %5 = vector.load %arg4[%c0_6, %c0_7, %c0_8, %c0_9] : memref<1x1x1x8xf32, #tpu.memory_space<vmem>>, vector<1x1x1x8xf32>
    %6 = vector.shape_cast %5 : vector<1x1x1x8xf32> to vector<1x1x8xf32>
    %c0_10 = arith.constant 0 : index
    %c0_11 = arith.constant 0 : index
    %7 = vector.load %arg5[%c0_10, %c0_11] : memref<32x32xbf16, #tpu.memory_space<vmem>>, vector<32x32xbf16>
    %8 = vector.shape_cast %3 : vector<1x8x32xbf16> to vector<8x32xbf16>
    %cst = arith.constant dense<0.000000e+00> : vector<8x32xf32>
    %9 = tpu.matmul %8, %7, %cst {dimension_numbers = #tpu.dot_dimension_numbers<[1], [0], [0], [1], [0, 0, 1, 1], [], []>} : vector<8x32xbf16>, vector<32x32xbf16>, vector<8x32xf32> -> vector<8x32xf32>
    %10 = vector.shape_cast %9 : vector<8x32xf32> to vector<1x8x32xf32>
    %c0_12 = arith.constant 0 : index
    %c0_13 = arith.constant 0 : index
    %11 = vector.load %arg6[%c0_12, %c0_13] : memref<1x32xf32, #tpu.memory_space<vmem>>, vector<1x32xf32>
    %12 = vector.shape_cast %11 : vector<1x32xf32> to vector<1x1x32xf32>
    %13 = vector.broadcast %4 : vector<1x8x1xf32> to vector<1x8x32xf32>
    %14 = vector.broadcast %12 : vector<1x1x32xf32> to vector<1x8x32xf32>
    %15 = arith.mulf %13, %14 : vector<1x8x32xf32>
    %16 = arith.addf %10, %15 : vector<1x8x32xf32>
    %c0_14 = arith.constant 0 : index
    %c0_15 = arith.constant 0 : index
    %17 = vector.load %arg7[%c0_14, %c0_15] : memref<1x32xf32, #tpu.memory_space<vmem>>, vector<1x32xf32>
    %18 = vector.shape_cast %17 : vector<1x32xf32> to vector<1x1x32xf32>
    %19 = vector.broadcast %18 : vector<1x1x32xf32> to vector<1x8x32xf32>
    %20 = arith.addf %16, %19 : vector<1x8x32xf32>
    %cst_16 = arith.constant dense<0.000000e+00> : vector<1x1xf32>
    %21 = vector.multi_reduction <add>, %6, %cst_16 [2] : vector<1x1x8xf32> to vector<1x1xf32>
    %cst_17 = arith.constant 8.000000e+00 : f32
    %22 = vector.broadcast %cst_17 : f32 to vector<1x1xf32>
    %23 = arith.cmpf oge, %21, %22 : vector<1x1xf32>
    %24 = vector.shape_cast %23 : vector<1x1xi1> to vector<1x1x1xi1>
    %cst_18 = arith.constant 0.000000e+00 : f32
    %25 = vector.shape_cast %24 : vector<1x1x1xi1> to vector<1x1x1xi1>
    %26 = vector.broadcast %25 : vector<1x1x1xi1> to vector<1x8x32xi1>
    %27 = vector.broadcast %cst_18 : f32 to vector<1x8x32xf32>
    %28 = arith.select %26, %27, %20 : vector<1x8x32xi1>, vector<1x8x32xf32>
    %cst_19 = arith.constant -1.000000e+09 : f32
    %29 = vector.broadcast %cst_19 : f32 to vector<1x1x8xf32>
    %30 = arith.mulf %6, %29 : vector<1x1x8xf32>
    %c0_i32_20 = arith.constant 0 : i32
    %c3_i32 = arith.constant 3 : i32
    %31 = arith.addi %c0_i32_20, %c3_i32 : i32
    %c1_i32 = arith.constant 1 : i32
    %32 = scf.for %arg20 = %c0_i32_20 to %31 step %c1_i32 iter_args(%arg21 = %28) -> (vector<1x8x32xf32>)  : i32 {
      %79 = arith.index_cast %arg20 : i32 to index
      %c0_45 = arith.constant 0 : index
      %c0_46 = arith.constant 0 : index
      %80 = vector.load %arg8[%79, %c0_45, %c0_46] : memref<3x32x96xbf16, #tpu.memory_space<vmem>>, vector<1x32x96xbf16>
      %81 = vector.shape_cast %80 : vector<1x32x96xbf16> to vector<32x96xbf16>
      %82 = vector.shape_cast %arg21 : vector<1x8x32xf32> to vector<8x32xf32>
      %83 = arith.truncf %82 : vector<8x32xf32> to vector<8x32xbf16>
      %cst_47 = arith.constant dense<0.000000e+00> : vector<8x96xf32>
      %84 = tpu.matmul %83, %81, %cst_47 {dimension_numbers = #tpu.dot_dimension_numbers<[1], [0], [0], [1], [0, 0, 1, 1], [], []>} : vector<8x32xbf16>, vector<32x96xbf16>, vector<8x96xf32> -> vector<8x96xf32>
      %85 = vector.shape_cast %84 : vector<8x96xf32> to vector<1x8x96xf32>
      %86 = arith.index_cast %arg20 : i32 to index
      %c0_48 = arith.constant 0 : index
      %c0_49 = arith.constant 0 : index
      %87 = vector.load %arg9[%86, %c0_48, %c0_49] : memref<3x1x96xf32, #tpu.memory_space<vmem>>, vector<1x1x96xf32>
      %88 = vector.shape_cast %87 : vector<1x1x96xf32> to vector<1x96xf32>
      %89 = vector.shape_cast %88 : vector<1x96xf32> to vector<1x1x96xf32>
      %90 = vector.broadcast %89 : vector<1x1x96xf32> to vector<1x8x96xf32>
      %91 = arith.addf %85, %90 : vector<1x8x96xf32>
      %92 = vector.extract_strided_slice %91 {offsets = [0, 0, 0], sizes = [1, 8, 32], strides = [1, 1, 1]} : vector<1x8x96xf32> to vector<1x8x32xf32>
      %cst_50 = arith.constant 0.353553385 : f32
      %93 = vector.broadcast %cst_50 : f32 to vector<1x8x32xf32>
      %94 = arith.mulf %92, %93 : vector<1x8x32xf32>
      %95 = arith.truncf %94 : vector<1x8x32xf32> to vector<1x8x32xbf16>
      %96 = vector.extract_strided_slice %91 {offsets = [0, 0, 32], sizes = [1, 8, 32], strides = [1, 1, 1]} : vector<1x8x96xf32> to vector<1x8x32xf32>
      %97 = arith.truncf %96 : vector<1x8x32xf32> to vector<1x8x32xbf16>
      %98 = vector.extract_strided_slice %91 {offsets = [0, 0, 64], sizes = [1, 8, 32], strides = [1, 1, 1]} : vector<1x8x96xf32> to vector<1x8x32xf32>
      %99 = arith.truncf %98 : vector<1x8x32xf32> to vector<1x8x32xbf16>
      %100 = vector.extract_strided_slice %95 {offsets = [0, 0, 0], sizes = [1, 8, 8], strides = [1, 1, 1]} : vector<1x8x32xbf16> to vector<1x8x8xbf16>
      %101 = vector.extract_strided_slice %97 {offsets = [0, 0, 0], sizes = [1, 8, 8], strides = [1, 1, 1]} : vector<1x8x32xbf16> to vector<1x8x8xbf16>
      "tpu.trace_start"() <{level = 10 : i32, message = "bqd,bkd->bqk"}> : () -> ()
      %cst_51 = arith.constant dense<0.000000e+00> : vector<1x8x8xf32>
      %102 = tpu.matmul %100, %101, %cst_51 {dimension_numbers = #tpu.dot_dimension_numbers<[2], [2], [1], [1], [0, 0, 0, 1, 1, 1], [0], [0]>} : vector<1x8x8xbf16>, vector<1x8x8xbf16>, vector<1x8x8xf32> -> vector<1x8x8xf32>
      "tpu.trace_stop"() : () -> ()
      %103 = vector.broadcast %30 : vector<1x1x8xf32> to vector<1x8x8xf32>
      %104 = arith.addf %102, %103 : vector<1x8x8xf32>
      %cst_52 = arith.constant dense<0xFF800000> : vector<1x8xf32>
      %105 = vector.multi_reduction <maximumf>, %104, %cst_52 [2] : vector<1x8x8xf32> to vector<1x8xf32>
      %106 = vector.shape_cast %105 : vector<1x8xf32> to vector<1x8x1xf32>
      %107 = vector.broadcast %106 : vector<1x8x1xf32> to vector<1x8x8xf32>
      %108 = arith.subf %104, %107 : vector<1x8x8xf32>
      %109 = math.exp %108 : vector<1x8x8xf32>
      %cst_53 = arith.constant dense<0.000000e+00> : vector<1x8xf32>
      %110 = vector.multi_reduction <add>, %109, %cst_53 [2] : vector<1x8x8xf32> to vector<1x8xf32>
      %111 = vector.shape_cast %110 : vector<1x8xf32> to vector<1x8x1xf32>
      %112 = tpu.reciprocal %111 {approx = true} : vector<1x8x1xf32> -> vector<1x8x1xf32>
      %113 = vector.broadcast %112 : vector<1x8x1xf32> to vector<1x8x8xf32>
      %114 = arith.mulf %109, %113 : vector<1x8x8xf32>
      %115 = arith.truncf %114 : vector<1x8x8xf32> to vector<1x8x8xbf16>
      %116 = vector.extract_strided_slice %99 {offsets = [0, 0, 0], sizes = [1, 8, 8], strides = [1, 1, 1]} : vector<1x8x32xbf16> to vector<1x8x8xbf16>
      "tpu.trace_start"() <{level = 10 : i32, message = "bqk,bkd->bqd"}> : () -> ()
      %cst_54 = arith.constant dense<0.000000e+00> : vector<1x8x8xf32>
      %117 = tpu.matmul %115, %116, %cst_54 {dimension_numbers = #tpu.dot_dimension_numbers<[2], [1], [1], [2], [0, 0, 0, 1, 1, 2], [0], [0]>} : vector<1x8x8xbf16>, vector<1x8x8xbf16>, vector<1x8x8xf32> -> vector<1x8x8xf32>
      "tpu.trace_stop"() : () -> ()
      %118 = vector.extract_strided_slice %95 {offsets = [0, 0, 8], sizes = [1, 8, 8], strides = [1, 1, 1]} : vector<1x8x32xbf16> to vector<1x8x8xbf16>
      %119 = vector.extract_strided_slice %97 {offsets = [0, 0, 8], sizes = [1, 8, 8], strides = [1, 1, 1]} : vector<1x8x32xbf16> to vector<1x8x8xbf16>
      "tpu.trace_start"() <{level = 10 : i32, message = "bqd,bkd->bqk"}> : () -> ()
      %cst_55 = arith.constant dense<0.000000e+00> : vector<1x8x8xf32>
      %120 = tpu.matmul %118, %119, %cst_55 {dimension_numbers = #tpu.dot_dimension_numbers<[2], [2], [1], [1], [0, 0, 0, 1, 1, 1], [0], [0]>} : vector<1x8x8xbf16>, vector<1x8x8xbf16>, vector<1x8x8xf32> -> vector<1x8x8xf32>
      "tpu.trace_stop"() : () -> ()
      %121 = vector.broadcast %30 : vector<1x1x8xf32> to vector<1x8x8xf32>
      %122 = arith.addf %120, %121 : vector<1x8x8xf32>
      %cst_56 = arith.constant dense<0xFF800000> : vector<1x8xf32>
      %123 = vector.multi_reduction <maximumf>, %122, %cst_56 [2] : vector<1x8x8xf32> to vector<1x8xf32>
      %124 = vector.shape_cast %123 : vector<1x8xf32> to vector<1x8x1xf32>
      %125 = vector.broadcast %124 : vector<1x8x1xf32> to vector<1x8x8xf32>
      %126 = arith.subf %122, %125 : vector<1x8x8xf32>
      %127 = math.exp %126 : vector<1x8x8xf32>
      %cst_57 = arith.constant dense<0.000000e+00> : vector<1x8xf32>
      %128 = vector.multi_reduction <add>, %127, %cst_57 [2] : vector<1x8x8xf32> to vector<1x8xf32>
      %129 = vector.shape_cast %128 : vector<1x8xf32> to vector<1x8x1xf32>
      %130 = tpu.reciprocal %129 {approx = true} : vector<1x8x1xf32> -> vector<1x8x1xf32>
      %131 = vector.broadcast %130 : vector<1x8x1xf32> to vector<1x8x8xf32>
      %132 = arith.mulf %127, %131 : vector<1x8x8xf32>
      %133 = arith.truncf %132 : vector<1x8x8xf32> to vector<1x8x8xbf16>
      %134 = vector.extract_strided_slice %99 {offsets = [0, 0, 8], sizes = [1, 8, 8], strides = [1, 1, 1]} : vector<1x8x32xbf16> to vector<1x8x8xbf16>
      "tpu.trace_start"() <{level = 10 : i32, message = "bqk,bkd->bqd"}> : () -> ()
      %cst_58 = arith.constant dense<0.000000e+00> : vector<1x8x8xf32>
      %135 = tpu.matmul %133, %134, %cst_58 {dimension_numbers = #tpu.dot_dimension_numbers<[2], [1], [1], [2], [0, 0, 0, 1, 1, 2], [0], [0]>} : vector<1x8x8xbf16>, vector<1x8x8xbf16>, vector<1x8x8xf32> -> vector<1x8x8xf32>
      "tpu.trace_stop"() : () -> ()
      %136 = vector.extract_strided_slice %95 {offsets = [0, 0, 16], sizes = [1, 8, 8], strides = [1, 1, 1]} : vector<1x8x32xbf16> to vector<1x8x8xbf16>
      %137 = vector.extract_strided_slice %97 {offsets = [0, 0, 16], sizes = [1, 8, 8], strides = [1, 1, 1]} : vector<1x8x32xbf16> to vector<1x8x8xbf16>
      "tpu.trace_start"() <{level = 10 : i32, message = "bqd,bkd->bqk"}> : () -> ()
      %cst_59 = arith.constant dense<0.000000e+00> : vector<1x8x8xf32>
      %138 = tpu.matmul %136, %137, %cst_59 {dimension_numbers = #tpu.dot_dimension_numbers<[2], [2], [1], [1], [0, 0, 0, 1, 1, 1], [0], [0]>} : vector<1x8x8xbf16>, vector<1x8x8xbf16>, vector<1x8x8xf32> -> vector<1x8x8xf32>
      "tpu.trace_stop"() : () -> ()
      %139 = vector.broadcast %30 : vector<1x1x8xf32> to vector<1x8x8xf32>
      %140 = arith.addf %138, %139 : vector<1x8x8xf32>
      %cst_60 = arith.constant dense<0xFF800000> : vector<1x8xf32>
      %141 = vector.multi_reduction <maximumf>, %140, %cst_60 [2] : vector<1x8x8xf32> to vector<1x8xf32>
      %142 = vector.shape_cast %141 : vector<1x8xf32> to vector<1x8x1xf32>
      %143 = vector.broadcast %142 : vector<1x8x1xf32> to vector<1x8x8xf32>
      %144 = arith.subf %140, %143 : vector<1x8x8xf32>
      %145 = math.exp %144 : vector<1x8x8xf32>
      %cst_61 = arith.constant dense<0.000000e+00> : vector<1x8xf32>
      %146 = vector.multi_reduction <add>, %145, %cst_61 [2] : vector<1x8x8xf32> to vector<1x8xf32>
      %147 = vector.shape_cast %146 : vector<1x8xf32> to vector<1x8x1xf32>
      %148 = tpu.reciprocal %147 {approx = true} : vector<1x8x1xf32> -> vector<1x8x1xf32>
      %149 = vector.broadcast %148 : vector<1x8x1xf32> to vector<1x8x8xf32>
      %150 = arith.mulf %145, %149 : vector<1x8x8xf32>
      %151 = arith.truncf %150 : vector<1x8x8xf32> to vector<1x8x8xbf16>
      %152 = vector.extract_strided_slice %99 {offsets = [0, 0, 16], sizes = [1, 8, 8], strides = [1, 1, 1]} : vector<1x8x32xbf16> to vector<1x8x8xbf16>
      "tpu.trace_start"() <{level = 10 : i32, message = "bqk,bkd->bqd"}> : () -> ()
      %cst_62 = arith.constant dense<0.000000e+00> : vector<1x8x8xf32>
      %153 = tpu.matmul %151, %152, %cst_62 {dimension_numbers = #tpu.dot_dimension_numbers<[2], [1], [1], [2], [0, 0, 0, 1, 1, 2], [0], [0]>} : vector<1x8x8xbf16>, vector<1x8x8xbf16>, vector<1x8x8xf32> -> vector<1x8x8xf32>
      "tpu.trace_stop"() : () -> ()
      %154 = vector.extract_strided_slice %95 {offsets = [0, 0, 24], sizes = [1, 8, 8], strides = [1, 1, 1]} : vector<1x8x32xbf16> to vector<1x8x8xbf16>
      %155 = vector.extract_strided_slice %97 {offsets = [0, 0, 24], sizes = [1, 8, 8], strides = [1, 1, 1]} : vector<1x8x32xbf16> to vector<1x8x8xbf16>
      "tpu.trace_start"() <{level = 10 : i32, message = "bqd,bkd->bqk"}> : () -> ()
      %cst_63 = arith.constant dense<0.000000e+00> : vector<1x8x8xf32>
      %156 = tpu.matmul %154, %155, %cst_63 {dimension_numbers = #tpu.dot_dimension_numbers<[2], [2], [1], [1], [0, 0, 0, 1, 1, 1], [0], [0]>} : vector<1x8x8xbf16>, vector<1x8x8xbf16>, vector<1x8x8xf32> -> vector<1x8x8xf32>
      "tpu.trace_stop"() : () -> ()
      %157 = vector.broadcast %30 : vector<1x1x8xf32> to vector<1x8x8xf32>
      %158 = arith.addf %156, %157 : vector<1x8x8xf32>
      %cst_64 = arith.constant dense<0xFF800000> : vector<1x8xf32>
      %159 = vector.multi_reduction <maximumf>, %158, %cst_64 [2] : vector<1x8x8xf32> to vector<1x8xf32>
      %160 = vector.shape_cast %159 : vector<1x8xf32> to vector<1x8x1xf32>
      %161 = vector.broadcast %160 : vector<1x8x1xf32> to vector<1x8x8xf32>
      %162 = arith.subf %158, %161 : vector<1x8x8xf32>
      %163 = math.exp %162 : vector<1x8x8xf32>
      %cst_65 = arith.constant dense<0.000000e+00> : vector<1x8xf32>
      %164 = vector.multi_reduction <add>, %163, %cst_65 [2] : vector<1x8x8xf32> to vector<1x8xf32>
      %165 = vector.shape_cast %164 : vector<1x8xf32> to vector<1x8x1xf32>
      %166 = tpu.reciprocal %165 {approx = true} : vector<1x8x1xf32> -> vector<1x8x1xf32>
      %167 = vector.broadcast %166 : vector<1x8x1xf32> to vector<1x8x8xf32>
      %168 = arith.mulf %163, %167 : vector<1x8x8xf32>
      %169 = arith.truncf %168 : vector<1x8x8xf32> to vector<1x8x8xbf16>
      %170 = vector.extract_strided_slice %99 {offsets = [0, 0, 24], sizes = [1, 8, 8], strides = [1, 1, 1]} : vector<1x8x32xbf16> to vector<1x8x8xbf16>
      "tpu.trace_start"() <{level = 10 : i32, message = "bqk,bkd->bqd"}> : () -> ()
      %cst_66 = arith.constant dense<0.000000e+00> : vector<1x8x8xf32>
      %171 = tpu.matmul %169, %170, %cst_66 {dimension_numbers = #tpu.dot_dimension_numbers<[2], [1], [1], [2], [0, 0, 0, 1, 1, 2], [0], [0]>} : vector<1x8x8xbf16>, vector<1x8x8xbf16>, vector<1x8x8xf32> -> vector<1x8x8xf32>
      "tpu.trace_stop"() : () -> ()
      %172 = tpu.concatenate %117, %135, %153, %171 in 2 : vector<1x8x8xf32>, vector<1x8x8xf32>, vector<1x8x8xf32>, vector<1x8x8xf32> -> vector<1x8x32xf32>
      %173 = arith.index_cast %arg20 : i32 to index
      %c0_67 = arith.constant 0 : index
      %c0_68 = arith.constant 0 : index
      %174 = vector.load %arg10[%173, %c0_67, %c0_68] : memref<3x32x32xbf16, #tpu.memory_space<vmem>>, vector<1x32x32xbf16>
      %175 = vector.shape_cast %174 : vector<1x32x32xbf16> to vector<32x32xbf16>
      %176 = vector.shape_cast %172 : vector<1x8x32xf32> to vector<8x32xf32>
      %177 = arith.truncf %176 : vector<8x32xf32> to vector<8x32xbf16>
      %cst_69 = arith.constant dense<0.000000e+00> : vector<8x32xf32>
      %178 = tpu.matmul %177, %175, %cst_69 {dimension_numbers = #tpu.dot_dimension_numbers<[1], [0], [0], [1], [0, 0, 1, 1], [], []>} : vector<8x32xbf16>, vector<32x32xbf16>, vector<8x32xf32> -> vector<8x32xf32>
      %179 = vector.shape_cast %178 : vector<8x32xf32> to vector<1x8x32xf32>
      %180 = arith.index_cast %arg20 : i32 to index
      %c0_70 = arith.constant 0 : index
      %c0_71 = arith.constant 0 : index
      %181 = vector.load %arg11[%180, %c0_70, %c0_71] : memref<3x1x32xf32, #tpu.memory_space<vmem>>, vector<1x1x32xf32>
      %182 = vector.shape_cast %181 : vector<1x1x32xf32> to vector<1x32xf32>
      %183 = vector.shape_cast %182 : vector<1x32xf32> to vector<1x1x32xf32>
      %184 = vector.broadcast %183 : vector<1x1x32xf32> to vector<1x8x32xf32>
      %185 = arith.addf %179, %184 : vector<1x8x32xf32>
      %186 = arith.index_cast %arg20 : i32 to index
      %c0_72 = arith.constant 0 : index
      %c0_73 = arith.constant 0 : index
      %187 = vector.load %arg16[%186, %c0_72, %c0_73] : memref<3x4x32xf32, #tpu.memory_space<vmem>>, vector<1x4x32xf32>
      %188 = vector.shape_cast %187 : vector<1x4x32xf32> to vector<4x32xf32>
      %189 = arith.addf %arg21, %185 : vector<1x8x32xf32>
      %190 = vector.extract_strided_slice %188 {offsets = [0, 0], sizes = [1, 32], strides = [1, 1]} : vector<4x32xf32> to vector<1x32xf32>
      %191 = vector.shape_cast %190 : vector<1x32xf32> to vector<1x1x32xf32>
      %192 = vector.extract_strided_slice %188 {offsets = [1, 0], sizes = [1, 32], strides = [1, 1]} : vector<4x32xf32> to vector<1x32xf32>
      %193 = vector.shape_cast %192 : vector<1x32xf32> to vector<1x1x32xf32>
      %cst_74 = arith.constant dense<0.000000e+00> : vector<1x8xf32>
      %194 = vector.multi_reduction <add>, %189, %cst_74 [2] : vector<1x8x32xf32> to vector<1x8xf32>
      %195 = vector.shape_cast %194 : vector<1x8xf32> to vector<1x8x1xf32>
      %cst_75 = arith.constant 3.200000e+01 : f32
      %196 = vector.broadcast %cst_75 : f32 to vector<1x8x1xf32>
      %197 = arith.divf %195, %196 : vector<1x8x1xf32>
      %198 = vector.broadcast %197 : vector<1x8x1xf32> to vector<1x8x32xf32>
      %199 = arith.subf %189, %198 : vector<1x8x32xf32>
      %200 = arith.mulf %199, %199 : vector<1x8x32xf32>
      %cst_76 = arith.constant dense<0.000000e+00> : vector<1x8xf32>
      %201 = vector.multi_reduction <add>, %200, %cst_76 [2] : vector<1x8x32xf32> to vector<1x8xf32>
      %202 = vector.shape_cast %201 : vector<1x8xf32> to vector<1x8x1xf32>
      %cst_77 = arith.constant 3.200000e+01 : f32
      %203 = vector.broadcast %cst_77 : f32 to vector<1x8x1xf32>
      %204 = arith.divf %202, %203 : vector<1x8x1xf32>
      %205 = vector.broadcast %197 : vector<1x8x1xf32> to vector<1x8x32xf32>
      %206 = arith.subf %189, %205 : vector<1x8x32xf32>
      %cst_78 = arith.constant 9.99999974E-6 : f32
      %207 = vector.broadcast %cst_78 : f32 to vector<1x8x1xf32>
      %208 = arith.addf %204, %207 : vector<1x8x1xf32>
      %209 = math.rsqrt %208 : vector<1x8x1xf32>
      %210 = vector.broadcast %209 : vector<1x8x1xf32> to vector<1x8x32xf32>
      %211 = arith.mulf %206, %210 : vector<1x8x32xf32>
      %212 = vector.broadcast %191 : vector<1x1x32xf32> to vector<1x8x32xf32>
      %213 = arith.mulf %211, %212 : vector<1x8x32xf32>
      %214 = vector.broadcast %193 : vector<1x1x32xf32> to vector<1x8x32xf32>
      %215 = arith.addf %213, %214 : vector<1x8x32xf32>
      %216 = vector.shape_cast %215 : vector<1x8x32xf32> to vector<8x32xf32>
      %217 = arith.truncf %216 : vector<8x32xf32> to vector<8x32xbf16>
      %cst_79 = arith.constant 0.000000e+00 : f32
      %218 = vector.broadcast %cst_79 : f32 to vector<8x32xf32>
      %219 = arith.index_cast %arg20 : i32 to index
      %c0_80 = arith.constant 0 : index
      %c0_81 = arith.constant 0 : index
      %220 = vector.load %arg12[%219, %c0_80, %c0_81] : memref<3x32x64xbf16, #tpu.memory_space<vmem>>, vector<1x32x64xbf16>
      %221 = vector.shape_cast %220 : vector<1x32x64xbf16> to vector<32x64xbf16>
      %cst_82 = arith.constant dense<0.000000e+00> : vector<8x64xf32>
      %222 = tpu.matmul %217, %221, %cst_82 {dimension_numbers = #tpu.dot_dimension_numbers<[1], [0], [0], [1], [0, 0, 1, 1], [], []>} : vector<8x32xbf16>, vector<32x64xbf16>, vector<8x64xf32> -> vector<8x64xf32>
      %223 = arith.index_cast %arg20 : i32 to index
      %c0_83 = arith.constant 0 : index
      %c0_84 = arith.constant 0 : index
      %224 = vector.load %arg13[%223, %c0_83, %c0_84] : memref<3x1x64xf32, #tpu.memory_space<vmem>>, vector<1x1x64xf32>
      %225 = vector.shape_cast %224 : vector<1x1x64xf32> to vector<1x64xf32>
      %226 = vector.broadcast %225 : vector<1x64xf32> to vector<8x64xf32>
      %227 = arith.addf %222, %226 : vector<8x64xf32>
      %cst_85 = arith.constant 0.000000e+00 : f32
      %228 = vector.broadcast %cst_85 : f32 to vector<8x64xf32>
      %229 = arith.maximumf %227, %228 : vector<8x64xf32>
      %230 = arith.truncf %229 : vector<8x64xf32> to vector<8x64xbf16>
      %231 = arith.index_cast %arg20 : i32 to index
      %c0_86 = arith.constant 0 : index
      %c0_87 = arith.constant 0 : index
      %232 = vector.load %arg14[%231, %c0_86, %c0_87] : memref<3x64x32xbf16, #tpu.memory_space<vmem>>, vector<1x64x32xbf16>
      %233 = vector.shape_cast %232 : vector<1x64x32xbf16> to vector<64x32xbf16>
      %cst_88 = arith.constant dense<0.000000e+00> : vector<8x32xf32>
      %234 = tpu.matmul %230, %233, %cst_88 {dimension_numbers = #tpu.dot_dimension_numbers<[1], [0], [0], [1], [0, 0, 1, 1], [], []>} : vector<8x64xbf16>, vector<64x32xbf16>, vector<8x32xf32> -> vector<8x32xf32>
      %235 = arith.addf %218, %234 : vector<8x32xf32>
      %236 = vector.shape_cast %235 : vector<8x32xf32> to vector<1x8x32xf32>
      %237 = arith.index_cast %arg20 : i32 to index
      %c0_89 = arith.constant 0 : index
      %c0_90 = arith.constant 0 : index
      %238 = vector.load %arg15[%237, %c0_89, %c0_90] : memref<3x1x32xf32, #tpu.memory_space<vmem>>, vector<1x1x32xf32>
      %239 = vector.shape_cast %238 : vector<1x1x32xf32> to vector<1x32xf32>
      %240 = vector.shape_cast %239 : vector<1x32xf32> to vector<1x1x32xf32>
      %241 = vector.broadcast %240 : vector<1x1x32xf32> to vector<1x8x32xf32>
      %242 = arith.addf %236, %241 : vector<1x8x32xf32>
      %243 = arith.addf %215, %242 : vector<1x8x32xf32>
      %244 = vector.extract_strided_slice %188 {offsets = [2, 0], sizes = [1, 32], strides = [1, 1]} : vector<4x32xf32> to vector<1x32xf32>
      %245 = vector.shape_cast %244 : vector<1x32xf32> to vector<1x1x32xf32>
      %246 = vector.extract_strided_slice %188 {offsets = [3, 0], sizes = [1, 32], strides = [1, 1]} : vector<4x32xf32> to vector<1x32xf32>
      %247 = vector.shape_cast %246 : vector<1x32xf32> to vector<1x1x32xf32>
      %cst_91 = arith.constant dense<0.000000e+00> : vector<1x8xf32>
      %248 = vector.multi_reduction <add>, %243, %cst_91 [2] : vector<1x8x32xf32> to vector<1x8xf32>
      %249 = vector.shape_cast %248 : vector<1x8xf32> to vector<1x8x1xf32>
      %cst_92 = arith.constant 3.200000e+01 : f32
      %250 = vector.broadcast %cst_92 : f32 to vector<1x8x1xf32>
      %251 = arith.divf %249, %250 : vector<1x8x1xf32>
      %252 = vector.broadcast %251 : vector<1x8x1xf32> to vector<1x8x32xf32>
      %253 = arith.subf %243, %252 : vector<1x8x32xf32>
      %254 = arith.mulf %253, %253 : vector<1x8x32xf32>
      %cst_93 = arith.constant dense<0.000000e+00> : vector<1x8xf32>
      %255 = vector.multi_reduction <add>, %254, %cst_93 [2] : vector<1x8x32xf32> to vector<1x8xf32>
      %256 = vector.shape_cast %255 : vector<1x8xf32> to vector<1x8x1xf32>
      %cst_94 = arith.constant 3.200000e+01 : f32
      %257 = vector.broadcast %cst_94 : f32 to vector<1x8x1xf32>
      %258 = arith.divf %256, %257 : vector<1x8x1xf32>
      %259 = vector.broadcast %251 : vector<1x8x1xf32> to vector<1x8x32xf32>
      %260 = arith.subf %243, %259 : vector<1x8x32xf32>
      %cst_95 = arith.constant 9.99999974E-6 : f32
      %261 = vector.broadcast %cst_95 : f32 to vector<1x8x1xf32>
      %262 = arith.addf %258, %261 : vector<1x8x1xf32>
      %263 = math.rsqrt %262 : vector<1x8x1xf32>
      %264 = vector.broadcast %263 : vector<1x8x1xf32> to vector<1x8x32xf32>
      %265 = arith.mulf %260, %264 : vector<1x8x32xf32>
      %266 = vector.broadcast %245 : vector<1x1x32xf32> to vector<1x8x32xf32>
      %267 = arith.mulf %265, %266 : vector<1x8x32xf32>
      %268 = vector.broadcast %247 : vector<1x1x32xf32> to vector<1x8x32xf32>
      %269 = arith.addf %267, %268 : vector<1x8x32xf32>
      scf.yield %269 : vector<1x8x32xf32>
    }
    %c3_i32_21 = arith.constant 3 : i32
    %c0_22 = arith.constant 0 : index
    %c0_23 = arith.constant 0 : index
    %33 = vector.load %arg17[%c0_22, %c0_23] : memref<2x32xf32, #tpu.memory_space<vmem>>, vector<2x32xf32>
    %34 = vector.extract_strided_slice %33 {offsets = [0, 0], sizes = [1, 32], strides = [1, 1]} : vector<2x32xf32> to vector<1x32xf32>
    %35 = vector.shape_cast %34 : vector<1x32xf32> to vector<1x1x32xf32>
    %36 = vector.extract_strided_slice %33 {offsets = [1, 0], sizes = [1, 32], strides = [1, 1]} : vector<2x32xf32> to vector<1x32xf32>
    %37 = vector.shape_cast %36 : vector<1x32xf32> to vector<1x1x32xf32>
    %cst_24 = arith.constant dense<0.000000e+00> : vector<1x8xf32>
    %38 = vector.multi_reduction <add>, %32, %cst_24 [2] : vector<1x8x32xf32> to vector<1x8xf32>
    %39 = vector.shape_cast %38 : vector<1x8xf32> to vector<1x8x1xf32>
    %cst_25 = arith.constant 3.200000e+01 : f32
    %40 = vector.broadcast %cst_25 : f32 to vector<1x8x1xf32>
    %41 = arith.divf %39, %40 : vector<1x8x1xf32>
    %42 = vector.broadcast %41 : vector<1x8x1xf32> to vector<1x8x32xf32>
    %43 = arith.subf %32, %42 : vector<1x8x32xf32>
    %44 = arith.mulf %43, %43 : vector<1x8x32xf32>
    %cst_26 = arith.constant dense<0.000000e+00> : vector<1x8xf32>
    %45 = vector.multi_reduction <add>, %44, %cst_26 [2] : vector<1x8x32xf32> to vector<1x8xf32>
    %46 = vector.shape_cast %45 : vector<1x8xf32> to vector<1x8x1xf32>
    %cst_27 = arith.constant 3.200000e+01 : f32
    %47 = vector.broadcast %cst_27 : f32 to vector<1x8x1xf32>
    %48 = arith.divf %46, %47 : vector<1x8x1xf32>
    %49 = vector.broadcast %41 : vector<1x8x1xf32> to vector<1x8x32xf32>
    %50 = arith.subf %32, %49 : vector<1x8x32xf32>
    %cst_28 = arith.constant 9.99999974E-6 : f32
    %51 = vector.broadcast %cst_28 : f32 to vector<1x8x1xf32>
    %52 = arith.addf %48, %51 : vector<1x8x1xf32>
    %53 = math.rsqrt %52 : vector<1x8x1xf32>
    %54 = vector.broadcast %53 : vector<1x8x1xf32> to vector<1x8x32xf32>
    %55 = arith.mulf %50, %54 : vector<1x8x32xf32>
    %56 = vector.broadcast %35 : vector<1x1x32xf32> to vector<1x8x32xf32>
    %57 = arith.mulf %55, %56 : vector<1x8x32xf32>
    %58 = vector.broadcast %37 : vector<1x1x32xf32> to vector<1x8x32xf32>
    %59 = arith.addf %57, %58 : vector<1x8x32xf32>
    %60 = vector.shape_cast %23 : vector<1x1xi1> to vector<1x1x1xi1>
    %cst_29 = arith.constant 9.99999974E-6 : f32
    %61 = vector.shape_cast %60 : vector<1x1x1xi1> to vector<1x1x1xi1>
    %62 = vector.broadcast %61 : vector<1x1x1xi1> to vector<1x8x32xi1>
    %63 = vector.broadcast %cst_29 : f32 to vector<1x8x32xf32>
    %64 = arith.select %62, %63, %59 : vector<1x8x32xi1>, vector<1x8x32xf32>
    %c0_30 = arith.constant 0 : index
    %c0_31 = arith.constant 0 : index
    %c0_32 = arith.constant 0 : index
    %65 = vector.load %arg18[%c0_30, %c0_31, %c0_32] : memref<1x1x32xf32, #tpu.memory_space<vmem>>, vector<1x1x32xf32>
    %cst_33 = arith.constant dense<0.000000e+00> : vector<1x32xf32>
    %66 = vector.multi_reduction <add>, %64, %cst_33 [1] : vector<1x8x32xf32> to vector<1x32xf32>
    %67 = vector.shape_cast %66 : vector<1x32xf32> to vector<1x1x32xf32>
    %68 = arith.addf %65, %67 : vector<1x1x32xf32>
    %c0_34 = arith.constant 0 : index
    %c0_35 = arith.constant 0 : index
    %c0_36 = arith.constant 0 : index
    %69 = vector.load %arg18[%c0_34, %c0_35, %c0_36] : memref<1x1x32xf32, #tpu.memory_space<vmem>>, vector<1x1x32xf32>
    tpu.vector_store %arg18[%c0_34, %c0_35, %c0_36], %68 {strides = array<i32>} : memref<1x1x32xf32, #tpu.memory_space<vmem>>, vector<1x1x32xf32>,
    %c0_37 = arith.constant 0 : index
    %c0_38 = arith.constant 0 : index
    %70 = vector.load %arg19[%c0_37, %c0_38] : memref<1x1xf32, #tpu.memory_space<vmem>>, vector<1x1xf32>
    %cst_39 = arith.constant 1.000000e+00 : f32
    %71 = vector.broadcast %cst_39 : f32 to vector<1x1x8xf32>
    %72 = arith.subf %71, %6 : vector<1x1x8xf32>
    %cst_40 = arith.constant dense<0.000000e+00> : vector<1x1xf32>
    %73 = vector.multi_reduction <add>, %72, %cst_40 [2] : vector<1x1x8xf32> to vector<1x1xf32>
    %74 = arith.addf %70, %73 : vector<1x1xf32>
    %c0_41 = arith.constant 0 : index
    %c0_42 = arith.constant 0 : index
    %75 = vector.load %arg19[%c0_41, %c0_42] : memref<1x1xf32, #tpu.memory_space<vmem>>, vector<1x1xf32>
    tpu.vector_store %arg19[%c0_41, %c0_42], %74 {strides = array<i32>} : memref<1x1xf32, #tpu.memory_space<vmem>>, vector<1x1xf32>,
    %c1_i32_43 = arith.constant 1 : i32
    %76 = arith.cmpi eq, %arg1, %c1_i32_43 : i32
    %77 = arith.extui %76 : i1 to i32
    %c0_i32_44 = arith.constant 0 : i32
    %78 = arith.cmpi ne, %77, %c0_i32_44 : i32
    scf.if %78 {
      %c0_45 = arith.constant 0 : index
      %c0_46 = arith.constant 0 : index
      %79 = vector.load %arg19[%c0_45, %c0_46] : memref<1x1xf32, #tpu.memory_space<vmem>>, vector<1x1xf32>
      %cst_47 = arith.constant 1.000000e+00 : f32
      %80 = vector.broadcast %cst_47 : f32 to vector<1x1xf32>
      %81 = arith.maximumf %79, %80 : vector<1x1xf32>
      %c0_48 = arith.constant 0 : index
      %c0_49 = arith.constant 0 : index
      %c0_50 = arith.constant 0 : index
      %82 = vector.load %arg18[%c0_48, %c0_49, %c0_50] : memref<1x1x32xf32, #tpu.memory_space<vmem>>, vector<1x1x32xf32>
      %83 = vector.shape_cast %81 : vector<1x1xf32> to vector<1x1x1xf32>
      %84 = vector.broadcast %83 : vector<1x1x1xf32> to vector<1x1x32xf32>
      %85 = arith.divf %82, %84 : vector<1x1x32xf32>
      %c0_51 = arith.constant 0 : index
      %c0_52 = arith.constant 0 : index
      %c0_53 = arith.constant 0 : index
      %86 = vector.load %arg18[%c0_51, %c0_52, %c0_53] : memref<1x1x32xf32, #tpu.memory_space<vmem>>, vector<1x1x32xf32>
      tpu.vector_store %arg18[%c0_51, %c0_52, %c0_53], %85 {strides = array<i32>} : memref<1x1x32xf32, #tpu.memory_space<vmem>>, vector<1x1x32xf32>,
    } else {
    }
    return
  }
  func.func @transform_0(%arg0: i32, %arg1: i32) -> (i32, i32, i32) {
    %c0_i32 = arith.constant 0 : i32
    %c0_i32_0 = arith.constant 0 : i32
    return %arg0, %arg1, %c0_i32 : i32, i32, i32
  }
  func.func @transform_1(%arg0: i32, %arg1: i32) -> (i32, i32, i32) {
    %c0_i32 = arith.constant 0 : i32
    %c0_i32_0 = arith.constant 0 : i32
    return %arg0, %arg1, %c0_i32 : i32, i32, i32
  }
  func.func @transform_2(%arg0: i32, %arg1: i32) -> (i32, i32, i32, i32) {
    %c0_i32 = arith.constant 0 : i32
    %c0_i32_0 = arith.constant 0 : i32
    %c0_i32_1 = arith.constant 0 : i32
    return %arg0, %arg1, %c0_i32, %c0_i32_0 : i32, i32, i32, i32
  }
  func.func @transform_3(%arg0: i32, %arg1: i32) -> (i32, i32) {
    %c0_i32 = arith.constant 0 : i32
    %c0_i32_0 = arith.constant 0 : i32
    %c0_i32_1 = arith.constant 0 : i32
    return %c0_i32, %c0_i32_0 : i32, i32
  }
  func.func @transform_4(%arg0: i32, %arg1: i32) -> (i32, i32) {
    %c0_i32 = arith.constant 0 : i32
    %c0_i32_0 = arith.constant 0 : i32
    %c0_i32_1 = arith.constant 0 : i32
    return %c0_i32, %c0_i32_0 : i32, i32
  }
  func.func @transform_5(%arg0: i32, %arg1: i32) -> (i32, i32) {
    %c0_i32 = arith.constant 0 : i32
    %c0_i32_0 = arith.constant 0 : i32
    %c0_i32_1 = arith.constant 0 : i32
    return %c0_i32, %c0_i32_0 : i32, i32
  }
  func.func @transform_6(%arg0: i32, %arg1: i32) -> (i32, i32, i32) {
    %c0_i32 = arith.constant 0 : i32
    %c0_i32_0 = arith.constant 0 : i32
    %c0_i32_1 = arith.constant 0 : i32
    %c0_i32_2 = arith.constant 0 : i32
    return %c0_i32, %c0_i32_0, %c0_i32_1 : i32, i32, i32
  }
  func.func @transform_7(%arg0: i32, %arg1: i32) -> (i32, i32, i32) {
    %c0_i32 = arith.constant 0 : i32
    %c0_i32_0 = arith.constant 0 : i32
    %c0_i32_1 = arith.constant 0 : i32
    %c0_i32_2 = arith.constant 0 : i32
    return %c0_i32, %c0_i32_0, %c0_i32_1 : i32, i32, i32
  }
  func.func @transform_8(%arg0: i32, %arg1: i32) -> (i32, i32, i32) {
    %c0_i32 = arith.constant 0 : i32
    %c0_i32_0 = arith.constant 0 : i32
    %c0_i32_1 = arith.constant 0 : i32
    %c0_i32_2 = arith.constant 0 : i32
    return %c0_i32, %c0_i32_0, %c0_i32_1 : i32, i32, i32
  }
  func.func @transform_9(%arg0: i32, %arg1: i32) -> (i32, i32, i32) {
    %c0_i32 = arith.constant 0 : i32
    %c0_i32_0 = arith.constant 0 : i32
    %c0_i32_1 = arith.constant 0 : i32
    %c0_i32_2 = arith.constant 0 : i32
    return %c0_i32, %c0_i32_0, %c0_i32_1 : i32, i32, i32
  }
  func.func @transform_10(%arg0: i32, %arg1: i32) -> (i32, i32, i32) {
    %c0_i32 = arith.constant 0 : i32
    %c0_i32_0 = arith.constant 0 : i32
    %c0_i32_1 = arith.constant 0 : i32
    %c0_i32_2 = arith.constant 0 : i32
    return %c0_i32, %c0_i32_0, %c0_i32_1 : i32, i32, i32
  }
  func.func @transform_11(%arg0: i32, %arg1: i32) -> (i32, i32, i32) {
    %c0_i32 = arith.constant 0 : i32
    %c0_i32_0 = arith.constant 0 : i32
    %c0_i32_1 = arith.constant 0 : i32
    %c0_i32_2 = arith.constant 0 : i32
    return %c0_i32, %c0_i32_0, %c0_i32_1 : i32, i32, i32
  }
  func.func @transform_12(%arg0: i32, %arg1: i32) -> (i32, i32, i32) {
    %c0_i32 = arith.constant 0 : i32
    %c0_i32_0 = arith.constant 0 : i32
    %c0_i32_1 = arith.constant 0 : i32
    %c0_i32_2 = arith.constant 0 : i32
    return %c0_i32, %c0_i32_0, %c0_i32_1 : i32, i32, i32
  }
  func.func @transform_13(%arg0: i32, %arg1: i32) -> (i32, i32, i32) {
    %c0_i32 = arith.constant 0 : i32
    %c0_i32_0 = arith.constant 0 : i32
    %c0_i32_1 = arith.constant 0 : i32
    %c0_i32_2 = arith.constant 0 : i32
    return %c0_i32, %c0_i32_0, %c0_i32_1 : i32, i32, i32
  }
  func.func @transform_14(%arg0: i32, %arg1: i32) -> (i32, i32, i32) {
    %c0_i32 = arith.constant 0 : i32
    %c0_i32_0 = arith.constant 0 : i32
    %c0_i32_1 = arith.constant 0 : i32
    %c0_i32_2 = arith.constant 0 : i32
    return %c0_i32, %c0_i32_0, %c0_i32_1 : i32, i32, i32
  }
  func.func @transform_15(%arg0: i32, %arg1: i32) -> (i32, i32) {
    %c0_i32 = arith.constant 0 : i32
    %c0_i32_0 = arith.constant 0 : i32
    %c0_i32_1 = arith.constant 0 : i32
    return %c0_i32, %c0_i32_0 : i32, i32
  }
  func.func @transform_16(%arg0: i32, %arg1: i32) -> (i32, i32, i32) {
    %c0_i32 = arith.constant 0 : i32
    %c0_i32_0 = arith.constant 0 : i32
    %c0_i32_1 = arith.constant 0 : i32
    return %arg0, %c0_i32, %c0_i32_0 : i32, i32, i32
  }
}

</mosaic_0001>

<llo_original>
// kernel: tpu_custom_call.1
$region0: #{tpu_custom_call.1}
  #allocation0 [shape = 'u32[]', space=smem, size = 0x4, offset = 0x4, fixed_abs, tag = 'smem constant byte address 0x4 - core index']
  #allocation1 [shape = 'u32[144,128]{1,0:T(1,128)}', space=vmem, size = 0x12000, scoped, tag = 'internal scratch']
  #allocation2 [shape = 'f32[1,1]{1,0:T(1,128)}', space=vmem, size = 0x200, scoped, tag = 'scratch operand']
  %s0 = inlined_call_operand.vmem [shape: bf16[2,16,32], index: 0, kind: input, shape index: {}]
  %s1 = inlined_call_operand.vmem [shape: f32[2,16,1], index: 1, kind: input, shape index: {}]
  %s2 = inlined_call_operand.hbm [shape: f32[2,2,1,8], index: 2, kind: input, shape index: {}]
  %s3 = inlined_call_operand.hbm [shape: bf16[32,32], index: 3, kind: input, shape index: {}]
  %s4 = inlined_call_operand.hbm [shape: f32[1,32], index: 4, kind: input, shape index: {}]
  %s5 = inlined_call_operand.hbm [shape: f32[1,32], index: 5, kind: input, shape index: {}]
  %s6 = inlined_call_operand.vmem [shape: bf16[3,32,96], index: 6, kind: input, shape index: {}]
  %s7 = inlined_call_operand.vmem [shape: f32[3,1,96], index: 7, kind: input, shape index: {}]
  %s8 = inlined_call_operand.vmem [shape: bf16[3,32,32], index: 8, kind: input, shape index: {}]
  %s9 = inlined_call_operand.hbm [shape: f32[3,1,32], index: 9, kind: input, shape index: {}]
  %s10 = inlined_call_operand.vmem [shape: bf16[3,32,64], index: 10, kind: input, shape index: {}]
  %s11 = inlined_call_operand.hbm [shape: f32[3,1,64], index: 11, kind: input, shape index: {}]
  %s12 = inlined_call_operand.vmem [shape: bf16[3,64,32], index: 12, kind: input, shape index: {}]
  %s13 = inlined_call_operand.vmem [shape: f32[3,1,32], index: 13, kind: input, shape index: {}]
  %s14 = inlined_call_operand.vmem [shape: f32[3,4,32], index: 14, kind: input, shape index: {}]
  %s15 = inlined_call_operand.vmem [shape: f32[2,32], index: 15, kind: input, shape index: {}]
  %s16 = inlined_call_operand.hbm [shape: f32[2,1,32], index: 16, kind: output, shape index: {}]
  %s17 = sld [smem:[#allocation0]]
  $region136: #{tpu_custom_call.1} parent=0
    _
  %s19 = ssub.s32 1, %s17
  %s20 = scalar_select 0, %s19, %s17
  $region1: #{tpu_custom_call.1} parent=0
    #allocation3 [shape = 'u8[1024]{0}', space=vmem, size = 0x400, scoped, tag = 'input window, operand 2']
    #allocation4 [shape = 's32[2]{0}', space=sflag, size = 0x8, scoped, tag = 'scoped memory for tpu_custom_call.1']
    #allocation5 [shape = 's32[2]{0}', space=sflag, size = 0x8, scoped, tag = 'scoped memory for tpu_custom_call.1']
    #allocation6 [shape = 'u8[8192]{0}', space=vmem, size = 0x2000, scoped, tag = 'input window, operand 3, single buffered']
    #allocation7 [shape = 's32[1]{0}', space=sflag, size = 0x4, scoped, tag = 'scoped memory for tpu_custom_call.1']
    #allocation8 [shape = 'u8[512]{0}', space=vmem, size = 0x400, scoped, tag = 'input window, operand 4, single buffered']
    #allocation9 [shape = 'u8[512]{0}', space=vmem, size = 0x400, scoped, tag = 'input window, operand 5, single buffered']
    #allocation10 [shape = 's32[1]{0}', space=sflag, size = 0x4, scoped, tag = 'scoped memory for tpu_custom_call.1']
    #allocation11 [shape = 'u8[1536]{0}', space=vmem, size = 0x800, scoped, tag = 'input window, operand 9, single buffered']
    #allocation12 [shape = 'u8[1536]{0}', space=vmem, size = 0x800, scoped, tag = 'input window, operand 11, single buffered']
    #allocation13 [shape = 's32[1]{0}', space=sflag, size = 0x4, scoped, tag = 'scoped memory for tpu_custom_call.1']
    #allocation14 [shape = 'u8[1024]{0}', space=vmem, size = 0x400, scoped, tag = 'output window, operand 0']
    %21 = vsyncpa [#allocation4], 0
    %s22 = scalar_lea.sflag [#allocation4], 1
    %23 = vsyncpa %s22, 0
    %24 = vsyncpa [#allocation7], 0
    %25 = vsyncpa [#allocation10], 0
    %26 = vsyncpa [#allocation13], 0
    %27 = vsyncpa [#allocation5], 0
    %s28 = scalar_lea.sflag [#allocation5], 1
    %29 = vsyncpa %s28, 0
    loop: start=0, step=1, limit=6
    $region2: #{tpu_custom_call.1} parent=1 // loop_pre_header
      _
    $region3: #{tpu_custom_call.1} parent=1 // loop_header
      %s31 = sphi 0, %s35
      %p32 = scmp.ge.s32.totalorder %s31, 6
      %s38 = sphi 0, %s50
      %s39 = sphi 0, %s46
      %s40 = sphi 0, %s38
      %s41 = sphi 0, %s39
      %s42 = sphi 0, %s40
      %s43 = sphi 0, %s41
      %s55 = sphi 0, %s57
      %s58 = sphi 0, %s55
      %s59 = sphi 0, %s58
      %s75 = sphi 0, %s59
      %s83 = sphi 0, %s85
      %s86 = sphi 0, %s83
      %s87 = sphi 0, %s86
      %s103 = sphi 0, %s87
      %s111 = sphi 0, %s113
      %s114 = sphi 0, %s111
      %s115 = sphi 0, %s114
      %s131 = sphi 0, %s115
      %s135 = sphi 0, %s135
      %s137 = sphi 0, %s135
      %s138 = sphi 0, %s137
      %s152 = sphi 0, %s138
      %s156 = sphi 0, %s156
      %s158 = sphi 0, %s156
      %s159 = sphi 0, %s158
      %s173 = sphi 0, %s159
      %s177 = sphi 0, %s177
      %s179 = sphi 0, %s177
      %s180 = sphi 0, %s179
      %s194 = sphi 0, %s180
      %s198 = sphi 0, %s198
      %s200 = sphi 0, %s198
      %s201 = sphi 0, %s200
      %s215 = sphi 0, %s201
      %s219 = sphi 0, %s219
      %s221 = sphi 0, %s219
      %s222 = sphi 0, %s221
      %s236 = sphi 0, %s222
      %s240 = sphi 0, %s240
      %s242 = sphi 0, %s240
      %s243 = sphi 0, %s242
      %s257 = sphi 0, %s243
      %s261 = sphi 0, %s261
      %s263 = sphi 0, %s261
      %s264 = sphi 0, %s263
      %s278 = sphi 0, %s264
      %s282 = sphi 0, %s282
      %s284 = sphi 0, %s282
      %s285 = sphi 0, %s284
      %s299 = sphi 0, %s285
      %s303 = sphi 0, %s303
      %s305 = sphi 0, %s303
      %s306 = sphi 0, %s305
      %s320 = sphi 0, %s306
      %s324 = sphi 0, %s324
      %s326 = sphi 0, %s324
      %s327 = sphi 0, %s326
      %s341 = sphi 0, %s327
      %s345 = sphi 0, %s345
      %s347 = sphi 0, %s345
      %s348 = sphi 0, %s347
      %s362 = sphi 0, %s348
      %s366 = sphi 0, %s366
      %s368 = sphi 0, %s366
      %s369 = sphi 0, %s368
      %s383 = sphi 0, %s369
      %s387 = sphi 0, %s387
      %s389 = sphi 0, %s387
      %s390 = sphi 0, %s389
      %s404 = sphi 0, %s390
      %s410 = sphi 0, %s412
      %s413 = sphi 0, %s410
      %s414 = sphi 0, %s413
      %s430 = sphi 0, %s414
    $region4: #{tpu_custom_call.1} parent=1 // loop_header_branch
      %34 = sbr.rel (%p32) target = $region8
    $region5: #{tpu_custom_call.1} parent=1 // loop_body
      %s36 = ssub.s32 %s31, 1
      %s37 = ssub.s32 %s31, 2
      %s44 = sadd.s32 1, %s39
      %p45 = scmp.ge.s32.totalorder %s44, 2
      %s46 = scalar_select %p45, 0, %s44
      %s47 = sadd.s32 1, %s38
      %s48 = scalar_select %p45, %s47, %s38
      %p49 = scmp.ge.s32.totalorder %s48, 2
      %s50 = scalar_select %p49, 0, %s48
      %s51 = ssub.s32 %s38, %s50
      %s52 = ssub.s32 %s39, %s46
      %s53 = sor.u32 %s51, %s52
      %p54 = scmp.eq.s32.totalorder %s53, 0
      %s56 = sadd.s32 %s55, 1
      %s57 = scalar_select %p54, %s55, %s56
      %p60 = pneg %p54
      %p61 = scmp.eq.s32.totalorder %s31, 3
      %p62 = por %p60, %p61
      %p63 = scmp.ne.s32.totalorder %s55, %s58
      %p64 = scmp.eq.s32.totalorder %s31, 0
      %p65 = por %p63, %p64
      %p66 = scmp.ne.s32.totalorder %s55, %s58
      %p67 = scmp.eq.s32.totalorder %s36, 3
      %p68 = por %p66, %p67
      %p69 = scmp.ne.s32.totalorder %s58, %s59
      %p70 = scmp.eq.s32.totalorder %s36, 0
      %p71 = por %p69, %p70
      %p72 = scmp.ne.s32.totalorder %s58, %s59
      %p73 = scmp.eq.s32.totalorder %s37, 3
      %p74 = por %p72, %p73
      %p76 = scmp.ne.s32.totalorder %s59, %s75
      %p77 = scmp.eq.s32.totalorder %s37, 0
      %p78 = por %p76, %p77
      %s79 = ssub.s32 %s38, %s50
      %s80 = ssub.s32 %s39, %s46
      %s81 = sor.u32 %s79, %s80
      %p82 = scmp.eq.s32.totalorder %s81, 0
      %s84 = sadd.s32 %s83, 1
      %s85 = scalar_select %p82, %s83, %s84
      %p88 = pneg %p82
      %p89 = scmp.eq.s32.totalorder %s31, 3
      %p90 = por %p88, %p89
      %p91 = scmp.ne.s32.totalorder %s83, %s86
      %p92 = scmp.eq.s32.totalorder %s31, 0
      %p93 = por %p91, %p92
      %p94 = scmp.ne.s32.totalorder %s83, %s86
      %p95 = scmp.eq.s32.totalorder %s36, 3
      %p96 = por %p94, %p95
      %p97 = scmp.ne.s32.totalorder %s86, %s87
      %p98 = scmp.eq.s32.totalorder %s36, 0
      %p99 = por %p97, %p98
      %p100 = scmp.ne.s32.totalorder %s86, %s87
      %p101 = scmp.eq.s32.totalorder %s37, 3
      %p102 = por %p100, %p101
      %p104 = scmp.ne.s32.totalorder %s87, %s103
      %p105 = scmp.eq.s32.totalorder %s37, 0
      %p106 = por %p104, %p105
      %s107 = ssub.s32 %s38, %s50
      %s108 = ssub.s32 %s39, %s46
      %s109 = sor.u32 %s107, %s108
      %p110 = scmp.eq.s32.totalorder %s109, 0
      %s112 = sadd.s32 %s111, 1
      %s113 = scalar_select %p110, %s111, %s112
      %p116 = pneg %p110
      %p117 = scmp.eq.s32.totalorder %s31, 3
      %p118 = por %p116, %p117
      %p119 = scmp.ne.s32.totalorder %s111, %s114
      %p120 = scmp.eq.s32.totalorder %s31, 0
      %p121 = por %p119, %p120
      %p122 = scmp.ne.s32.totalorder %s111, %s114
      %p123 = scmp.eq.s32.totalorder %s36, 3
      %p124 = por %p122, %p123
      %p125 = scmp.ne.s32.totalorder %s114, %s115
      %p126 = scmp.eq.s32.totalorder %s36, 0
      %p127 = por %p125, %p126
      %p128 = scmp.ne.s32.totalorder %s114, %s115
      %p129 = scmp.eq.s32.totalorder %s37, 3
      %p130 = por %p128, %p129
      %p132 = scmp.ne.s32.totalorder %s115, %s131
      %p133 = scmp.eq.s32.totalorder %s37, 0
      %p134 = por %p132, %p133
      %s136 = sadd.s32 %s135, 1
      %p139 = scmp.eq.s32.totalorder %s31, 3
      %p140 = scmp.ne.s32.totalorder %s135, %s137
      %p141 = scmp.eq.s32.totalorder %s31, 0
      %p142 = por %p140, %p141
      %p143 = scmp.ne.s32.totalorder %s135, %s137
      %p144 = scmp.eq.s32.totalorder %s36, 3
      %p145 = por %p143, %p144
      %p146 = scmp.ne.s32.totalorder %s137, %s138
      %p147 = scmp.eq.s32.totalorder %s36, 0
      %p148 = por %p146, %p147
      %p149 = scmp.ne.s32.totalorder %s137, %s138
      %p150 = scmp.eq.s32.totalorder %s37, 3
      %p151 = por %p149, %p150
      %p153 = scmp.ne.s32.totalorder %s138, %s152
      %p154 = scmp.eq.s32.totalorder %s37, 0
      %p155 = por %p153, %p154
      %s157 = sadd.s32 %s156, 1
      %p160 = scmp.eq.s32.totalorder %s31, 3
      %p161 = scmp.ne.s32.totalorder %s156, %s158
      %p162 = scmp.eq.s32.totalorder %s31, 0
      %p163 = por %p161, %p162
      %p164 = scmp.ne.s32.totalorder %s156, %s158
      %p165 = scmp.eq.s32.totalorder %s36, 3
      %p166 = por %p164, %p165
      %p167 = scmp.ne.s32.totalorder %s158, %s159
      %p168 = scmp.eq.s32.totalorder %s36, 0
      %p169 = por %p167, %p168
      %p170 = scmp.ne.s32.totalorder %s158, %s159
      %p171 = scmp.eq.s32.totalorder %s37, 3
      %p172 = por %p170, %p171
      %p174 = scmp.ne.s32.totalorder %s159, %s173
      %p175 = scmp.eq.s32.totalorder %s37, 0
      %p176 = por %p174, %p175
      %s178 = sadd.s32 %s177, 1
      %p181 = scmp.eq.s32.totalorder %s31, 3
      %p182 = scmp.ne.s32.totalorder %s177, %s179
      %p183 = scmp.eq.s32.totalorder %s31, 0
      %p184 = por %p182, %p183
      %p185 = scmp.ne.s32.totalorder %s177, %s179
      %p186 = scmp.eq.s32.totalorder %s36, 3
      %p187 = por %p185, %p186
      %p188 = scmp.ne.s32.totalorder %s179, %s180
      %p189 = scmp.eq.s32.totalorder %s36, 0
      %p190 = por %p188, %p189
      %p191 = scmp.ne.s32.totalorder %s179, %s180
      %p192 = scmp.eq.s32.totalorder %s37, 3
      %p193 = por %p191, %p192
      %p195 = scmp.ne.s32.totalorder %s180, %s194
      %p196 = scmp.eq.s32.totalorder %s37, 0
      %p197 = por %p195, %p196
      %s199 = sadd.s32 %s198, 1
      %p202 = scmp.eq.s32.totalorder %s31, 3
      %p203 = scmp.ne.s32.totalorder %s198, %s200
      %p204 = scmp.eq.s32.totalorder %s31, 0
      %p205 = por %p203, %p204
      %p206 = scmp.ne.s32.totalorder %s198, %s200
      %p207 = scmp.eq.s32.totalorder %s36, 3
      %p208 = por %p206, %p207
      %p209 = scmp.ne.s32.totalorder %s200, %s201
      %p210 = scmp.eq.s32.totalorder %s36, 0
      %p211 = por %p209, %p210
      %p212 = scmp.ne.s32.totalorder %s200, %s201
      %p213 = scmp.eq.s32.totalorder %s37, 3
      %p214 = por %p212, %p213
      %p216 = scmp.ne.s32.totalorder %s201, %s215
      %p217 = scmp.eq.s32.totalorder %s37, 0
      %p218 = por %p216, %p217
      %s220 = sadd.s32 %s219, 1
      %p223 = scmp.eq.s32.totalorder %s31, 3
      %p224 = scmp.ne.s32.totalorder %s219, %s221
      %p225 = scmp.eq.s32.totalorder %s31, 0
      %p226 = por %p224, %p225
      %p227 = scmp.ne.s32.totalorder %s219, %s221
      %p228 = scmp.eq.s32.totalorder %s36, 3
      %p229 = por %p227, %p228
      %p230 = scmp.ne.s32.totalorder %s221, %s222
      %p231 = scmp.eq.s32.totalorder %s36, 0
      %p232 = por %p230, %p231
      %p233 = scmp.ne.s32.totalorder %s221, %s222
      %p234 = scmp.eq.s32.totalorder %s37, 3
      %p235 = por %p233, %p234
      %p237 = scmp.ne.s32.totalorder %s222, %s236
      %p238 = scmp.eq.s32.totalorder %s37, 0
      %p239 = por %p237, %p238
      %s241 = sadd.s32 %s240, 1
      %p244 = scmp.eq.s32.totalorder %s31, 3
      %p245 = scmp.ne.s32.totalorder %s240, %s242
      %p246 = scmp.eq.s32.totalorder %s31, 0
      %p247 = por %p245, %p246
      %p248 = scmp.ne.s32.totalorder %s240, %s242
      %p249 = scmp.eq.s32.totalorder %s36, 3
      %p250 = por %p248, %p249
      %p251 = scmp.ne.s32.totalorder %s242, %s243
      %p252 = scmp.eq.s32.totalorder %s36, 0
      %p253 = por %p251, %p252
      %p254 = scmp.ne.s32.totalorder %s242, %s243
      %p255 = scmp.eq.s32.totalorder %s37, 3
      %p256 = por %p254, %p255
      %p258 = scmp.ne.s32.totalorder %s243, %s257
      %p259 = scmp.eq.s32.totalorder %s37, 0
      %p260 = por %p258, %p259
      %s262 = sadd.s32 %s261, 1
      %p265 = scmp.eq.s32.totalorder %s31, 3
      %p266 = scmp.ne.s32.totalorder %s261, %s263
      %p267 = scmp.eq.s32.totalorder %s31, 0
      %p268 = por %p266, %p267
      %p269 = scmp.ne.s32.totalorder %s261, %s263
      %p270 = scmp.eq.s32.totalorder %s36, 3
      %p271 = por %p269, %p270
      %p272 = scmp.ne.s32.totalorder %s263, %s264
      %p273 = scmp.eq.s32.totalorder %s36, 0
      %p274 = por %p272, %p273
      %p275 = scmp.ne.s32.totalorder %s263, %s264
      %p276 = scmp.eq.s32.totalorder %s37, 3
      %p277 = por %p275, %p276
      %p279 = scmp.ne.s32.totalorder %s264, %s278
      %p280 = scmp.eq.s32.totalorder %s37, 0
      %p281 = por %p279, %p280
      %s283 = sadd.s32 %s282, 1
      %p286 = scmp.eq.s32.totalorder %s31, 3
      %p287 = scmp.ne.s32.totalorder %s282, %s284
      %p288 = scmp.eq.s32.totalorder %s31, 0
      %p289 = por %p287, %p288
      %p290 = scmp.ne.s32.totalorder %s282, %s284
      %p291 = scmp.eq.s32.totalorder %s36, 3
      %p292 = por %p290, %p291
      %p293 = scmp.ne.s32.totalorder %s284, %s285
      %p294 = scmp.eq.s32.totalorder %s36, 0
      %p295 = por %p293, %p294
      %p296 = scmp.ne.s32.totalorder %s284, %s285
      %p297 = scmp.eq.s32.totalorder %s37, 3
      %p298 = por %p296, %p297
      %p300 = scmp.ne.s32.totalorder %s285, %s299
      %p301 = scmp.eq.s32.totalorder %s37, 0
      %p302 = por %p300, %p301
      %s304 = sadd.s32 %s303, 1
      %p307 = scmp.eq.s32.totalorder %s31, 3
      %p308 = scmp.ne.s32.totalorder %s303, %s305
      %p309 = scmp.eq.s32.totalorder %s31, 0
      %p310 = por %p308, %p309
      %p311 = scmp.ne.s32.totalorder %s303, %s305
      %p312 = scmp.eq.s32.totalorder %s36, 3
      %p313 = por %p311, %p312
      %p314 = scmp.ne.s32.totalorder %s305, %s306
      %p315 = scmp.eq.s32.totalorder %s36, 0
      %p316 = por %p314, %p315
      %p317 = scmp.ne.s32.totalorder %s305, %s306
      %p318 = scmp.eq.s32.totalorder %s37, 3
      %p319 = por %p317, %p318
      %p321 = scmp.ne.s32.totalorder %s306, %s320
      %p322 = scmp.eq.s32.totalorder %s37, 0
      %p323 = por %p321, %p322
      %s325 = sadd.s32 %s324, 1
      %p328 = scmp.eq.s32.totalorder %s31, 3
      %p329 = scmp.ne.s32.totalorder %s324, %s326
      %p330 = scmp.eq.s32.totalorder %s31, 0
      %p331 = por %p329, %p330
      %p332 = scmp.ne.s32.totalorder %s324, %s326
      %p333 = scmp.eq.s32.totalorder %s36, 3
      %p334 = por %p332, %p333
      %p335 = scmp.ne.s32.totalorder %s326, %s327
      %p336 = scmp.eq.s32.totalorder %s36, 0
      %p337 = por %p335, %p336
      %p338 = scmp.ne.s32.totalorder %s326, %s327
      %p339 = scmp.eq.s32.totalorder %s37, 3
      %p340 = por %p338, %p339
      %p342 = scmp.ne.s32.totalorder %s327, %s341
      %p343 = scmp.eq.s32.totalorder %s37, 0
      %p344 = por %p342, %p343
      %s346 = sadd.s32 %s345, 1
      %p349 = scmp.eq.s32.totalorder %s31, 3
      %p350 = scmp.ne.s32.totalorder %s345, %s347
      %p351 = scmp.eq.s32.totalorder %s31, 0
      %p352 = por %p350, %p351
      %p353 = scmp.ne.s32.totalorder %s345, %s347
      %p354 = scmp.eq.s32.totalorder %s36, 3
      %p355 = por %p353, %p354
      %p356 = scmp.ne.s32.totalorder %s347, %s348
      %p357 = scmp.eq.s32.totalorder %s36, 0
      %p358 = por %p356, %p357
      %p359 = scmp.ne.s32.totalorder %s347, %s348
      %p360 = scmp.eq.s32.totalorder %s37, 3
      %p361 = por %p359, %p360
      %p363 = scmp.ne.s32.totalorder %s348, %s362
      %p364 = scmp.eq.s32.totalorder %s37, 0
      %p365 = por %p363, %p364
      %s367 = sadd.s32 %s366, 1
      %p370 = scmp.eq.s32.totalorder %s31, 3
      %p371 = scmp.ne.s32.totalorder %s366, %s368
      %p372 = scmp.eq.s32.totalorder %s31, 0
      %p373 = por %p371, %p372
      %p374 = scmp.ne.s32.totalorder %s366, %s368
      %p375 = scmp.eq.s32.totalorder %s36, 3
      %p376 = por %p374, %p375
      %p377 = scmp.ne.s32.totalorder %s368, %s369
      %p378 = scmp.eq.s32.totalorder %s36, 0
      %p379 = por %p377, %p378
      %p380 = scmp.ne.s32.totalorder %s368, %s369
      %p381 = scmp.eq.s32.totalorder %s37, 3
      %p382 = por %p380, %p381
      %p384 = scmp.ne.s32.totalorder %s369, %s383
      %p385 = scmp.eq.s32.totalorder %s37, 0
      %p386 = por %p384, %p385
      %s388 = sadd.s32 %s387, 1
      %p391 = scmp.eq.s32.totalorder %s31, 3
      %p392 = scmp.ne.s32.totalorder %s387, %s389
      %p393 = scmp.eq.s32.totalorder %s31, 0
      %p394 = por %p392, %p393
      %p395 = scmp.ne.s32.totalorder %s387, %s389
      %p396 = scmp.eq.s32.totalorder %s36, 3
      %p397 = por %p395, %p396
      %p398 = scmp.ne.s32.totalorder %s389, %s390
      %p399 = scmp.eq.s32.totalorder %s36, 0
      %p400 = por %p398, %p399
      %p401 = scmp.ne.s32.totalorder %s389, %s390
      %p402 = scmp.eq.s32.totalorder %s37, 3
      %p403 = por %p401, %p402
      %p405 = scmp.ne.s32.totalorder %s390, %s404
      %p406 = scmp.eq.s32.totalorder %s37, 0
      %p407 = por %p405, %p406
      %s408 = ssub.s32 %s38, %s50
      %p409 = scmp.eq.s32.totalorder %s408, 0
      %s411 = sadd.s32 %s410, 1
      %s412 = scalar_select %p409, %s410, %s411
      %p415 = pneg %p409
      %p416 = scmp.eq.s32.totalorder %s31, 3
      %p417 = por %p415, %p416
      %p418 = scmp.ne.s32.totalorder %s410, %s413
      %p419 = scmp.eq.s32.totalorder %s31, 0
      %p420 = por %p418, %p419
      %p421 = scmp.ne.s32.totalorder %s410, %s413
      %p422 = scmp.eq.s32.totalorder %s36, 3
      %p423 = por %p421, %p422
      %p424 = scmp.ne.s32.totalorder %s413, %s414
      %p425 = scmp.eq.s32.totalorder %s36, 0
      %p426 = por %p424, %p425
      %p427 = scmp.ne.s32.totalorder %s413, %s414
      %p428 = scmp.eq.s32.totalorder %s37, 3
      %p429 = por %p427, %p428
      %p431 = scmp.ne.s32.totalorder %s414, %s430
      %p432 = scmp.eq.s32.totalorder %s37, 0
      %p433 = por %p431, %p432
      %p434 = scmp.le.s32.totalorder 1, %s31
      %p435 = scmp.lt.s32.totalorder %s31, 5
      %p436 = pnand %p434, %p435
      %p437 = pneg %p436
      // Predicated region
      $region9: #{tpu_custom_call.1} parent=5 // pred_check
        _
      $region10: #{tpu_custom_call.1} parent=5 // pred_check_branch
        %439 = sbr.rel (%p436) target = $region12
      $region11: #{tpu_custom_call.1} parent=5 // pred_region
        %s440 = ssub.s32 %s31, 1
        // Predicated region
        $region13: #{tpu_custom_call.1} parent=11 // pred_check
          %p441 = pneg %p148
        $region14: #{tpu_custom_call.1} parent=11 // pred_check_branch
          %443 = sbr.rel (%p441) target = $region16
        $region15: #{tpu_custom_call.1} parent=11 // pred_region
          %s445 = ssub.s32 256, 256
          %446 = vsyncadd [#allocation7], %s445
          %s447 = sshll.u32 [#allocation6], 4
          %s448 = int_to_ptr.vmem [resolvable:$true] %s447
          %453 = dma.hbm_to_vmem [thread:$0]  %s3, 256, %s448, [#allocation7], 64, 64, 4
        $region16: #{tpu_custom_call.1} parent=11 // pred_fallthru
          _
        // Predicated region
        $region17: #{tpu_custom_call.1} parent=11 // pred_check
          %p454 = pneg %p169
        $region18: #{tpu_custom_call.1} parent=11 // pred_check_branch
          %456 = sbr.rel (%p454) target = $region20
        $region19: #{tpu_custom_call.1} parent=11 // pred_region
          %s458 = ssub.s32 16, 16
          %459 = vsyncadd [#allocation7], %s458
          %s461 = sshll.u32 [#allocation8], 4
          %s462 = int_to_ptr.vmem [resolvable:$true] %s461
          %464 = dma.hbm_to_vmem [thread:$0]  %s4, 16, %s462, [#allocation7]
        $region20: #{tpu_custom_call.1} parent=11 // pred_fallthru
          _
        // Predicated region
        $region21: #{tpu_custom_call.1} parent=11 // pred_check
          %p465 = pneg %p190
        $region22: #{tpu_custom_call.1} parent=11 // pred_check_branch
          %467 = sbr.rel (%p465) target = $region24
        $region23: #{tpu_custom_call.1} parent=11 // pred_region
          %s469 = ssub.s32 16, 16
          %470 = vsyncadd [#allocation10], %s469
          %s472 = sshll.u32 [#allocation9], 4
          %s473 = int_to_ptr.vmem [resolvable:$true] %s472
          %475 = dma.hbm_to_vmem [thread:$0]  %s5, 16, %s473, [#allocation10]
        $region24: #{tpu_custom_call.1} parent=11 // pred_fallthru
          _
        // Predicated region
        $region25: #{tpu_custom_call.1} parent=11 // pred_check
          %p476 = pneg %p211
        $region26: #{tpu_custom_call.1} parent=11 // pred_check_branch
          %478 = sbr.rel (%p476) target = $region28
        $region27: #{tpu_custom_call.1} parent=11 // pred_region
          _
        $region28: #{tpu_custom_call.1} parent=11 // pred_fallthru
          _
        // Predicated region
        $region29: #{tpu_custom_call.1} parent=11 // pred_check
          %p479 = pneg %p232
        $region30: #{tpu_custom_call.1} parent=11 // pred_check_branch
          %481 = sbr.rel (%p479) target = $region32
        $region31: #{tpu_custom_call.1} parent=11 // pred_region
          _
        $region32: #{tpu_custom_call.1} parent=11 // pred_fallthru
          _
        // Predicated region
        $region33: #{tpu_custom_call.1} parent=11 // pred_check
          %p482 = pneg %p253
        $region34: #{tpu_custom_call.1} parent=11 // pred_check_branch
          %484 = sbr.rel (%p482) target = $region36
        $region35: #{tpu_custom_call.1} parent=11 // pred_region
          _
        $region36: #{tpu_custom_call.1} parent=11 // pred_fallthru
          _
        // Predicated region
        $region37: #{tpu_custom_call.1} parent=11 // pred_check
          %p485 = pneg %p274
        $region38: #{tpu_custom_call.1} parent=11 // pred_check_branch
          %487 = sbr.rel (%p485) target = $region40
        $region39: #{tpu_custom_call.1} parent=11 // pred_region
          %s489 = ssub.s32 48, 48
          %490 = vsyncadd [#allocation10], %s489
          %s491 = sshll.u32 [#allocation11], 4
          %s492 = int_to_ptr.vmem [resolvable:$true] %s491
          %497 = dma.hbm_to_vmem [thread:$0]  %s9, 48, %s492, [#allocation10], 16, 16, 1
        $region40: #{tpu_custom_call.1} parent=11 // pred_fallthru
          _
        // Predicated region
        $region41: #{tpu_custom_call.1} parent=11 // pred_check
          %p498 = pneg %p295
        $region42: #{tpu_custom_call.1} parent=11 // pred_check_branch
          %500 = sbr.rel (%p498) target = $region44
        $region43: #{tpu_custom_call.1} parent=11 // pred_region
          _
        $region44: #{tpu_custom_call.1} parent=11 // pred_fallthru
          _
        // Predicated region
        $region45: #{tpu_custom_call.1} parent=11 // pred_check
          %p501 = pneg %p316
        $region46: #{tpu_custom_call.1} parent=11 // pred_check_branch
          %503 = sbr.rel (%p501) target = $region48
        $region47: #{tpu_custom_call.1} parent=11 // pred_region
          %s505 = ssub.s32 48, 48
          %506 = vsyncadd [#allocation13], %s505
          %s507 = sshll.u32 [#allocation12], 4
          %s508 = int_to_ptr.vmem [resolvable:$true] %s507
          %513 = dma.hbm_to_vmem [thread:$0]  %s11, 48, %s508, [#allocation13], 16, 16, 1
        $region48: #{tpu_custom_call.1} parent=11 // pred_fallthru
          _
        // Predicated region
        $region49: #{tpu_custom_call.1} parent=11 // pred_check
          %p514 = pneg %p337
        $region50: #{tpu_custom_call.1} parent=11 // pred_check_branch
          %516 = sbr.rel (%p514) target = $region52
        $region51: #{tpu_custom_call.1} parent=11 // pred_region
          _
        $region52: #{tpu_custom_call.1} parent=11 // pred_fallthru
          _
        // Predicated region
        $region53: #{tpu_custom_call.1} parent=11 // pred_check
          %p517 = pneg %p358
        $region54: #{tpu_custom_call.1} parent=11 // pred_check_branch
          %519 = sbr.rel (%p517) target = $region56
        $region55: #{tpu_custom_call.1} parent=11 // pred_region
          _
        $region56: #{tpu_custom_call.1} parent=11 // pred_fallthru
          _
        // Predicated region
        $region57: #{tpu_custom_call.1} parent=11 // pred_check
          %p520 = pneg %p379
        $region58: #{tpu_custom_call.1} parent=11 // pred_check_branch
          %522 = sbr.rel (%p520) target = $region60
        $region59: #{tpu_custom_call.1} parent=11 // pred_region
          _
        $region60: #{tpu_custom_call.1} parent=11 // pred_fallthru
          _
        // Predicated region
        $region61: #{tpu_custom_call.1} parent=11 // pred_check
          %p523 = pneg %p400
        $region62: #{tpu_custom_call.1} parent=11 // pred_check_branch
          %525 = sbr.rel (%p523) target = $region64
        $region63: #{tpu_custom_call.1} parent=11 // pred_region
          _
        $region64: #{tpu_custom_call.1} parent=11 // pred_fallthru
          _
      $region12: #{tpu_custom_call.1} parent=5 // pred_fallthru
        _
      %p526 = scmp.lt.s32.totalorder %s31, 4
      // Predicated region
      $region65: #{tpu_custom_call.1} parent=5 // pred_check
        %p527 = pneg %p526
      $region66: #{tpu_custom_call.1} parent=5 // pred_check_branch
        %529 = sbr.rel (%p527) target = $region68
      $region67: #{tpu_custom_call.1} parent=5 // pred_region
        // Predicated region
        $region69: #{tpu_custom_call.1} parent=67 // pred_check
          %p530 = pneg %p65
        $region70: #{tpu_custom_call.1} parent=67 // pred_check_branch
          %532 = sbr.rel (%p530) target = $region72
        $region71: #{tpu_custom_call.1} parent=67 // pred_region
          %p533 = scmp.lt.s32.totalorder %s38, 1
          %s534 = scalar_select %p533, %s38, 1
          %p535 = scmp.lt.s32.totalorder %s39, 1
          %s536 = scalar_select %p535, %s39, 1
          %s537 = smul.addr %s534, 2
          %s538 = sadd.s32 %s536, %s537
          %s539 = smul.addr %s538, 4
          %s540 = scalar_lea.vmem %s0, %s539
        $region72: #{tpu_custom_call.1} parent=67 // pred_fallthru
          _
        // Predicated region
        $region73: #{tpu_custom_call.1} parent=67 // pred_check
          %p541 = pneg %p93
        $region74: #{tpu_custom_call.1} parent=67 // pred_check_branch
          %543 = sbr.rel (%p541) target = $region76
        $region75: #{tpu_custom_call.1} parent=67 // pred_region
          %p544 = scmp.lt.s32.totalorder %s38, 1
          %s545 = scalar_select %p544, %s38, 1
          %p546 = scmp.lt.s32.totalorder %s39, 1
          %s547 = scalar_select %p546, %s39, 1
          %s548 = smul.addr %s545, 2
          %s549 = sadd.s32 %s547, %s548
          %s550 = smul.addr %s549, 8
          %s551 = scalar_lea.vmem %s1, %s550
        $region76: #{tpu_custom_call.1} parent=67 // pred_fallthru
          _
        // Predicated region
        $region77: #{tpu_custom_call.1} parent=67 // pred_check
          %p552 = pneg %p121
        $region78: #{tpu_custom_call.1} parent=67 // pred_check_branch
          %554 = sbr.rel (%p552) target = $region80
        $region79: #{tpu_custom_call.1} parent=67 // pred_region
          %s555 = sand.u32 %s111, 1
          %s556 = scalar_lea.sflag [#allocation4], %s555
          %s557 = sand.u32 %s111, 1
          %s558 = scalar_lea.vmem [#allocation3], %s557
          %s560 = ssub.s32 16, 16
          %561 = vsyncadd %s556, %s560
          %s562 = smul.addr %s38, 2
          %s563 = sadd.s32 %s39, %s562
          %s564 = smul.addr %s563, 16
          %s565 = scalar_lea.hbm %s2, %s564
          %s567 = sshll.u32 %s558, 4
          %s568 = int_to_ptr.vmem [resolvable:$true] %s567
          %570 = dma.hbm_to_vmem [thread:$0]  %s565, 16, %s568, %s556
        $region80: #{tpu_custom_call.1} parent=67 // pred_fallthru
          _
      $region68: #{tpu_custom_call.1} parent=5 // pred_fallthru
        _
      %p571 = scmp.le.s32.totalorder 1, %s31
      %p572 = scmp.lt.s32.totalorder %s31, 5
      %p573 = pnand %p571, %p572
      %p574 = pneg %p573
      // Predicated region
      $region81: #{tpu_custom_call.1} parent=5 // pred_check
        _
      $region82: #{tpu_custom_call.1} parent=5 // pred_check_branch
        %576 = sbr.rel (%p573) target = $region84
      $region83: #{tpu_custom_call.1} parent=5 // pred_region
        %s577 = ssub.s32 %s31, 1
        %s578 = sand.u32 %s114, 1
        %s579 = scalar_lea.sflag [#allocation4], %s578
        %s580 = sand.u32 %s114, 1
        %s581 = scalar_lea.vmem [#allocation3], %s580
        // Predicated region
        $region85: #{tpu_custom_call.1} parent=83 // pred_check
          %p582 = pneg %p127
        $region86: #{tpu_custom_call.1} parent=83 // pred_check_branch
          %584 = sbr.rel (%p582) target = $region88
        $region87: #{tpu_custom_call.1} parent=83 // pred_region
          %585 = dma.done %s579, 16
        $region88: #{tpu_custom_call.1} parent=83 // pred_fallthru
          _
        // Predicated region
        $region89: #{tpu_custom_call.1} parent=83 // pred_check
          %p586 = pneg %p148
        $region90: #{tpu_custom_call.1} parent=83 // pred_check_branch
          %588 = sbr.rel (%p586) target = $region92
        $region91: #{tpu_custom_call.1} parent=83 // pred_region
          %589 = dma.done [#allocation7], 256
        $region92: #{tpu_custom_call.1} parent=83 // pred_fallthru
          _
        // Predicated region
        $region93: #{tpu_custom_call.1} parent=83 // pred_check
          %p590 = pneg %p169
        $region94: #{tpu_custom_call.1} parent=83 // pred_check_branch
          %592 = sbr.rel (%p590) target = $region96
        $region95: #{tpu_custom_call.1} parent=83 // pred_region
          %593 = dma.done [#allocation7], 16
        $region96: #{tpu_custom_call.1} parent=83 // pred_fallthru
          _
        // Predicated region
        $region97: #{tpu_custom_call.1} parent=83 // pred_check
          %p594 = pneg %p190
        $region98: #{tpu_custom_call.1} parent=83 // pred_check_branch
          %596 = sbr.rel (%p594) target = $region100
        $region99: #{tpu_custom_call.1} parent=83 // pred_region
          %597 = dma.done [#allocation10], 16
        $region100: #{tpu_custom_call.1} parent=83 // pred_fallthru
          _
        // Predicated region
        $region101: #{tpu_custom_call.1} parent=83 // pred_check
          %p598 = pneg %p274
        $region102: #{tpu_custom_call.1} parent=83 // pred_check_branch
          %600 = sbr.rel (%p598) target = $region104
        $region103: #{tpu_custom_call.1} parent=83 // pred_region
          %601 = dma.done [#allocation10], 48
        $region104: #{tpu_custom_call.1} parent=83 // pred_fallthru
          _
        // Predicated region
        $region105: #{tpu_custom_call.1} parent=83 // pred_check
          %p602 = pneg %p316
        $region106: #{tpu_custom_call.1} parent=83 // pred_check_branch
          %604 = sbr.rel (%p602) target = $region108
        $region107: #{tpu_custom_call.1} parent=83 // pred_region
          %605 = dma.done [#allocation13], 48
        $region108: #{tpu_custom_call.1} parent=83 // pred_fallthru
          _
        %p606 = scmp.lt.s32.totalorder %s40, 1
        %s607 = scalar_select %p606, %s40, 1
        %p608 = scmp.lt.s32.totalorder %s41, 1
        %s609 = scalar_select %p608, %s41, 1
        %s610 = smul.addr %s607, 2
        %s611 = sadd.s32 %s609, %s610
        %s612 = smul.addr %s611, 4
        %s613 = scalar_lea.vmem %s0, %s612
        %p614 = pneg %p71
        %p615 = pneg %p68
        %p616 = scmp.lt.s32.totalorder %s40, 1
        %s617 = scalar_select %p616, %s40, 1
        %p618 = scmp.lt.s32.totalorder %s41, 1
        %s619 = scalar_select %p618, %s41, 1
        %s620 = smul.addr %s617, 2
        %s621 = sadd.s32 %s619, %s620
        %s622 = smul.addr %s621, 8
        %s623 = scalar_lea.vmem %s1, %s622
        %p624 = pneg %p99
        %p625 = pneg %p96
        %s626 = sand.u32 %s114, 1
        %s627 = scalar_lea.sflag [#allocation4], %s626
        %s628 = sand.u32 %s114, 1
        %s629 = scalar_lea.vmem [#allocation3], %s628
        %p630 = pneg %p127
        %p631 = pneg %p124
        %p632 = pneg %p148
        %p633 = pneg %p145
        %p634 = pneg %p169
        %p635 = pneg %p166
        %p636 = pneg %p190
        %p637 = pneg %p187
        %p638 = pneg %p211
        %p639 = pneg %p208
        %p640 = pneg %p232
        %p641 = pneg %p229
        %p642 = pneg %p253
        %p643 = pneg %p250
        %p644 = pneg %p274
        %p645 = pneg %p271
        %p646 = pneg %p295
        %p647 = pneg %p292
        %p648 = pneg %p316
        %p649 = pneg %p313
        %p650 = pneg %p337
        %p651 = pneg %p334
        %p652 = pneg %p358
        %p653 = pneg %p355
        %p654 = pneg %p379
        %p655 = pneg %p376
        %p656 = pneg %p400
        %p657 = pneg %p397
        %p658 = pneg %p426
        %p659 = pneg %p423
        %s660 = sand.u32 %s413, 1
        %s661 = scalar_lea.sflag [#allocation5], %s660
        %s662 = sand.u32 %s413, 1
        %s663 = scalar_lea.vmem [#allocation14], %s662
        %p664 = scmp.lt.s32.totalorder %s40, 1
        %s665 = scalar_select %p664, %s40, 1
        %p666 = scmp.lt.s32.totalorder %s41, 1
        %s667 = scalar_select %p666, %s41, 1
        %s668 = smul.addr %s665, 2
        %s669 = sadd.s32 %s667, %s668
        %s670 = smul.addr %s669, 4
        %s671 = scalar_lea.vmem %s0, %s670
        %p672 = scmp.lt.s32.totalorder %s40, 1
        %s673 = scalar_select %p672, %s40, 1
        %p674 = scmp.lt.s32.totalorder %s41, 1
        %s675 = scalar_select %p674, %s41, 1
        %s676 = smul.addr %s673, 2
        %s677 = sadd.s32 %s675, %s676
        %s678 = smul.addr %s677, 8
        %s679 = scalar_lea.vmem %s1, %s678
        %p681 = scmp.eq.s32.totalorder %s41, 0
        // Predicated region
        $region109: #{tpu_custom_call.1} parent=83 // pred_check
          %p682 = pneg %p681
        $region110: #{tpu_custom_call.1} parent=83 // pred_check_branch
          %684 = sbr.rel (%p682) target = $region112
        $region111: #{tpu_custom_call.1} parent=83 // pred_region
          %vm685 = vcmask 253952
          %686 = vst.msk [vmem:[%s663] sm:$0x1] %vm685, 0.0
          %vm687 = vcmask 0
          %688 = vst.msk [vmem:[#allocation2] sm:$0x1] %vm687, 0.0
        $region112: #{tpu_custom_call.1} parent=83 // pred_fallthru
          _
        %v689 = vld [vmem:[%s671] sm:$0xf]
        %v690 = vld [vmem:[%s679] sm:$0xff]
        %v691 = vld [vmem:[%s581] sm:$0x1]
        %v692 = vld [vmem:[#allocation6] sm:$0xf]
        %v693 = vld [vmem:[#allocation6 + $0x4] sm:$0xf]
        %v694 = vld [vmem:[#allocation6 + $0x8] sm:$0xf]
        %v695 = vld [vmem:[#allocation6 + $0xc] sm:$0xf]
        %v700 = vunpack.c.l.b16 %v692
        %v701 = vunpack.c.l.b16 %v693
        %v702 = vunpack.c.l.b16 %v694
        %v703 = vunpack.c.l.b16 %v695
        %v704 = vpack.c.b16 %v701, %v700
        %v705 = vpack.c.b16 %v703, %v702
        %vm708 = vcmask 261120
        %v710 = vsel %vm708, %v689, 0
        %712 = vmatprep.subr.bf16.mxu0 0
        %713 = vmatpush1.bf16.msra.mxu0 %v704
        %714 = vmatprep.subr.bf16.mxu0 0
        %715 = vmatpush1.bf16.msra.mxu0 %v705
        %716 = vmatprep.subr.bf16.mxu0 0
        %717 = vmatpush1.bf16.msra.mxu0 0
        %718 = vmatprep.subr.bf16.mxu0 0
        %719 = vmatpush1.bf16.msra.mxu0 0
        %720 = vmatprep.subr.bf16.mxu0 0
        %721 = vmatpush1.bf16.msra.mxu0 0
        %722 = vmatprep.subr.bf16.mxu0 0
        %723 = vmatpush1.bf16.msra.mxu0 0
        %724 = vmatprep.subr.bf16.mxu0 0
        %725 = vmatpush1.bf16.msra.mxu0 0
        %726 = vmatprep.subr.bf16.mxu0 0
        %727 = vmatpush1.bf16.msra.mxu0 0
        %728 = vmatprep.subr.bf16.mxu0 0
        %729 = vmatpush1.bf16.msra.mxu0 0
        %730 = vmatprep.subr.bf16.mxu0 0
        %731 = vmatpush1.bf16.msra.mxu0 0
        %732 = vmatprep.subr.bf16.mxu0 0
        %733 = vmatpush1.bf16.msra.mxu0 0
        %734 = vmatprep.subr.bf16.mxu0 0
        %735 = vmatpush1.bf16.msra.mxu0 0
        %736 = vmatprep.subr.bf16.mxu0 0
        %737 = vmatpush1.bf16.msra.mxu0 0
        %738 = vmatprep.subr.bf16.mxu0 0
        %739 = vmatpush1.bf16.msra.mxu0 0
        %740 = vmatprep.subr.bf16.mxu0 0
        %741 = vmatpush1.bf16.msra.mxu0 0
        %742 = vmatprep.subr.bf16.mxu0 0
        %743 = vmatpush1.bf16.msra.mxu0 0
        %744 = vmatprep.mubr.bf16.mxu0 0
        %745 = vmatmul.mubr.bf16.gmra.mrb[0].mxu0 %v710
        %v746 = vpop.f32.mrb[0].mxu0
        %v747 = vadd.f32 0.0, %v746
        %v748 = vpop.f32.mrb[0].mxu0
        %v749 = vpop.f32.mrb[0].mxu0
        %v750 = vpop.f32.mrb[0].mxu0
        %751 = vdwg.mxu0
        %v752 = vld [vmem:[#allocation8] sm:$0x1]
        %754 = vset.pattern.permute.xlu0 0
        %755 = vperm.xlu0 %754, %v690
        %v756 = vpop.permute.xlu0 %755
        %v759 = vlaneseq
        %v760 = vshrl.u32 %v759, 7
        %v761 = vsub.s32 0, %v760
        %v762 = vrot.slane %v752, %v761
        %v764 = vmul.f32 %v756, %v762
        %v765 = vadd.f32 %v747, %v764
        %v766 = vld [vmem:[#allocation9] sm:$0x1]
        %v768 = vlaneseq
        %v769 = vshrl.u32 %v768, 7
        %v770 = vsub.s32 0, %v769
        %v771 = vrot.slane %v766, %v770
        %v773 = vadd.f32 %v765, %v771
        %vm774 = vcmask 57344
        %v775 = vsel %vm774, %v691, 0.0
        %776 = vadd.xlane.f32.xlu0 %v775
        %v777 = vpop.xlane.xlu0 %776
        %vm778 = vcmp.ge.f32.partialorder %v777, 8.0
        %v779 = vsel %vm778, 1, 0
        %v780 = vlaneseq
        %v781 = vshrl.u32 %v780, 7
        %v782 = vsub.s32 0, %v781
        %v783 = vrot.slane %v779, %v782
        %vm784 = vcmp.eq.s32.totalorder %v783, 1
        %v785 = vsel %vm784, 0.0, %v773
        %v786 = vmul.f32 %v691, -1e+09
        loop: start=0, step=1, limit=3
        $region113: #{tpu_custom_call.1} parent=83 // loop_pre_header
          _
        $region114: #{tpu_custom_call.1} parent=83 // loop_header
          %s788 = sphi 0, %s792
          %p789 = scmp.ge.s32.totalorder %s788, 3
          %v793 = vphi %v785, %v1615
        $region115: #{tpu_custom_call.1} parent=83 // loop_header_branch
          %791 = sbr.rel (%p789) target = $region119
        $region116: #{tpu_custom_call.1} parent=83 // loop_body
          %s794 = smul.u32 %s788, 4
          %s795 = smul.addr %s794, 4
          %s796 = scalar_lea.vmem %s6, %s795
          %v797 = vld [vmem:[%s796] sm:$0xf]
          %v798 = vld [vmem:[%s796 + $0x4] sm:$0xf]
          %v799 = vld [vmem:[%s796 + $0x8] sm:$0xf]
          %v800 = vld [vmem:[%s796 + $0xc] sm:$0xf]
          %v801 = vpack.c.bf16 %v793, %v793
          %v806 = vunpack.c.l.b16 %v797
          %v807 = vunpack.c.l.b16 %v798
          %v808 = vunpack.c.l.b16 %v799
          %v809 = vunpack.c.l.b16 %v800
          %v810 = vpack.c.b16 %v807, %v806
          %v811 = vpack.c.b16 %v809, %v808
          %v815 = vsel %vm708, %v801, 0
          %817 = vmatprep.subr.bf16.mxu0 0
          %818 = vmatpush1.bf16.msra.mxu0 %v810
          %819 = vmatprep.subr.bf16.mxu0 0
          %820 = vmatpush1.bf16.msra.mxu0 %v811
          %821 = vmatprep.subr.bf16.mxu0 0
          %822 = vmatpush1.bf16.msra.mxu0 0
          %823 = vmatprep.subr.bf16.mxu0 0
          %824 = vmatpush1.bf16.msra.mxu0 0
          %825 = vmatprep.subr.bf16.mxu0 0
          %826 = vmatpush1.bf16.msra.mxu0 0
          %827 = vmatprep.subr.bf16.mxu0 0
          %828 = vmatpush1.bf16.msra.mxu0 0
          %829 = vmatprep.subr.bf16.mxu0 0
          %830 = vmatpush1.bf16.msra.mxu0 0
          %831 = vmatprep.subr.bf16.mxu0 0
          %832 = vmatpush1.bf16.msra.mxu0 0
          %833 = vmatprep.subr.bf16.mxu0 0
          %834 = vmatpush1.bf16.msra.mxu0 0
          %835 = vmatprep.subr.bf16.mxu0 0
          %836 = vmatpush1.bf16.msra.mxu0 0
          %837 = vmatprep.subr.bf16.mxu0 0
          %838 = vmatpush1.bf16.msra.mxu0 0
          %839 = vmatprep.subr.bf16.mxu0 0
          %840 = vmatpush1.bf16.msra.mxu0 0
          %841 = vmatprep.subr.bf16.mxu0 0
          %842 = vmatpush1.bf16.msra.mxu0 0
          %843 = vmatprep.subr.bf16.mxu0 0
          %844 = vmatpush1.bf16.msra.mxu0 0
          %845 = vmatprep.subr.bf16.mxu0 0
          %846 = vmatpush1.bf16.msra.mxu0 0
          %847 = vmatprep.subr.bf16.mxu0 0
          %848 = vmatpush1.bf16.msra.mxu0 0
          %849 = vmatprep.mubr.bf16.mxu0 0
          %850 = vmatmul.mubr.bf16.gmra.mrb[0].mxu0 %v815
          %v851 = vpop.f32.mrb[0].mxu0
          %v852 = vadd.f32 0.0, %v851
          %v853 = vpop.f32.mrb[0].mxu0
          %v854 = vpop.f32.mrb[0].mxu0
          %v855 = vpop.f32.mrb[0].mxu0
          %856 = vdwg.mxu0
          %s857 = scalar_lea.vmem %s7, %s788
          %v858 = vld [vmem:[%s857] sm:$0x1]
          %v860 = vlaneseq
          %v861 = vshrl.u32 %v860, 7
          %v862 = vsub.s32 0, %v861
          %v863 = vrot.slane %v858, %v862
          %v865 = vadd.f32 %v852, %v863
          %v866 = vmul.f32 %v865, 0.35355338
          %v867 = vpack.c.bf16 %v866, %v866
          %v868 = vpack.c.bf16 %v865, %v865
          %v870 = vlaneseq
          %v871 = vshrl.u32 %v870, 7
          %v872 = vsub.s32 0, %v871
          %v873 = vrot.slane %v786, %v872
          %876 = vrot.lane.b32.xlu0 %v868, 96
          %v877 = vpop.permute.xlu0 %876
          %vm878 = vcmask 64512
          %v880 = vsel %vm878, %v867, 0
          %v883 = vsel %vm878, %v877, 0
          %885 = vmatprep.subr.bf16.mxu0 0
          %886 = vmatpush1.bf16.xpose.msra.mxu0 %v883
          %887 = vmatprep.subr.bf16.mxu0 0
          %888 = vmatpush1.bf16.xpose.msra.mxu0 0
          %889 = vmatprep.subr.bf16.mxu0 0
          %890 = vmatpush1.bf16.xpose.msra.mxu0 0
          %891 = vmatprep.subr.bf16.mxu0 0
          %892 = vmatpush1.bf16.xpose.msra.mxu0 0
          %893 = vmatprep.subr.bf16.mxu0 0
          %894 = vmatpush1.bf16.xpose.msra.mxu0 0
          %895 = vmatprep.subr.bf16.mxu0 0
          %896 = vmatpush1.bf16.xpose.msra.mxu0 0
          %897 = vmatprep.subr.bf16.mxu0 0
          %898 = vmatpush1.bf16.xpose.msra.mxu0 0
          %899 = vmatprep.subr.bf16.mxu0 0
          %900 = vmatpush1.bf16.xpose.msra.mxu0 0
          %901 = vmatprep.subr.bf16.mxu0 0
          %902 = vmatpush1.bf16.xpose.msra.mxu0 0
          %903 = vmatprep.subr.bf16.mxu0 0
          %904 = vmatpush1.bf16.xpose.msra.mxu0 0
          %905 = vmatprep.subr.bf16.mxu0 0
          %906 = vmatpush1.bf16.xpose.msra.mxu0 0
          %907 = vmatprep.subr.bf16.mxu0 0
          %908 = vmatpush1.bf16.xpose.msra.mxu0 0
          %909 = vmatprep.subr.bf16.mxu0 0
          %910 = vmatpush1.bf16.xpose.msra.mxu0 0
          %911 = vmatprep.subr.bf16.mxu0 0
          %912 = vmatpush1.bf16.xpose.msra.mxu0 0
          %913 = vmatprep.subr.bf16.mxu0 0
          %914 = vmatpush1.bf16.xpose.msra.mxu0 0
          %915 = vmatprep.subr.bf16.mxu0 0
          %916 = vmatpush1.bf16.xpose.msra.mxu0 0
          %917 = vmatprep.mubr.bf16.mxu0 0
          %918 = vmatmul.mubr.bf16.gmra.mrb[0].mxu0 %v880
          %v919 = vpop.f32.mrb[0].mxu0
          %v920 = vadd.f32 %v873, %v919
          %v921 = vpop.f32.mrb[0].mxu0
          %v922 = vpop.f32.mrb[0].mxu0
          %v923 = vpop.f32.mrb[0].mxu0
          %924 = vdwg.mxu0
          %v925 = vsel %vm878, %v920, -inf
          %926 = vmax.xlane.f32.xlu0 %v925
          %v927 = vpop.xlane.xlu0 %926
          %v928 = vsub.f32 %v920, %v927
          %v929 = vmul.f32 %v928, 1.442695
          %v930 = vpow.pop %v929
          %v931 = vsel %vm878, %v930, 0.0
          %932 = vadd.xlane.f32.xlu0 %v931
          %v933 = vpop.xlane.xlu0 %932
          %v934 = vrcp.pop %v933
          %v935 = vmul.f32 %v930, %v934
          %v936 = vpack.c.bf16 %v935, %v935
          %937 = vrot.lane.b32.xlu0 %v868, 64
          %v938 = vpop.permute.xlu0 %937
          %v940 = vsel %vm878, %v936, 0
          %vm942 = vcmask 1043456
          %v944 = vsel %vm942, %v938, 0
          %946 = vmatprep.subr.bf16.mxu0 0
          %947 = vmatpush1.bf16.msra.mxu0 %v944
          %948 = vmatprep.subr.bf16.mxu0 0
          %949 = vmatpush1.bf16.msra.mxu0 0
          %950 = vmatprep.subr.bf16.mxu0 0
          %951 = vmatpush1.bf16.msra.mxu0 0
          %952 = vmatprep.subr.bf16.mxu0 0
          %953 = vmatpush1.bf16.msra.mxu0 0
          %954 = vmatprep.subr.bf16.mxu0 0
          %955 = vmatpush1.bf16.msra.mxu0 0
          %956 = vmatprep.subr.bf16.mxu0 0
          %957 = vmatpush1.bf16.msra.mxu0 0
          %958 = vmatprep.subr.bf16.mxu0 0
          %959 = vmatpush1.bf16.msra.mxu0 0
          %960 = vmatprep.subr.bf16.mxu0 0
          %961 = vmatpush1.bf16.msra.mxu0 0
          %962 = vmatprep.subr.bf16.mxu0 0
          %963 = vmatpush1.bf16.msra.mxu0 0
          %964 = vmatprep.subr.bf16.mxu0 0
          %965 = vmatpush1.bf16.msra.mxu0 0
          %966 = vmatprep.subr.bf16.mxu0 0
          %967 = vmatpush1.bf16.msra.mxu0 0
          %968 = vmatprep.subr.bf16.mxu0 0
          %969 = vmatpush1.bf16.msra.mxu0 0
          %970 = vmatprep.subr.bf16.mxu0 0
          %971 = vmatpush1.bf16.msra.mxu0 0
          %972 = vmatprep.subr.bf16.mxu0 0
          %973 = vmatpush1.bf16.msra.mxu0 0
          %974 = vmatprep.subr.bf16.mxu0 0
          %975 = vmatpush1.bf16.msra.mxu0 0
          %976 = vmatprep.subr.bf16.mxu0 0
          %977 = vmatpush1.bf16.msra.mxu0 0
          %978 = vmatprep.mubr.bf16.mxu0 0
          %979 = vmatmul.mubr.bf16.gmra.mrb[0].mxu0 %v940
          %v980 = vpop.f32.mrb[0].mxu0
          %v981 = vadd.f32 0.0, %v980
          %v982 = vpop.f32.mrb[0].mxu0
          %v983 = vpop.f32.mrb[0].mxu0
          %v984 = vpop.f32.mrb[0].mxu0
          %985 = vdwg.mxu0
          %987 = vrot.lane.b32.xlu0 %v867, 120
          %v988 = vpop.permute.xlu0 %987
          %989 = vrot.lane.b32.xlu0 %v868, 88
          %v990 = vpop.permute.xlu0 %989
          %v992 = vsel %vm878, %v988, 0
          %v995 = vsel %vm878, %v990, 0
          %997 = vmatprep.subr.bf16.mxu0 0
          %998 = vmatpush1.bf16.xpose.msra.mxu0 %v995
          %999 = vmatprep.subr.bf16.mxu0 0
          %1000 = vmatpush1.bf16.xpose.msra.mxu0 0
          %1001 = vmatprep.subr.bf16.mxu0 0
          %1002 = vmatpush1.bf16.xpose.msra.mxu0 0
          %1003 = vmatprep.subr.bf16.mxu0 0
          %1004 = vmatpush1.bf16.xpose.msra.mxu0 0
          %1005 = vmatprep.subr.bf16.mxu0 0
          %1006 = vmatpush1.bf16.xpose.msra.mxu0 0
          %1007 = vmatprep.subr.bf16.mxu0 0
          %1008 = vmatpush1.bf16.xpose.msra.mxu0 0
          %1009 = vmatprep.subr.bf16.mxu0 0
          %1010 = vmatpush1.bf16.xpose.msra.mxu0 0
          %1011 = vmatprep.subr.bf16.mxu0 0
          %1012 = vmatpush1.bf16.xpose.msra.mxu0 0
          %1013 = vmatprep.subr.bf16.mxu0 0
          %1014 = vmatpush1.bf16.xpose.msra.mxu0 0
          %1015 = vmatprep.subr.bf16.mxu0 0
          %1016 = vmatpush1.bf16.xpose.msra.mxu0 0
          %1017 = vmatprep.subr.bf16.mxu0 0
          %1018 = vmatpush1.bf16.xpose.msra.mxu0 0
          %1019 = vmatprep.subr.bf16.mxu0 0
          %1020 = vmatpush1.bf16.xpose.msra.mxu0 0
          %1021 = vmatprep.subr.bf16.mxu0 0
          %1022 = vmatpush1.bf16.xpose.msra.mxu0 0
          %1023 = vmatprep.subr.bf16.mxu0 0
          %1024 = vmatpush1.bf16.xpose.msra.mxu0 0
          %1025 = vmatprep.subr.bf16.mxu0 0
          %1026 = vmatpush1.bf16.xpose.msra.mxu0 0
          %1027 = vmatprep.subr.bf16.mxu0 0
          %1028 = vmatpush1.bf16.xpose.msra.mxu0 0
          %1029 = vmatprep.mubr.bf16.mxu0 0
          %1030 = vmatmul.mubr.bf16.gmra.mrb[0].mxu0 %v992
          %v1031 = vpop.f32.mrb[0].mxu0
          %v1032 = vadd.f32 %v873, %v1031
          %v1033 = vpop.f32.mrb[0].mxu0
          %v1034 = vpop.f32.mrb[0].mxu0
          %v1035 = vpop.f32.mrb[0].mxu0
          %1036 = vdwg.mxu0
          %v1037 = vsel %vm878, %v1032, -inf
          %1038 = vmax.xlane.f32.xlu0 %v1037
          %v1039 = vpop.xlane.xlu0 %1038
          %v1040 = vsub.f32 %v1032, %v1039
          %v1041 = vmul.f32 %v1040, 1.442695
          %v1042 = vpow.pop %v1041
          %v1043 = vsel %vm878, %v1042, 0.0
          %1044 = vadd.xlane.f32.xlu0 %v1043
          %v1045 = vpop.xlane.xlu0 %1044
          %v1046 = vrcp.pop %v1045
          %v1047 = vmul.f32 %v1042, %v1046
          %v1048 = vpack.c.bf16 %v1047, %v1047
          %1049 = vrot.lane.b32.xlu0 %v868, 56
          %v1050 = vpop.permute.xlu0 %1049
          %v1052 = vsel %vm878, %v1048, 0
          %v1055 = vsel %vm942, %v1050, 0
          %1057 = vmatprep.subr.bf16.mxu0 0
          %1058 = vmatpush1.bf16.msra.mxu0 %v1055
          %1059 = vmatprep.subr.bf16.mxu0 0
          %1060 = vmatpush1.bf16.msra.mxu0 0
          %1061 = vmatprep.subr.bf16.mxu0 0
          %1062 = vmatpush1.bf16.msra.mxu0 0
          %1063 = vmatprep.subr.bf16.mxu0 0
          %1064 = vmatpush1.bf16.msra.mxu0 0
          %1065 = vmatprep.subr.bf16.mxu0 0
          %1066 = vmatpush1.bf16.msra.mxu0 0
          %1067 = vmatprep.subr.bf16.mxu0 0
          %1068 = vmatpush1.bf16.msra.mxu0 0
          %1069 = vmatprep.subr.bf16.mxu0 0
          %1070 = vmatpush1.bf16.msra.mxu0 0
          %1071 = vmatprep.subr.bf16.mxu0 0
          %1072 = vmatpush1.bf16.msra.mxu0 0
          %1073 = vmatprep.subr.bf16.mxu0 0
          %1074 = vmatpush1.bf16.msra.mxu0 0
          %1075 = vmatprep.subr.bf16.mxu0 0
          %1076 = vmatpush1.bf16.msra.mxu0 0
          %1077 = vmatprep.subr.bf16.mxu0 0
          %1078 = vmatpush1.bf16.msra.mxu0 0
          %1079 = vmatprep.subr.bf16.mxu0 0
          %1080 = vmatpush1.bf16.msra.mxu0 0
          %1081 = vmatprep.subr.bf16.mxu0 0
          %1082 = vmatpush1.bf16.msra.mxu0 0
          %1083 = vmatprep.subr.bf16.mxu0 0
          %1084 = vmatpush1.bf16.msra.mxu0 0
          %1085 = vmatprep.subr.bf16.mxu0 0
          %1086 = vmatpush1.bf16.msra.mxu0 0
          %1087 = vmatprep.subr.bf16.mxu0 0
          %1088 = vmatpush1.bf16.msra.mxu0 0
          %1089 = vmatprep.mubr.bf16.mxu0 0
          %1090 = vmatmul.mubr.bf16.gmra.mrb[0].mxu0 %v1052
          %v1091 = vpop.f32.mrb[0].mxu0
          %v1092 = vadd.f32 0.0, %v1091
          %v1093 = vpop.f32.mrb[0].mxu0
          %v1094 = vpop.f32.mrb[0].mxu0
          %v1095 = vpop.f32.mrb[0].mxu0
          %1096 = vdwg.mxu0
          %1097 = vrot.lane.b32.xlu0 %v867, 112
          %v1098 = vpop.permute.xlu0 %1097
          %1099 = vrot.lane.b32.xlu0 %v868, 80
          %v1100 = vpop.permute.xlu0 %1099
          %v1102 = vsel %vm878, %v1098, 0
          %v1105 = vsel %vm878, %v1100, 0
          %1107 = vmatprep.subr.bf16.mxu0 0
          %1108 = vmatpush1.bf16.xpose.msra.mxu0 %v1105
          %1109 = vmatprep.subr.bf16.mxu0 0
          %1110 = vmatpush1.bf16.xpose.msra.mxu0 0
          %1111 = vmatprep.subr.bf16.mxu0 0
          %1112 = vmatpush1.bf16.xpose.msra.mxu0 0
          %1113 = vmatprep.subr.bf16.mxu0 0
          %1114 = vmatpush1.bf16.xpose.msra.mxu0 0
          %1115 = vmatprep.subr.bf16.mxu0 0
          %1116 = vmatpush1.bf16.xpose.msra.mxu0 0
          %1117 = vmatprep.subr.bf16.mxu0 0
          %1118 = vmatpush1.bf16.xpose.msra.mxu0 0
          %1119 = vmatprep.subr.bf16.mxu0 0
          %1120 = vmatpush1.bf16.xpose.msra.mxu0 0
          %1121 = vmatprep.subr.bf16.mxu0 0
          %1122 = vmatpush1.bf16.xpose.msra.mxu0 0
          %1123 = vmatprep.subr.bf16.mxu0 0
          %1124 = vmatpush1.bf16.xpose.msra.mxu0 0
          %1125 = vmatprep.subr.bf16.mxu0 0
          %1126 = vmatpush1.bf16.xpose.msra.mxu0 0
          %1127 = vmatprep.subr.bf16.mxu0 0
          %1128 = vmatpush1.bf16.xpose.msra.mxu0 0
          %1129 = vmatprep.subr.bf16.mxu0 0
          %1130 = vmatpush1.bf16.xpose.msra.mxu0 0
          %1131 = vmatprep.subr.bf16.mxu0 0
          %1132 = vmatpush1.bf16.xpose.msra.mxu0 0
          %1133 = vmatprep.subr.bf16.mxu0 0
          %1134 = vmatpush1.bf16.xpose.msra.mxu0 0
          %1135 = vmatprep.subr.bf16.mxu0 0
          %1136 = vmatpush1.bf16.xpose.msra.mxu0 0
          %1137 = vmatprep.subr.bf16.mxu0 0
          %1138 = vmatpush1.bf16.xpose.msra.mxu0 0
          %1139 = vmatprep.mubr.bf16.mxu0 0
          %1140 = vmatmul.mubr.bf16.gmra.mrb[0].mxu0 %v1102
          %v1141 = vpop.f32.mrb[0].mxu0
          %v1142 = vadd.f32 %v873, %v1141
          %v1143 = vpop.f32.mrb[0].mxu0
          %v1144 = vpop.f32.mrb[0].mxu0
          %v1145 = vpop.f32.mrb[0].mxu0
          %1146 = vdwg.mxu0
          %v1147 = vsel %vm878, %v1142, -inf
          %1148 = vmax.xlane.f32.xlu0 %v1147
          %v1149 = vpop.xlane.xlu0 %1148
          %v1150 = vsub.f32 %v1142, %v1149
          %v1151 = vmul.f32 %v1150, 1.442695
          %v1152 = vpow.pop %v1151
          %v1153 = vsel %vm878, %v1152, 0.0
          %1154 = vadd.xlane.f32.xlu0 %v1153
          %v1155 = vpop.xlane.xlu0 %1154
          %v1156 = vrcp.pop %v1155
          %v1157 = vmul.f32 %v1152, %v1156
          %v1158 = vpack.c.bf16 %v1157, %v1157
          %1159 = vrot.lane.b32.xlu0 %v868, 48
          %v1160 = vpop.permute.xlu0 %1159
          %v1162 = vsel %vm878, %v1158, 0
          %v1165 = vsel %vm942, %v1160, 0
          %1167 = vmatprep.subr.bf16.mxu0 0
          %1168 = vmatpush1.bf16.msra.mxu0 %v1165
          %1169 = vmatprep.subr.bf16.mxu0 0
          %1170 = vmatpush1.bf16.msra.mxu0 0
          %1171 = vmatprep.subr.bf16.mxu0 0
          %1172 = vmatpush1.bf16.msra.mxu0 0
          %1173 = vmatprep.subr.bf16.mxu0 0
          %1174 = vmatpush1.bf16.msra.mxu0 0
          %1175 = vmatprep.subr.bf16.mxu0 0
          %1176 = vmatpush1.bf16.msra.mxu0 0
          %1177 = vmatprep.subr.bf16.mxu0 0
          %1178 = vmatpush1.bf16.msra.mxu0 0
          %1179 = vmatprep.subr.bf16.mxu0 0
          %1180 = vmatpush1.bf16.msra.mxu0 0
          %1181 = vmatprep.subr.bf16.mxu0 0
          %1182 = vmatpush1.bf16.msra.mxu0 0
          %1183 = vmatprep.subr.bf16.mxu0 0
          %1184 = vmatpush1.bf16.msra.mxu0 0
          %1185 = vmatprep.subr.bf16.mxu0 0
          %1186 = vmatpush1.bf16.msra.mxu0 0
          %1187 = vmatprep.subr.bf16.mxu0 0
          %1188 = vmatpush1.bf16.msra.mxu0 0
          %1189 = vmatprep.subr.bf16.mxu0 0
          %1190 = vmatpush1.bf16.msra.mxu0 0
          %1191 = vmatprep.subr.bf16.mxu0 0
          %1192 = vmatpush1.bf16.msra.mxu0 0
          %1193 = vmatprep.subr.bf16.mxu0 0
          %1194 = vmatpush1.bf16.msra.mxu0 0
          %1195 = vmatprep.subr.bf16.mxu0 0
          %1196 = vmatpush1.bf16.msra.mxu0 0
          %1197 = vmatprep.subr.bf16.mxu0 0
          %1198 = vmatpush1.bf16.msra.mxu0 0
          %1199 = vmatprep.mubr.bf16.mxu0 0
          %1200 = vmatmul.mubr.bf16.gmra.mrb[0].mxu0 %v1162
          %v1201 = vpop.f32.mrb[0].mxu0
          %v1202 = vadd.f32 0.0, %v1201
          %v1203 = vpop.f32.mrb[0].mxu0
          %v1204 = vpop.f32.mrb[0].mxu0
          %v1205 = vpop.f32.mrb[0].mxu0
          %1206 = vdwg.mxu0
          %1207 = vrot.lane.b32.xlu0 %v867, 104
          %v1208 = vpop.permute.xlu0 %1207
          %1209 = vrot.lane.b32.xlu0 %v868, 72
          %v1210 = vpop.permute.xlu0 %1209
          %v1212 = vsel %vm878, %v1208, 0
          %v1215 = vsel %vm878, %v1210, 0
          %1217 = vmatprep.subr.bf16.mxu0 0
          %1218 = vmatpush1.bf16.xpose.msra.mxu0 %v1215
          %1219 = vmatprep.subr.bf16.mxu0 0
          %1220 = vmatpush1.bf16.xpose.msra.mxu0 0
          %1221 = vmatprep.subr.bf16.mxu0 0
          %1222 = vmatpush1.bf16.xpose.msra.mxu0 0
          %1223 = vmatprep.subr.bf16.mxu0 0
          %1224 = vmatpush1.bf16.xpose.msra.mxu0 0
          %1225 = vmatprep.subr.bf16.mxu0 0
          %1226 = vmatpush1.bf16.xpose.msra.mxu0 0
          %1227 = vmatprep.subr.bf16.mxu0 0
          %1228 = vmatpush1.bf16.xpose.msra.mxu0 0
          %1229 = vmatprep.subr.bf16.mxu0 0
          %1230 = vmatpush1.bf16.xpose.msra.mxu0 0
          %1231 = vmatprep.subr.bf16.mxu0 0
          %1232 = vmatpush1.bf16.xpose.msra.mxu0 0
          %1233 = vmatprep.subr.bf16.mxu0 0
          %1234 = vmatpush1.bf16.xpose.msra.mxu0 0
          %1235 = vmatprep.subr.bf16.mxu0 0
          %1236 = vmatpush1.bf16.xpose.msra.mxu0 0
          %1237 = vmatprep.subr.bf16.mxu0 0
          %1238 = vmatpush1.bf16.xpose.msra.mxu0 0
          %1239 = vmatprep.subr.bf16.mxu0 0
          %1240 = vmatpush1.bf16.xpose.msra.mxu0 0
          %1241 = vmatprep.subr.bf16.mxu0 0
          %1242 = vmatpush1.bf16.xpose.msra.mxu0 0
          %1243 = vmatprep.subr.bf16.mxu0 0
          %1244 = vmatpush1.bf16.xpose.msra.mxu0 0
          %1245 = vmatprep.subr.bf16.mxu0 0
          %1246 = vmatpush1.bf16.xpose.msra.mxu0 0
          %1247 = vmatprep.subr.bf16.mxu0 0
          %1248 = vmatpush1.bf16.xpose.msra.mxu0 0
          %1249 = vmatprep.mubr.bf16.mxu0 0
          %1250 = vmatmul.mubr.bf16.gmra.mrb[0].mxu0 %v1212
          %v1251 = vpop.f32.mrb[0].mxu0
          %v1252 = vadd.f32 %v873, %v1251
          %v1253 = vpop.f32.mrb[0].mxu0
          %v1254 = vpop.f32.mrb[0].mxu0
          %v1255 = vpop.f32.mrb[0].mxu0
          %1256 = vdwg.mxu0
          %v1257 = vsel %vm878, %v1252, -inf
          %1258 = vmax.xlane.f32.xlu0 %v1257
          %v1259 = vpop.xlane.xlu0 %1258
          %v1260 = vsub.f32 %v1252, %v1259
          %v1261 = vmul.f32 %v1260, 1.442695
          %v1262 = vpow.pop %v1261
          %v1263 = vsel %vm878, %v1262, 0.0
          %1264 = vadd.xlane.f32.xlu0 %v1263
          %v1265 = vpop.xlane.xlu0 %1264
          %v1266 = vrcp.pop %v1265
          %v1267 = vmul.f32 %v1262, %v1266
          %v1268 = vpack.c.bf16 %v1267, %v1267
          %1269 = vrot.lane.b32.xlu0 %v868, 40
          %v1270 = vpop.permute.xlu0 %1269
          %v1272 = vsel %vm878, %v1268, 0
          %v1275 = vsel %vm942, %v1270, 0
          %1277 = vmatprep.subr.bf16.mxu0 0
          %1278 = vmatpush1.bf16.msra.mxu0 %v1275
          %1279 = vmatprep.subr.bf16.mxu0 0
          %1280 = vmatpush1.bf16.msra.mxu0 0
          %1281 = vmatprep.subr.bf16.mxu0 0
          %1282 = vmatpush1.bf16.msra.mxu0 0
          %1283 = vmatprep.subr.bf16.mxu0 0
          %1284 = vmatpush1.bf16.msra.mxu0 0
          %1285 = vmatprep.subr.bf16.mxu0 0
          %1286 = vmatpush1.bf16.msra.mxu0 0
          %1287 = vmatprep.subr.bf16.mxu0 0
          %1288 = vmatpush1.bf16.msra.mxu0 0
          %1289 = vmatprep.subr.bf16.mxu0 0
          %1290 = vmatpush1.bf16.msra.mxu0 0
          %1291 = vmatprep.subr.bf16.mxu0 0
          %1292 = vmatpush1.bf16.msra.mxu0 0
          %1293 = vmatprep.subr.bf16.mxu0 0
          %1294 = vmatpush1.bf16.msra.mxu0 0
          %1295 = vmatprep.subr.bf16.mxu0 0
          %1296 = vmatpush1.bf16.msra.mxu0 0
          %1297 = vmatprep.subr.bf16.mxu0 0
          %1298 = vmatpush1.bf16.msra.mxu0 0
          %1299 = vmatprep.subr.bf16.mxu0 0
          %1300 = vmatpush1.bf16.msra.mxu0 0
          %1301 = vmatprep.subr.bf16.mxu0 0
          %1302 = vmatpush1.bf16.msra.mxu0 0
          %1303 = vmatprep.subr.bf16.mxu0 0
          %1304 = vmatpush1.bf16.msra.mxu0 0
          %1305 = vmatprep.subr.bf16.mxu0 0
          %1306 = vmatpush1.bf16.msra.mxu0 0
          %1307 = vmatprep.subr.bf16.mxu0 0
          %1308 = vmatpush1.bf16.msra.mxu0 0
          %1309 = vmatprep.mubr.bf16.mxu0 0
          %1310 = vmatmul.mubr.bf16.gmra.mrb[0].mxu0 %v1272
          %v1311 = vpop.f32.mrb[0].mxu0
          %v1312 = vadd.f32 0.0, %v1311
          %v1313 = vpop.f32.mrb[0].mxu0
          %v1314 = vpop.f32.mrb[0].mxu0
          %v1315 = vpop.f32.mrb[0].mxu0
          %1316 = vdwg.mxu0
          %1318 = vrot.lane.b32.xlu0 %v1092, 8
          %v1319 = vpop.permute.xlu0 %1318
          %1322 = vrot.lane.b32.xlu0 %v1202, 16
          %v1323 = vpop.permute.xlu0 %1322
          %1326 = vrot.lane.b32.xlu0 %v1312, 24
          %v1327 = vpop.permute.xlu0 %1326
          %v1329 = vsel %vm878, %v981, %v1319
          %vm1330 = vcmask 130048
          %v1331 = vsel %vm1330, %v1329, %v1323
          %vm1332 = vcmask 195584
          %v1333 = vsel %vm1332, %v1331, %v1327
          %s1334 = smul.addr %s794, 4
          %s1335 = scalar_lea.vmem %s8, %s1334
          %v1336 = vld [vmem:[%s1335] sm:$0xf]
          %v1337 = vld [vmem:[%s1335 + $0x4] sm:$0xf]
          %v1338 = vld [vmem:[%s1335 + $0x8] sm:$0xf]
          %v1339 = vld [vmem:[%s1335 + $0xc] sm:$0xf]
          %v1340 = vpack.c.bf16 %v1333, %v1333
          %v1345 = vunpack.c.l.b16 %v1336
          %v1346 = vunpack.c.l.b16 %v1337
          %v1347 = vunpack.c.l.b16 %v1338
          %v1348 = vunpack.c.l.b16 %v1339
          %v1349 = vpack.c.b16 %v1346, %v1345
          %v1350 = vpack.c.b16 %v1348, %v1347
          %v1354 = vsel %vm708, %v1340, 0
          %1356 = vmatprep.subr.bf16.mxu0 0
          %1357 = vmatpush1.bf16.msra.mxu0 %v1349
          %1358 = vmatprep.subr.bf16.mxu0 0
          %1359 = vmatpush1.bf16.msra.mxu0 %v1350
          %1360 = vmatprep.subr.bf16.mxu0 0
          %1361 = vmatpush1.bf16.msra.mxu0 0
          %1362 = vmatprep.subr.bf16.mxu0 0
          %1363 = vmatpush1.bf16.msra.mxu0 0
          %1364 = vmatprep.subr.bf16.mxu0 0
          %1365 = vmatpush1.bf16.msra.mxu0 0
          %1366 = vmatprep.subr.bf16.mxu0 0
          %1367 = vmatpush1.bf16.msra.mxu0 0
          %1368 = vmatprep.subr.bf16.mxu0 0
          %1369 = vmatpush1.bf16.msra.mxu0 0
          %1370 = vmatprep.subr.bf16.mxu0 0
          %1371 = vmatpush1.bf16.msra.mxu0 0
          %1372 = vmatprep.subr.bf16.mxu0 0
          %1373 = vmatpush1.bf16.msra.mxu0 0
          %1374 = vmatprep.subr.bf16.mxu0 0
          %1375 = vmatpush1.bf16.msra.mxu0 0
          %1376 = vmatprep.subr.bf16.mxu0 0
          %1377 = vmatpush1.bf16.msra.mxu0 0
          %1378 = vmatprep.subr.bf16.mxu0 0
          %1379 = vmatpush1.bf16.msra.mxu0 0
          %1380 = vmatprep.subr.bf16.mxu0 0
          %1381 = vmatpush1.bf16.msra.mxu0 0
          %1382 = vmatprep.subr.bf16.mxu0 0
          %1383 = vmatpush1.bf16.msra.mxu0 0
          %1384 = vmatprep.subr.bf16.mxu0 0
          %1385 = vmatpush1.bf16.msra.mxu0 0
          %1386 = vmatprep.subr.bf16.mxu0 0
          %1387 = vmatpush1.bf16.msra.mxu0 0
          %1388 = vmatprep.mubr.bf16.mxu0 0
          %1389 = vmatmul.mubr.bf16.gmra.mrb[0].mxu0 %v1354
          %v1390 = vpop.f32.mrb[0].mxu0
          %v1391 = vadd.f32 0.0, %v1390
          %v1392 = vpop.f32.mrb[0].mxu0
          %v1393 = vpop.f32.mrb[0].mxu0
          %v1394 = vpop.f32.mrb[0].mxu0
          %1395 = vdwg.mxu0
          %s1396 = scalar_lea.vmem [#allocation11], %s788
          %v1397 = vld [vmem:[%s1396] sm:$0x1]
          %v1399 = vlaneseq
          %v1400 = vshrl.u32 %v1399, 7
          %v1401 = vsub.s32 0, %v1400
          %v1402 = vrot.slane %v1397, %v1401
          %v1404 = vadd.f32 %v1391, %v1402
          %s1405 = scalar_lea.vmem %s14, %s794
          %v1406 = vld [vmem:[%s1405] sm:$0xf]
          %v1407 = vadd.f32 %v793, %v1404
          %v1408 = vsel %vm708, %v1407, 0.0
          %1409 = vadd.xlane.f32.xlu0 %v1408
          %v1410 = vpop.xlane.xlu0 %1409
          %v1411 = vrcp.pop 32.0
          %v1412 = vmul.f32 %v1410, %v1411
          %v1413 = vsub.f32 %v1407, %v1412
          %v1414 = vmul.f32 %v1413, %v1413
          %v1415 = vsel %vm708, %v1414, 0.0
          %1416 = vadd.xlane.f32.xlu0 %v1415
          %v1417 = vpop.xlane.xlu0 %1416
          %v1418 = vmul.f32 %v1417, %v1411
          %v1419 = vadd.f32 %v1418, 1e-05
          %v1420 = vrsqrt.pop %v1419
          %v1421 = vmul.f32 %v1413, %v1420
          %v1422 = vlaneseq
          %v1423 = vshrl.u32 %v1422, 7
          %v1424 = vsub.s32 0, %v1423
          %v1425 = vrot.slane %v1406, %v1424
          %v1426 = vmul.f32 %v1421, %v1425
          %v1427 = vlaneseq
          %v1428 = vshrl.u32 %v1427, 7
          %v1429 = vsub.s32 1, %v1428
          %v1430 = vrot.slane %v1406, %v1429
          %v1431 = vadd.f32 %v1426, %v1430
          %v1432 = vpack.c.bf16 %v1431, %v1431
          %s1433 = smul.addr %s794, 4
          %s1434 = scalar_lea.vmem %s10, %s1433
          %v1435 = vld [vmem:[%s1434] sm:$0xf]
          %v1436 = vld [vmem:[%s1434 + $0x4] sm:$0xf]
          %v1437 = vld [vmem:[%s1434 + $0x8] sm:$0xf]
          %v1438 = vld [vmem:[%s1434 + $0xc] sm:$0xf]
          %s1439 = scalar_lea.vmem [#allocation12], %s788
          %v1440 = vld [vmem:[%s1439] sm:$0x1]
          %v1442 = vlaneseq
          %v1443 = vshrl.u32 %v1442, 7
          %v1444 = vsub.s32 0, %v1443
          %v1445 = vrot.slane %v1440, %v1444
          %v1451 = vunpack.c.l.b16 %v1435
          %v1452 = vunpack.c.l.b16 %v1436
          %v1453 = vunpack.c.l.b16 %v1437
          %v1454 = vunpack.c.l.b16 %v1438
          %v1455 = vpack.c.b16 %v1452, %v1451
          %v1456 = vpack.c.b16 %v1454, %v1453
          %v1460 = vsel %vm708, %v1432, 0
          %1462 = vmatprep.subr.bf16.mxu0 0
          %1463 = vmatpush1.bf16.msra.mxu0 %v1455
          %1464 = vmatprep.subr.bf16.mxu0 0
          %1465 = vmatpush1.bf16.msra.mxu0 %v1456
          %1466 = vmatprep.subr.bf16.mxu0 0
          %1467 = vmatpush1.bf16.msra.mxu0 0
          %1468 = vmatprep.subr.bf16.mxu0 0
          %1469 = vmatpush1.bf16.msra.mxu0 0
          %1470 = vmatprep.subr.bf16.mxu0 0
          %1471 = vmatpush1.bf16.msra.mxu0 0
          %1472 = vmatprep.subr.bf16.mxu0 0
          %1473 = vmatpush1.bf16.msra.mxu0 0
          %1474 = vmatprep.subr.bf16.mxu0 0
          %1475 = vmatpush1.bf16.msra.mxu0 0
          %1476 = vmatprep.subr.bf16.mxu0 0
          %1477 = vmatpush1.bf16.msra.mxu0 0
          %1478 = vmatprep.subr.bf16.mxu0 0
          %1479 = vmatpush1.bf16.msra.mxu0 0
          %1480 = vmatprep.subr.bf16.mxu0 0
          %1481 = vmatpush1.bf16.msra.mxu0 0
          %1482 = vmatprep.subr.bf16.mxu0 0
          %1483 = vmatpush1.bf16.msra.mxu0 0
          %1484 = vmatprep.subr.bf16.mxu0 0
          %1485 = vmatpush1.bf16.msra.mxu0 0
          %1486 = vmatprep.subr.bf16.mxu0 0
          %1487 = vmatpush1.bf16.msra.mxu0 0
          %1488 = vmatprep.subr.bf16.mxu0 0
          %1489 = vmatpush1.bf16.msra.mxu0 0
          %1490 = vmatprep.subr.bf16.mxu0 0
          %1491 = vmatpush1.bf16.msra.mxu0 0
          %1492 = vmatprep.subr.bf16.mxu0 0
          %1493 = vmatpush1.bf16.msra.mxu0 0
          %1494 = vmatprep.mubr.bf16.mxu0 0
          %1495 = vmatmul.mubr.bf16.gmra.mrb[0].mxu0 %v1460
          %v1496 = vpop.f32.mrb[0].mxu0
          %v1497 = vadd.f32 %v1445, %v1496
          %v1498 = vpop.f32.mrb[0].mxu0
          %v1499 = vpop.f32.mrb[0].mxu0
          %v1500 = vpop.f32.mrb[0].mxu0
          %1501 = vdwg.mxu0
          %v1502 = vmax.f32 %v1497, 0.0
          %v1503 = vpack.c.bf16 %v1502, %v1502
          %s1504 = smul.u32 %s788, 8
          %s1505 = smul.addr %s1504, 4
          %s1506 = scalar_lea.vmem %s12, %s1505
          %v1507 = vld [vmem:[%s1506] sm:$0xf]
          %v1508 = vld [vmem:[%s1506 + $0x4] sm:$0xf]
          %v1509 = vld [vmem:[%s1506 + $0x8] sm:$0xf]
          %v1510 = vld [vmem:[%s1506 + $0xc] sm:$0xf]
          %v1511 = vld [vmem:[%s1506 + $0x10] sm:$0xf]
          %v1512 = vld [vmem:[%s1506 + $0x14] sm:$0xf]
          %v1513 = vld [vmem:[%s1506 + $0x18] sm:$0xf]
          %v1514 = vld [vmem:[%s1506 + $0x1c] sm:$0xf]
          %v1523 = vunpack.c.l.b16 %v1507
          %v1524 = vunpack.c.l.b16 %v1508
          %v1525 = vunpack.c.l.b16 %v1509
          %v1526 = vunpack.c.l.b16 %v1510
          %v1527 = vunpack.c.l.b16 %v1511
          %v1528 = vunpack.c.l.b16 %v1512
          %v1529 = vunpack.c.l.b16 %v1513
          %v1530 = vunpack.c.l.b16 %v1514
          %v1531 = vpack.c.b16 %v1524, %v1523
          %v1532 = vpack.c.b16 %v1526, %v1525
          %v1533 = vpack.c.b16 %v1528, %v1527
          %v1534 = vpack.c.b16 %v1530, %v1529
          %vm1539 = vcmask 523264
          %v1541 = vsel %vm1539, %v1503, 0
          %1543 = vmatprep.subr.bf16.mxu0 0
          %1544 = vmatpush1.bf16.msra.mxu0 %v1531
          %1545 = vmatprep.subr.bf16.mxu0 0
          %1546 = vmatpush1.bf16.msra.mxu0 %v1532
          %1547 = vmatprep.subr.bf16.mxu0 0
          %1548 = vmatpush1.bf16.msra.mxu0 %v1533
          %1549 = vmatprep.subr.bf16.mxu0 0
          %1550 = vmatpush1.bf16.msra.mxu0 %v1534
          %1551 = vmatprep.subr.bf16.mxu0 0
          %1552 = vmatpush1.bf16.msra.mxu0 0
          %1553 = vmatprep.subr.bf16.mxu0 0
          %1554 = vmatpush1.bf16.msra.mxu0 0
          %1555 = vmatprep.subr.bf16.mxu0 0
          %1556 = vmatpush1.bf16.msra.mxu0 0
          %1557 = vmatprep.subr.bf16.mxu0 0
          %1558 = vmatpush1.bf16.msra.mxu0 0
          %1559 = vmatprep.subr.bf16.mxu0 0
          %1560 = vmatpush1.bf16.msra.mxu0 0
          %1561 = vmatprep.subr.bf16.mxu0 0
          %1562 = vmatpush1.bf16.msra.mxu0 0
          %1563 = vmatprep.subr.bf16.mxu0 0
          %1564 = vmatpush1.bf16.msra.mxu0 0
          %1565 = vmatprep.subr.bf16.mxu0 0
          %1566 = vmatpush1.bf16.msra.mxu0 0
          %1567 = vmatprep.subr.bf16.mxu0 0
          %1568 = vmatpush1.bf16.msra.mxu0 0
          %1569 = vmatprep.subr.bf16.mxu0 0
          %1570 = vmatpush1.bf16.msra.mxu0 0
          %1571 = vmatprep.subr.bf16.mxu0 0
          %1572 = vmatpush1.bf16.msra.mxu0 0
          %1573 = vmatprep.subr.bf16.mxu0 0
          %1574 = vmatpush1.bf16.msra.mxu0 0
          %1575 = vmatprep.mubr.bf16.mxu0 0
          %1576 = vmatmul.mubr.bf16.gmra.mrb[0].mxu0 %v1541
          %v1577 = vpop.f32.mrb[0].mxu0
          %v1578 = vadd.f32 0.0, %v1577
          %v1579 = vpop.f32.mrb[0].mxu0
          %v1580 = vpop.f32.mrb[0].mxu0
          %v1581 = vpop.f32.mrb[0].mxu0
          %1582 = vdwg.mxu0
          %s1583 = scalar_lea.vmem %s13, %s788
          %v1584 = vld [vmem:[%s1583] sm:$0x1]
          %v1586 = vlaneseq
          %v1587 = vshrl.u32 %v1586, 7
          %v1588 = vsub.s32 0, %v1587
          %v1589 = vrot.slane %v1584, %v1588
          %v1591 = vadd.f32 %v1578, %v1589
          %v1592 = vadd.f32 %v1431, %v1591
          %v1593 = vsel %vm708, %v1592, 0.0
          %1594 = vadd.xlane.f32.xlu0 %v1593
          %v1595 = vpop.xlane.xlu0 %1594
          %v1596 = vmul.f32 %v1595, %v1411
          %v1597 = vsub.f32 %v1592, %v1596
          %v1598 = vmul.f32 %v1597, %v1597
          %v1599 = vsel %vm708, %v1598, 0.0
          %1600 = vadd.xlane.f32.xlu0 %v1599
          %v1601 = vpop.xlane.xlu0 %1600
          %v1602 = vmul.f32 %v1601, %v1411
          %v1603 = vadd.f32 %v1602, 1e-05
          %v1604 = vrsqrt.pop %v1603
          %v1605 = vmul.f32 %v1597, %v1604
          %v1606 = vlaneseq
          %v1607 = vshrl.u32 %v1606, 7
          %v1608 = vsub.s32 2, %v1607
          %v1609 = vrot.slane %v1406, %v1608
          %v1610 = vmul.f32 %v1605, %v1609
          %v1611 = vlaneseq
          %v1612 = vshrl.u32 %v1611, 7
          %v1613 = vsub.s32 3, %v1612
          %v1614 = vrot.slane %v1406, %v1613
          %v1615 = vadd.f32 %v1610, %v1614
        $region117: #{tpu_custom_call.1} parent=83 // loop_footer
          %s792 = sadd.s32 1, %s788
        $region118: #{tpu_custom_call.1} parent=83 // loop_footer_branch
          %787 = sbr.rel target = $region114
        $region119: #{tpu_custom_call.1} parent=83 // loop_exit
          _
        %v1616 = vld [vmem:[%s15] sm:$0x3]
        %v1617 = vsel %vm708, %v793, 0.0
        %1618 = vadd.xlane.f32.xlu0 %v1617
        %v1619 = vpop.xlane.xlu0 %1618
        %v1620 = vrcp.pop 32.0
        %v1621 = vmul.f32 %v1619, %v1620
        %v1622 = vsub.f32 %v793, %v1621
        %v1623 = vmul.f32 %v1622, %v1622
        %v1624 = vsel %vm708, %v1623, 0.0
        %1625 = vadd.xlane.f32.xlu0 %v1624
        %v1626 = vpop.xlane.xlu0 %1625
        %v1627 = vmul.f32 %v1626, %v1620
        %v1628 = vadd.f32 %v1627, 1e-05
        %v1629 = vrsqrt.pop %v1628
        %v1630 = vmul.f32 %v1622, %v1629
        %v1631 = vlaneseq
        %v1632 = vshrl.u32 %v1631, 7
        %v1633 = vsub.s32 0, %v1632
        %v1634 = vrot.slane %v1616, %v1633
        %v1635 = vmul.f32 %v1630, %v1634
        %v1636 = vlaneseq
        %v1637 = vshrl.u32 %v1636, 7
        %v1638 = vsub.s32 1, %v1637
        %v1639 = vrot.slane %v1616, %v1638
        %v1640 = vadd.f32 %v1635, %v1639
        %v1641 = vsel %vm784, 1e-05, %v1640
        %v1642 = vld [vmem:[%s663] sm:$0x1]
        %v1643 = vsel %vm708, %v1641, 0.0
        %v1644 = vrot.slane %v1643, 4
        %v1645 = vadd.f32 %v1643, %v1644
        %v1646 = vrot.slane %v1645, 2
        %v1647 = vadd.f32 %v1645, %v1646
        %v1648 = vrot.slane %v1647, 1
        %v1649 = vadd.f32 %v1647, %v1648
        %v1650 = vadd.f32 %v1642, %v1649
        %vm1651 = vcmask 253952
        %1652 = vst.msk [vmem:[%s663] sm:$0x1] %vm1651, %v1650
        %v1653 = vld [vmem:[#allocation2] sm:$0x1]
        %v1654 = vsub.f32 1.0, %v691
        %v1655 = vsel %vm774, %v1654, 0.0
        %1656 = vadd.xlane.f32.xlu0 %v1655
        %v1657 = vpop.xlane.xlu0 %1656
        %v1658 = vadd.f32 %v1653, %v1657
        %vm1659 = vcmask 0
        %1660 = vst.msk [vmem:[#allocation2] sm:$0x1] %vm1659, %v1658
        %p1661 = scmp.eq.s32.totalorder %s41, 1
        // Predicated region
        $region120: #{tpu_custom_call.1} parent=83 // pred_check
          %p1662 = pneg %p1661
        $region121: #{tpu_custom_call.1} parent=83 // pred_check_branch
          %1664 = sbr.rel (%p1662) target = $region123
        $region122: #{tpu_custom_call.1} parent=83 // pred_region
          %v1665 = vld [vmem:[#allocation2] sm:$0x1]
          %v1666 = vmax.f32 %v1665, 1.0
          %v1667 = vld [vmem:[%s663] sm:$0x1]
          %1669 = vset.pattern.permute.xlu0 0
          %1670 = vperm.xlu0 %1669, %v1666
          %v1671 = vpop.permute.xlu0 %1670
          %v1673 = vlaneseq
          %v1674 = vshrl.u32 %v1673, 7
          %v1675 = vsub.s32 0, %v1674
          %v1676 = vrot.slane %v1671, %v1675
          %v1677 = vrcp.pop %v1676
          %v1678 = vmul.f32 %v1667, %v1677
          %1679 = vst.msk [vmem:[%s663] sm:$0x1] %vm1651, %v1678
        $region123: #{tpu_custom_call.1} parent=83 // pred_fallthru
          _
        %s1680 = sand.u32 %s413, 1
        %s1681 = scalar_lea.sflag [#allocation5], %s1680
        %s1682 = sand.u32 %s413, 1
        %s1683 = scalar_lea.vmem [#allocation14], %s1682
        // Predicated region
        $region124: #{tpu_custom_call.1} parent=83 // pred_check
          %p1684 = pneg %p423
        $region125: #{tpu_custom_call.1} parent=83 // pred_check_branch
          %1686 = sbr.rel (%p1684) target = $region127
        $region126: #{tpu_custom_call.1} parent=83 // pred_region
          %s1688 = ssub.s32 16, 16
          %1689 = vsyncadd %s1681, %s1688
          %s1690 = smul.addr %s40, 16
          %s1691 = scalar_lea.hbm %s16, %s1690
          %s1693 = sshll.u32 %s1683, 4
          %s1694 = int_to_ptr.vmem [resolvable:$true] %s1693
          %1696 = dma.vmem_to_hbm [thread:$0]  %s1694, 16, %s1691, %s1681
        $region127: #{tpu_custom_call.1} parent=83 // pred_fallthru
          _
      $region84: #{tpu_custom_call.1} parent=5 // pred_fallthru
        _
      %p1697 = scmp.le.s32.totalorder 2, %s31
      // Predicated region
      $region128: #{tpu_custom_call.1} parent=5 // pred_check
        %p1698 = pneg %p1697
      $region129: #{tpu_custom_call.1} parent=5 // pred_check_branch
        %1700 = sbr.rel (%p1698) target = $region131
      $region130: #{tpu_custom_call.1} parent=5 // pred_region
        %s1701 = ssub.s32 %s31, 2
        // Predicated region
        $region132: #{tpu_custom_call.1} parent=130 // pred_check
          %p1702 = pneg %p429
        $region133: #{tpu_custom_call.1} parent=130 // pred_check_branch
          %1704 = sbr.rel (%p1702) target = $region135
        $region134: #{tpu_custom_call.1} parent=130 // pred_region
          %s1705 = sand.u32 %s414, 1
          %s1706 = scalar_lea.sflag [#allocation5], %s1705
          %s1707 = sand.u32 %s414, 1
          %s1708 = scalar_lea.vmem [#allocation14], %s1707
          %1709 = dma.done %s1706, 16
        $region135: #{tpu_custom_call.1} parent=130 // pred_fallthru
          _
      $region131: #{tpu_custom_call.1} parent=5 // pred_fallthru
        _
    $region6: #{tpu_custom_call.1} parent=1 // loop_footer
      %s35 = sadd.s32 1, %s31
    $region7: #{tpu_custom_call.1} parent=1 // loop_footer_branch
      %30 = sbr.rel target = $region3
    $region8: #{tpu_custom_call.1} parent=1 // loop_exit
      _
    %1710 = vsyncpa [#allocation4], 1
    %s1711 = scalar_lea.sflag [#allocation4], 1
    %1712 = vsyncpa %s1711, 1
    %1713 = vsyncpa [#allocation7], 1
    %1714 = vsyncpa [#allocation10], 1
    %1715 = vsyncpa [#allocation13], 1
    %1716 = vsyncpa [#allocation5], 1
    %s1717 = scalar_lea.sflag [#allocation5], 1
    %1718 = vsyncpa %s1717, 1

// kernel: tpu_custom_call.1
$region0: #{tpu_custom_call.1}
  #allocation0 [shape = 'u32[]', space=smem, size = 0x4, offset = 0x4, fixed_abs, tag = 'smem constant byte address 0x4 - core index']
  #allocation1 [shape = 'u32[144,128]{1,0:T(1,128)}', space=vmem, size = 0x12000, scoped, tag = 'internal scratch']
  #allocation2 [shape = 'f32[1,1]{1,0:T(1,128)}', space=vmem, size = 0x200, scoped, tag = 'scratch operand']
  %s0 = inlined_call_operand.vmem [shape: bf16[2,16,32], index: 0, kind: input, shape index: {}]
  %s1 = inlined_call_operand.vmem [shape: f32[2,16,1], index: 1, kind: input, shape index: {}]
  %s2 = inlined_call_operand.hbm [shape: f32[2,2,1,8], index: 2, kind: input, shape index: {}]
  %s3 = inlined_call_operand.hbm [shape: bf16[32,32], index: 3, kind: input, shape index: {}]
  %s4 = inlined_call_operand.hbm [shape: f32[1,32], index: 4, kind: input, shape index: {}]
  %s5 = inlined_call_operand.hbm [shape: f32[1,32], index: 5, kind: input, shape index: {}]
  %s6 = inlined_call_operand.vmem [shape: bf16[3,32,96], index: 6, kind: input, shape index: {}]
  %s7 = inlined_call_operand.vmem [shape: f32[3,1,96], index: 7, kind: input, shape index: {}]
  %s8 = inlined_call_operand.vmem [shape: bf16[3,32,32], index: 8, kind: input, shape index: {}]
  %s9 = inlined_call_operand.hbm [shape: f32[3,1,32], index: 9, kind: input, shape index: {}]
  %s10 = inlined_call_operand.vmem [shape: bf16[3,32,64], index: 10, kind: input, shape index: {}]
  %s11 = inlined_call_operand.hbm [shape: f32[3,1,64], index: 11, kind: input, shape index: {}]
  %s12 = inlined_call_operand.vmem [shape: bf16[3,64,32], index: 12, kind: input, shape index: {}]
  %s13 = inlined_call_operand.vmem [shape: f32[3,1,32], index: 13, kind: input, shape index: {}]
  %s14 = inlined_call_operand.vmem [shape: f32[3,4,32], index: 14, kind: input, shape index: {}]
  %s15 = inlined_call_operand.vmem [shape: f32[2,32], index: 15, kind: input, shape index: {}]
  %s16 = inlined_call_operand.hbm [shape: f32[2,1,32], index: 16, kind: output, shape index: {}]
  %s17 = sld [smem:[#allocation0]]
  $region136: #{tpu_custom_call.1} parent=0
    _
  %s19 = ssub.s32 1, %s17
  %s20 = scalar_select 0, %s19, %s17
  $region1: #{tpu_custom_call.1} parent=0
    #allocation3 [shape = 'u8[1024]{0}', space=vmem, size = 0x400, scoped, tag = 'input window, operand 2']
    #allocation4 [shape = 's32[2]{0}', space=sflag, size = 0x8, scoped, tag = 'scoped memory for tpu_custom_call.1']
    #allocation5 [shape = 's32[2]{0}', space=sflag, size = 0x8, scoped, tag = 'scoped memory for tpu_custom_call.1']
    #allocation6 [shape = 'u8[8192]{0}', space=vmem, size = 0x2000, scoped, tag = 'input window, operand 3, single buffered']
    #allocation7 [shape = 's32[1]{0}', space=sflag, size = 0x4, scoped, tag = 'scoped memory for tpu_custom_call.1']
    #allocation8 [shape = 'u8[512]{0}', space=vmem, size = 0x400, scoped, tag = 'input window, operand 4, single buffered']
    #allocation9 [shape = 'u8[512]{0}', space=vmem, size = 0x400, scoped, tag = 'input window, operand 5, single buffered']
    #allocation10 [shape = 's32[1]{0}', space=sflag, size = 0x4, scoped, tag = 'scoped memory for tpu_custom_call.1']
    #allocation11 [shape = 'u8[1536]{0}', space=vmem, size = 0x800, scoped, tag = 'input window, operand 9, single buffered']
    #allocation12 [shape = 'u8[1536]{0}', space=vmem, size = 0x800, scoped, tag = 'input window, operand 11, single buffered']
    #allocation13 [shape = 's32[1]{0}', space=sflag, size = 0x4, scoped, tag = 'scoped memory for tpu_custom_call.1']
    #allocation14 [shape = 'u8[1024]{0}', space=vmem, size = 0x400, scoped, tag = 'output window, operand 0']
    %21 = vsyncpa [#allocation4], 0
    %s22 = scalar_lea.sflag [#allocation4], 1
    %23 = vsyncpa %s22, 0
    %24 = vsyncpa [#allocation7], 0
    %25 = vsyncpa [#allocation10], 0
    %26 = vsyncpa [#allocation13], 0
    %27 = vsyncpa [#allocation5], 0
    %s28 = scalar_lea.sflag [#allocation5], 1
    %29 = vsyncpa %s28, 0
    loop: start=0, step=1, limit=6
    $region2: #{tpu_custom_call.1} parent=1 // loop_pre_header
      _
    $region3: #{tpu_custom_call.1} parent=1 // loop_header
      %s31 = sphi 0, %s35
      %p32 = scmp.ge.s32.totalorder %s31, 6
      %s38 = sphi 0, %s50
      %s39 = sphi 0, %s46
      %s40 = sphi 0, %s38
      %s41 = sphi 0, %s39
      %s42 = sphi 0, %s40
      %s43 = sphi 0, %s41
      %s55 = sphi 0, %s57
      %s58 = sphi 0, %s55
      %s59 = sphi 0, %s58
      %s75 = sphi 0, %s59
      %s83 = sphi 0, %s85
      %s86 = sphi 0, %s83
      %s87 = sphi 0, %s86
      %s103 = sphi 0, %s87
      %s111 = sphi 0, %s113
      %s114 = sphi 0, %s111
      %s115 = sphi 0, %s114
      %s131 = sphi 0, %s115
      %s135 = sphi 0, %s135
      %s137 = sphi 0, %s135
      %s138 = sphi 0, %s137
      %s152 = sphi 0, %s138
      %s156 = sphi 0, %s156
      %s158 = sphi 0, %s156
      %s159 = sphi 0, %s158
      %s173 = sphi 0, %s159
      %s177 = sphi 0, %s177
      %s179 = sphi 0, %s177
      %s180 = sphi 0, %s179
      %s194 = sphi 0, %s180
      %s198 = sphi 0, %s198
      %s200 = sphi 0, %s198
      %s201 = sphi 0, %s200
      %s215 = sphi 0, %s201
      %s219 = sphi 0, %s219
      %s221 = sphi 0, %s219
      %s222 = sphi 0, %s221
      %s236 = sphi 0, %s222
      %s240 = sphi 0, %s240
      %s242 = sphi 0, %s240
      %s243 = sphi 0, %s242
      %s257 = sphi 0, %s243
      %s261 = sphi 0, %s261
      %s263 = sphi 0, %s261
      %s264 = sphi 0, %s263
      %s278 = sphi 0, %s264
      %s282 = sphi 0, %s282
      %s284 = sphi 0, %s282
      %s285 = sphi 0, %s284
      %s299 = sphi 0, %s285
      %s303 = sphi 0, %s303
      %s305 = sphi 0, %s303
      %s306 = sphi 0, %s305
      %s320 = sphi 0, %s306
      %s324 = sphi 0, %s324
      %s326 = sphi 0, %s324
      %s327 = sphi 0, %s326
      %s341 = sphi 0, %s327
      %s345 = sphi 0, %s345
      %s347 = sphi 0, %s345
      %s348 = sphi 0, %s347
      %s362 = sphi 0, %s348
      %s366 = sphi 0, %s366
      %s368 = sphi 0, %s366
      %s369 = sphi 0, %s368
      %s383 = sphi 0, %s369
      %s387 = sphi 0, %s387
      %s389 = sphi 0, %s387
      %s390 = sphi 0, %s389
      %s404 = sphi 0, %s390
      %s410 = sphi 0, %s412
      %s413 = sphi 0, %s410
      %s414 = sphi 0, %s413
      %s430 = sphi 0, %s414
    $region4: #{tpu_custom_call.1} parent=1 // loop_header_branch
      %34 = sbr.rel (%p32) target = $region8
    $region5: #{tpu_custom_call.1} parent=1 // loop_body
      %s36 = ssub.s32 %s31, 1
      %s37 = ssub.s32 %s31, 2
      %s44 = sadd.s32 1, %s39
      %p45 = scmp.ge.s32.totalorder %s44, 2
      %s46 = scalar_select %p45, 0, %s44
      %s47 = sadd.s32 1, %s38
      %s48 = scalar_select %p45, %s47, %s38
      %p49 = scmp.ge.s32.totalorder %s48, 2
      %s50 = scalar_select %p49, 0, %s48
      %s51 = ssub.s32 %s38, %s50
      %s52 = ssub.s32 %s39, %s46
      %s53 = sor.u32 %s51, %s52
      %p54 = scmp.eq.s32.totalorder %s53, 0
      %s56 = sadd.s32 %s55, 1
      %s57 = scalar_select %p54, %s55, %s56
      %p60 = pneg %p54
      %p61 = scmp.eq.s32.totalorder %s31, 3
      %p62 = por %p60, %p61
      %p63 = scmp.ne.s32.totalorder %s55, %s58
      %p64 = scmp.eq.s32.totalorder %s31, 0
      %p65 = por %p63, %p64
      %p66 = scmp.ne.s32.totalorder %s55, %s58
      %p67 = scmp.eq.s32.totalorder %s36, 3
      %p68 = por %p66, %p67
      %p69 = scmp.ne.s32.totalorder %s58, %s59
      %p70 = scmp.eq.s32.totalorder %s36, 0
      %p71 = por %p69, %p70
      %p72 = scmp.ne.s32.totalorder %s58, %s59
      %p73 = scmp.eq.s32.totalorder %s37, 3
      %p74 = por %p72, %p73
      %p76 = scmp.ne.s32.totalorder %s59, %s75
      %p77 = scmp.eq.s32.totalorder %s37, 0
      %p78 = por %p76, %p77
      %s79 = ssub.s32 %s38, %s50
      %s80 = ssub.s32 %s39, %s46
      %s81 = sor.u32 %s79, %s80
      %p82 = scmp.eq.s32.totalorder %s81, 0
      %s84 = sadd.s32 %s83, 1
      %s85 = scalar_select %p82, %s83, %s84
      %p88 = pneg %p82
      %p89 = scmp.eq.s32.totalorder %s31, 3
      %p90 = por %p88, %p89
      %p91 = scmp.ne.s32.totalorder %s83, %s86
      %p92 = scmp.eq.s32.totalorder %s31, 0
      %p93 = por %p91, %p92
      %p94 = scmp.ne.s32.totalorder %s83, %s86
      %p95 = scmp.eq.s32.totalorder %s36, 3
      %p96 = por %p94, %p95
      %p97 = scmp.ne.s32.totalorder %s86, %s87
      %p98 = scmp.eq.s32.totalorder %s36, 0
      %p99 = por %p97, %p98
      %p100 = scmp.ne.s32.totalorder %s86, %s87
      %p101 = scmp.eq.s32.totalorder %s37, 3
      %p102 = por %p100, %p101
      %p104 = scmp.ne.s32.totalorder %s87, %s103
      %p105 = scmp.eq.s32.totalorder %s37, 0
      %p106 = por %p104, %p105
      %s107 = ssub.s32 %s38, %s50
      %s108 = ssub.s32 %s39, %s46
      %s109 = sor.u32 %s107, %s108
      %p110 = scmp.eq.s32.totalorder %s109, 0
      %s112 = sadd.s32 %s111, 1
      %s113 = scalar_select %p110, %s111, %s112
      %p116 = pneg %p110
      %p117 = scmp.eq.s32.totalorder %s31, 3
      %p118 = por %p116, %p117
      %p119 = scmp.ne.s32.totalorder %s111, %s114
      %p120 = scmp.eq.s32.totalorder %s31, 0
      %p121 = por %p119, %p120
      %p122 = scmp.ne.s32.totalorder %s111, %s114
      %p123 = scmp.eq.s32.totalorder %s36, 3
      %p124 = por %p122, %p123
      %p125 = scmp.ne.s32.totalorder %s114, %s115
      %p126 = scmp.eq.s32.totalorder %s36, 0
      %p127 = por %p125, %p126
      %p128 = scmp.ne.s32.totalorder %s114, %s115
      %p129 = scmp.eq.s32.totalorder %s37, 3
      %p130 = por %p128, %p129
      %p132 = scmp.ne.s32.totalorder %s115, %s131
      %p133 = scmp.eq.s32.totalorder %s37, 0
      %p134 = por %p132, %p133
      %s136 = sadd.s32 %s135, 1
      %p139 = scmp.eq.s32.totalorder %s31, 3
      %p140 = scmp.ne.s32.totalorder %s135, %s137
      %p141 = scmp.eq.s32.totalorder %s31, 0
      %p142 = por %p140, %p141
      %p143 = scmp.ne.s32.totalorder %s135, %s137
      %p144 = scmp.eq.s32.totalorder %s36, 3
      %p145 = por %p143, %p144
      %p146 = scmp.ne.s32.totalorder %s137, %s138
      %p147 = scmp.eq.s32.totalorder %s36, 0
      %p148 = por %p146, %p147
      %p149 = scmp.ne.s32.totalorder %s137, %s138
      %p150 = scmp.eq.s32.totalorder %s37, 3
      %p151 = por %p149, %p150
      %p153 = scmp.ne.s32.totalorder %s138, %s152
      %p154 = scmp.eq.s32.totalorder %s37, 0
      %p155 = por %p153, %p154
      %s157 = sadd.s32 %s156, 1
      %p160 = scmp.eq.s32.totalorder %s31, 3
      %p161 = scmp.ne.s32.totalorder %s156, %s158
      %p162 = scmp.eq.s32.totalorder %s31, 0
      %p163 = por %p161, %p162
      %p164 = scmp.ne.s32.totalorder %s156, %s158
      %p165 = scmp.eq.s32.totalorder %s36, 3
      %p166 = por %p164, %p165
      %p167 = scmp.ne.s32.totalorder %s158, %s159
      %p168 = scmp.eq.s32.totalorder %s36, 0
      %p169 = por %p167, %p168
      %p170 = scmp.ne.s32.totalorder %s158, %s159
      %p171 = scmp.eq.s32.totalorder %s37, 3
      %p172 = por %p170, %p171
      %p174 = scmp.ne.s32.totalorder %s159, %s173
      %p175 = scmp.eq.s32.totalorder %s37, 0
      %p176 = por %p174, %p175
      %s178 = sadd.s32 %s177, 1
      %p181 = scmp.eq.s32.totalorder %s31, 3
      %p182 = scmp.ne.s32.totalorder %s177, %s179
      %p183 = scmp.eq.s32.totalorder %s31, 0
      %p184 = por %p182, %p183
      %p185 = scmp.ne.s32.totalorder %s177, %s179
      %p186 = scmp.eq.s32.totalorder %s36, 3
      %p187 = por %p185, %p186
      %p188 = scmp.ne.s32.totalorder %s179, %s180
      %p189 = scmp.eq.s32.totalorder %s36, 0
      %p190 = por %p188, %p189
      %p191 = scmp.ne.s32.totalorder %s179, %s180
      %p192 = scmp.eq.s32.totalorder %s37, 3
      %p193 = por %p191, %p192
      %p195 = scmp.ne.s32.totalorder %s180, %s194
      %p196 = scmp.eq.s32.totalorder %s37, 0
      %p197 = por %p195, %p196
      %s199 = sadd.s32 %s198, 1
      %p202 = scmp.eq.s32.totalorder %s31, 3
      %p203 = scmp.ne.s32.totalorder %s198, %s200
      %p204 = scmp.eq.s32.totalorder %s31, 0
      %p205 = por %p203, %p204
      %p206 = scmp.ne.s32.totalorder %s198, %s200
      %p207 = scmp.eq.s32.totalorder %s36, 3
      %p208 = por %p206, %p207
      %p209 = scmp.ne.s32.totalorder %s200, %s201
      %p210 = scmp.eq.s32.totalorder %s36, 0
      %p211 = por %p209, %p210
      %p212 = scmp.ne.s32.totalorder %s200, %s201
      %p213 = scmp.eq.s32.totalorder %s37, 3
      %p214 = por %p212, %p213
      %p216 = scmp.ne.s32.totalorder %s201, %s215
      %p217 = scmp.eq.s32.totalorder %s37, 0
      %p218 = por %p216, %p217
      %s220 = sadd.s32 %s219, 1
      %p223 = scmp.eq.s32.totalorder %s31, 3
      %p224 = scmp.ne.s32.totalorder %s219, %s221
      %p225 = scmp.eq.s32.totalorder %s31, 0
      %p226 = por %p224, %p225
      %p227 = scmp.ne.s32.totalorder %s219, %s221
      %p228 = scmp.eq.s32.totalorder %s36, 3
      %p229 = por %p227, %p228
      %p230 = scmp.ne.s32.totalorder %s221, %s222
      %p231 = scmp.eq.s32.totalorder %s36, 0
      %p232 = por %p230, %p231
      %p233 = scmp.ne.s32.totalorder %s221, %s222
      %p234 = scmp.eq.s32.totalorder %s37, 3
      %p235 = por %p233, %p234
      %p237 = scmp.ne.s32.totalorder %s222, %s236
      %p238 = scmp.eq.s32.totalorder %s37, 0
      %p239 = por %p237, %p238
      %s241 = sadd.s32 %s240, 1
      %p244 = scmp.eq.s32.totalorder %s31, 3
      %p245 = scmp.ne.s32.totalorder %s240, %s242
      %p246 = scmp.eq.s32.totalorder %s31, 0
      %p247 = por %p245, %p246
      %p248 = scmp.ne.s32.totalorder %s240, %s242
      %p249 = scmp.eq.s32.totalorder %s36, 3
      %p250 = por %p248, %p249
      %p251 = scmp.ne.s32.totalorder %s242, %s243
      %p252 = scmp.eq.s32.totalorder %s36, 0
      %p253 = por %p251, %p252
      %p254 = scmp.ne.s32.totalorder %s242, %s243
      %p255 = scmp.eq.s32.totalorder %s37, 3
      %p256 = por %p254, %p255
      %p258 = scmp.ne.s32.totalorder %s243, %s257
      %p259 = scmp.eq.s32.totalorder %s37, 0
      %p260 = por %p258, %p259
      %s262 = sadd.s32 %s261, 1
      %p265 = scmp.eq.s32.totalorder %s31, 3
      %p266 = scmp.ne.s32.totalorder %s261, %s263
      %p267 = scmp.eq.s32.totalorder %s31, 0
      %p268 = por %p266, %p267
      %p269 = scmp.ne.s32.totalorder %s261, %s263
      %p270 = scmp.eq.s32.totalorder %s36, 3
      %p271 = por %p269, %p270
      %p272 = scmp.ne.s32.totalorder %s263, %s264
      %p273 = scmp.eq.s32.totalorder %s36, 0
      %p274 = por %p272, %p273
      %p275 = scmp.ne.s32.totalorder %s263, %s264
      %p276 = scmp.eq.s32.totalorder %s37, 3
      %p277 = por %p275, %p276
      %p279 = scmp.ne.s32.totalorder %s264, %s278
      %p280 = scmp.eq.s32.totalorder %s37, 0
      %p281 = por %p279, %p280
      %s283 = sadd.s32 %s282, 1
      %p286 = scmp.eq.s32.totalorder %s31, 3
      %p287 = scmp.ne.s32.totalorder %s282, %s284
      %p288 = scmp.eq.s32.totalorder %s31, 0
      %p289 = por %p287, %p288
      %p290 = scmp.ne.s32.totalorder %s282, %s284
      %p291 = scmp.eq.s32.totalorder %s36, 3
      %p292 = por %p290, %p291
      %p293 = scmp.ne.s32.totalorder %s284, %s285
      %p294 = scmp.eq.s32.totalorder %s36, 0
      %p295 = por %p293, %p294
      %p296 = scmp.ne.s32.totalorder %s284, %s285
      %p297 = scmp.eq.s32.totalorder %s37, 3
      %p298 = por %p296, %p297
      %p300 = scmp.ne.s32.totalorder %s285, %s299
      %p301 = scmp.eq.s32.totalorder %s37, 0
      %p302 = por %p300, %p301
      %s304 = sadd.s32 %s303, 1
      %p307 = scmp.eq.s32.totalorder %s31, 3
      %p308 = scmp.ne.s32.totalorder %s303, %s305
      %p309 = scmp.eq.s32.totalorder %s31, 0
      %p310 = por %p308, %p309
      %p311 = scmp.ne.s32.totalorder %s303, %s305
      %p312 = scmp.eq.s32.totalorder %s36, 3
      %p313 = por %p311, %p312
      %p314 = scmp.ne.s32.totalorder %s305, %s306
      %p315 = scmp.eq.s32.totalorder %s36, 0
      %p316 = por %p314, %p315
      %p317 = scmp.ne.s32.totalorder %s305, %s306
      %p318 = scmp.eq.s32.totalorder %s37, 3
      %p319 = por %p317, %p318
      %p321 = scmp.ne.s32.totalorder %s306, %s320
      %p322 = scmp.eq.s32.totalorder %s37, 0
      %p323 = por %p321, %p322
      %s325 = sadd.s32 %s324, 1
      %p328 = scmp.eq.s32.totalorder %s31, 3
      %p329 = scmp.ne.s32.totalorder %s324, %s326
      %p330 = scmp.eq.s32.totalorder %s31, 0
      %p331 = por %p329, %p330
      %p332 = scmp.ne.s32.totalorder %s324, %s326
      %p333 = scmp.eq.s32.totalorder %s36, 3
      %p334 = por %p332, %p333
      %p335 = scmp.ne.s32.totalorder %s326, %s327
      %p336 = scmp.eq.s32.totalorder %s36, 0
      %p337 = por %p335, %p336
      %p338 = scmp.ne.s32.totalorder %s326, %s327
      %p339 = scmp.eq.s32.totalorder %s37, 3
      %p340 = por %p338, %p339
      %p342 = scmp.ne.s32.totalorder %s327, %s341
      %p343 = scmp.eq.s32.totalorder %s37, 0
      %p344 = por %p342, %p343
      %s346 = sadd.s32 %s345, 1
      %p349 = scmp.eq.s32.totalorder %s31, 3
      %p350 = scmp.ne.s32.totalorder %s345, %s347
      %p351 = scmp.eq.s32.totalorder %s31, 0
      %p352 = por %p350, %p351
      %p353 = scmp.ne.s32.totalorder %s345, %s347
      %p354 = scmp.eq.s32.totalorder %s36, 3
      %p355 = por %p353, %p354
      %p356 = scmp.ne.s32.totalorder %s347, %s348
      %p357 = scmp.eq.s32.totalorder %s36, 0
      %p358 = por %p356, %p357
      %p359 = scmp.ne.s32.totalorder %s347, %s348
      %p360 = scmp.eq.s32.totalorder %s37, 3
      %p361 = por %p359, %p360
      %p363 = scmp.ne.s32.totalorder %s348, %s362
      %p364 = scmp.eq.s32.totalorder %s37, 0
      %p365 = por %p363, %p364
      %s367 = sadd.s32 %s366, 1
      %p370 = scmp.eq.s32.totalorder %s31, 3
      %p371 = scmp.ne.s32.totalorder %s366, %s368
      %p372 = scmp.eq.s32.totalorder %s31, 0
      %p373 = por %p371, %p372
      %p374 = scmp.ne.s32.totalorder %s366, %s368
      %p375 = scmp.eq.s32.totalorder %s36, 3
      %p376 = por %p374, %p375
      %p377 = scmp.ne.s32.totalorder %s368, %s369
      %p378 = scmp.eq.s32.totalorder %s36, 0
      %p379 = por %p377, %p378
      %p380 = scmp.ne.s32.totalorder %s368, %s369
      %p381 = scmp.eq.s32.totalorder %s37, 3
      %p382 = por %p380, %p381
      %p384 = scmp.ne.s32.totalorder %s369, %s383
      %p385 = scmp.eq.s32.totalorder %s37, 0
      %p386 = por %p384, %p385
      %s388 = sadd.s32 %s387, 1
      %p391 = scmp.eq.s32.totalorder %s31, 3
      %p392 = scmp.ne.s32.totalorder %s387, %s389
      %p393 = scmp.eq.s32.totalorder %s31, 0
      %p394 = por %p392, %p393
      %p395 = scmp.ne.s32.totalorder %s387, %s389
      %p396 = scmp.eq.s32.totalorder %s36, 3
      %p397 = por %p395, %p396
      %p398 = scmp.ne.s32.totalorder %s389, %s390
      %p399 = scmp.eq.s32.totalorder %s36, 0
      %p400 = por %p398, %p399
      %p401 = scmp.ne.s32.totalorder %s389, %s390
      %p402 = scmp.eq.s32.totalorder %s37, 3
      %p403 = por %p401, %p402
      %p405 = scmp.ne.s32.totalorder %s390, %s404
      %p406 = scmp.eq.s32.totalorder %s37, 0
      %p407 = por %p405, %p406
      %s408 = ssub.s32 %s38, %s50
      %p409 = scmp.eq.s32.totalorder %s408, 0
      %s411 = sadd.s32 %s410, 1
      %s412 = scalar_select %p409, %s410, %s411
      %p415 = pneg %p409
      %p416 = scmp.eq.s32.totalorder %s31, 3
      %p417 = por %p415, %p416
      %p418 = scmp.ne.s32.totalorder %s410, %s413
      %p419 = scmp.eq.s32.totalorder %s31, 0
      %p420 = por %p418, %p419
      %p421 = scmp.ne.s32.totalorder %s410, %s413
      %p422 = scmp.eq.s32.totalorder %s36, 3
      %p423 = por %p421, %p422
      %p424 = scmp.ne.s32.totalorder %s413, %s414
      %p425 = scmp.eq.s32.totalorder %s36, 0
      %p426 = por %p424, %p425
      %p427 = scmp.ne.s32.totalorder %s413, %s414
      %p428 = scmp.eq.s32.totalorder %s37, 3
      %p429 = por %p427, %p428
      %p431 = scmp.ne.s32.totalorder %s414, %s430
      %p432 = scmp.eq.s32.totalorder %s37, 0
      %p433 = por %p431, %p432
      %p434 = scmp.le.s32.totalorder 1, %s31
      %p435 = scmp.lt.s32.totalorder %s31, 5
      %p436 = pnand %p434, %p435
      %p437 = pneg %p436
      // Predicated region
      $region9: #{tpu_custom_call.1} parent=5 // pred_check
        _
      $region10: #{tpu_custom_call.1} parent=5 // pred_check_branch
        %439 = sbr.rel (%p436) target = $region12
      $region11: #{tpu_custom_call.1} parent=5 // pred_region
        %s440 = ssub.s32 %s31, 1
        // Predicated region
        $region13: #{tpu_custom_call.1} parent=11 // pred_check
          %p441 = pneg %p148
        $region14: #{tpu_custom_call.1} parent=11 // pred_check_branch
          %443 = sbr.rel (%p441) target = $region16
        $region15: #{tpu_custom_call.1} parent=11 // pred_region
          %s445 = ssub.s32 256, 256
          %446 = vsyncadd [#allocation7], %s445
          %s447 = sshll.u32 [#allocation6], 4
          %s448 = int_to_ptr.vmem [resolvable:$true] %s447
          %453 = dma.hbm_to_vmem [thread:$0]  %s3, 256, %s448, [#allocation7], 64, 64, 4
        $region16: #{tpu_custom_call.1} parent=11 // pred_fallthru
          _
        // Predicated region
        $region17: #{tpu_custom_call.1} parent=11 // pred_check
          %p454 = pneg %p169
        $region18: #{tpu_custom_call.1} parent=11 // pred_check_branch
          %456 = sbr.rel (%p454) target = $region20
        $region19: #{tpu_custom_call.1} parent=11 // pred_region
          %s458 = ssub.s32 16, 16
          %459 = vsyncadd [#allocation7], %s458
          %s461 = sshll.u32 [#allocation8], 4
          %s462 = int_to_ptr.vmem [resolvable:$true] %s461
          %464 = dma.hbm_to_vmem [thread:$0]  %s4, 16, %s462, [#allocation7]
        $region20: #{tpu_custom_call.1} parent=11 // pred_fallthru
          _
        // Predicated region
        $region21: #{tpu_custom_call.1} parent=11 // pred_check
          %p465 = pneg %p190
        $region22: #{tpu_custom_call.1} parent=11 // pred_check_branch
          %467 = sbr.rel (%p465) target = $region24
        $region23: #{tpu_custom_call.1} parent=11 // pred_region
          %s469 = ssub.s32 16, 16
          %470 = vsyncadd [#allocation10], %s469
          %s472 = sshll.u32 [#allocation9], 4
          %s473 = int_to_ptr.vmem [resolvable:$true] %s472
          %475 = dma.hbm_to_vmem [thread:$0]  %s5, 16, %s473, [#allocation10]
        $region24: #{tpu_custom_call.1} parent=11 // pred_fallthru
          _
        // Predicated region
        $region25: #{tpu_custom_call.1} parent=11 // pred_check
          %p476 = pneg %p211
        $region26: #{tpu_custom_call.1} parent=11 // pred_check_branch
          %478 = sbr.rel (%p476) target = $region28
        $region27: #{tpu_custom_call.1} parent=11 // pred_region
          _
        $region28: #{tpu_custom_call.1} parent=11 // pred_fallthru
          _
        // Predicated region
        $region29: #{tpu_custom_call.1} parent=11 // pred_check
          %p479 = pneg %p232
        $region30: #{tpu_custom_call.1} parent=11 // pred_check_branch
          %481 = sbr.rel (%p479) target = $region32
        $region31: #{tpu_custom_call.1} parent=11 // pred_region
          _
        $region32: #{tpu_custom_call.1} parent=11 // pred_fallthru
          _
        // Predicated region
        $region33: #{tpu_custom_call.1} parent=11 // pred_check
          %p482 = pneg %p253
        $region34: #{tpu_custom_call.1} parent=11 // pred_check_branch
          %484 = sbr.rel (%p482) target = $region36
        $region35: #{tpu_custom_call.1} parent=11 // pred_region
          _
        $region36: #{tpu_custom_call.1} parent=11 // pred_fallthru
          _
        // Predicated region
        $region37: #{tpu_custom_call.1} parent=11 // pred_check
          %p485 = pneg %p274
        $region38: #{tpu_custom_call.1} parent=11 // pred_check_branch
          %487 = sbr.rel (%p485) target = $region40
        $region39: #{tpu_custom_call.1} parent=11 // pred_region
          %s489 = ssub.s32 48, 48
          %490 = vsyncadd [#allocation10], %s489
          %s491 = sshll.u32 [#allocation11], 4
          %s492 = int_to_ptr.vmem [resolvable:$true] %s491
          %497 = dma.hbm_to_vmem [thread:$0]  %s9, 48, %s492, [#allocation10], 16, 16, 1
        $region40: #{tpu_custom_call.1} parent=11 // pred_fallthru
          _
        // Predicated region
        $region41: #{tpu_custom_call.1} parent=11 // pred_check
          %p498 = pneg %p295
        $region42: #{tpu_custom_call.1} parent=11 // pred_check_branch
          %500 = sbr.rel (%p498) target = $region44
        $region43: #{tpu_custom_call.1} parent=11 // pred_region
          _
        $region44: #{tpu_custom_call.1} parent=11 // pred_fallthru
          _
        // Predicated region
        $region45: #{tpu_custom_call.1} parent=11 // pred_check
          %p501 = pneg %p316
        $region46: #{tpu_custom_call.1} parent=11 // pred_check_branch
          %503 = sbr.rel (%p501) target = $region48
        $region47: #{tpu_custom_call.1} parent=11 // pred_region
          %s505 = ssub.s32 48, 48
          %506 = vsyncadd [#allocation13], %s505
          %s507 = sshll.u32 [#allocation12], 4
          %s508 = int_to_ptr.vmem [resolvable:$true] %s507
          %513 = dma.hbm_to_vmem [thread:$0]  %s11, 48, %s508, [#allocation13], 16, 16, 1
        $region48: #{tpu_custom_call.1} parent=11 // pred_fallthru
          _
        // Predicated region
        $region49: #{tpu_custom_call.1} parent=11 // pred_check
          %p514 = pneg %p337
        $region50: #{tpu_custom_call.1} parent=11 // pred_check_branch
          %516 = sbr.rel (%p514) target = $region52
        $region51: #{tpu_custom_call.1} parent=11 // pred_region
          _
        $region52: #{tpu_custom_call.1} parent=11 // pred_fallthru
          _
        // Predicated region
        $region53: #{tpu_custom_call.1} parent=11 // pred_check
          %p517 = pneg %p358
        $region54: #{tpu_custom_call.1} parent=11 // pred_check_branch
          %519 = sbr.rel (%p517) target = $region56
        $region55: #{tpu_custom_call.1} parent=11 // pred_region
          _
        $region56: #{tpu_custom_call.1} parent=11 // pred_fallthru
          _
        // Predicated region
        $region57: #{tpu_custom_call.1} parent=11 // pred_check
          %p520 = pneg %p379
        $region58: #{tpu_custom_call.1} parent=11 // pred_check_branch
          %522 = sbr.rel (%p520) target = $region60
        $region59: #{tpu_custom_call.1} parent=11 // pred_region
          _
        $region60: #{tpu_custom_call.1} parent=11 // pred_fallthru
          _
        // Predicated region
        $region61: #{tpu_custom_call.1} parent=11 // pred_check
          %p523 = pneg %p400
        $region62: #{tpu_custom_call.1} parent=11 // pred_check_branch
          %525 = sbr.rel (%p523) target = $region64
        $region63: #{tpu_custom_call.1} parent=11 // pred_region
          _
        $region64: #{tpu_custom_call.1} parent=11 // pred_fallthru
          _
      $region12: #{tpu_custom_call.1} parent=5 // pred_fallthru
        _
      %p526 = scmp.lt.s32.totalorder %s31, 4
      // Predicated region
      $region65: #{tpu_custom_call.1} parent=5 // pred_check
        %p527 = pneg %p526
      $region66: #{tpu_custom_call.1} parent=5 // pred_check_branch
        %529 = sbr.rel (%p527) target = $region68
      $region67: #{tpu_custom_call.1} parent=5 // pred_region
        // Predicated region
        $region69: #{tpu_custom_call.1} parent=67 // pred_check
          %p530 = pneg %p65
        $region70: #{tpu_custom_call.1} parent=67 // pred_check_branch
          %532 = sbr.rel (%p530) target = $region72
        $region71: #{tpu_custom_call.1} parent=67 // pred_region
          %p533 = scmp.lt.s32.totalorder %s38, 1
          %s534 = scalar_select %p533, %s38, 1
          %p535 = scmp.lt.s32.totalorder %s39, 1
          %s536 = scalar_select %p535, %s39, 1
          %s537 = smul.addr %s534, 2
          %s538 = sadd.s32 %s536, %s537
          %s539 = smul.addr %s538, 4
          %s540 = scalar_lea.vmem %s0, %s539
        $region72: #{tpu_custom_call.1} parent=67 // pred_fallthru
          _
        // Predicated region
        $region73: #{tpu_custom_call.1} parent=67 // pred_check
          %p541 = pneg %p93
        $region74: #{tpu_custom_call.1} parent=67 // pred_check_branch
          %543 = sbr.rel (%p541) target = $region76
        $region75: #{tpu_custom_call.1} parent=67 // pred_region
          %p544 = scmp.lt.s32.totalorder %s38, 1
          %s545 = scalar_select %p544, %s38, 1
          %p546 = scmp.lt.s32.totalorder %s39, 1
          %s547 = scalar_select %p546, %s39, 1
          %s548 = smul.addr %s545, 2
          %s549 = sadd.s32 %s547, %s548
          %s550 = smul.addr %s549, 8
          %s551 = scalar_lea.vmem %s1, %s550
        $region76: #{tpu_custom_call.1} parent=67 // pred_fallthru
          _
        // Predicated region
        $region77: #{tpu_custom_call.1} parent=67 // pred_check
          %p552 = pneg %p121
        $region78: #{tpu_custom_call.1} parent=67 // pred_check_branch
          %554 = sbr.rel (%p552) target = $region80
        $region79: #{tpu_custom_call.1} parent=67 // pred_region
          %s555 = sand.u32 %s111, 1
          %s556 = scalar_lea.sflag [#allocation4], %s555
          %s557 = sand.u32 %s111, 1
          %s558 = scalar_lea.vmem [#allocation3], %s557
          %s560 = ssub.s32 16, 16
          %561 = vsyncadd %s556, %s560
          %s562 = smul.addr %s38, 2
          %s563 = sadd.s32 %s39, %s562
          %s564 = smul.addr %s563, 16
          %s565 = scalar_lea.hbm %s2, %s564
          %s567 = sshll.u32 %s558, 4
          %s568 = int_to_ptr.vmem [resolvable:$true] %s567
          %570 = dma.hbm_to_vmem [thread:$0]  %s565, 16, %s568, %s556
        $region80: #{tpu_custom_call.1} parent=67 // pred_fallthru
          _
      $region68: #{tpu_custom_call.1} parent=5 // pred_fallthru
        _
      %p571 = scmp.le.s32.totalorder 1, %s31
      %p572 = scmp.lt.s32.totalorder %s31, 5
      %p573 = pnand %p571, %p572
      %p574 = pneg %p573
      // Predicated region
      $region81: #{tpu_custom_call.1} parent=5 // pred_check
        _
      $region82: #{tpu_custom_call.1} parent=5 // pred_check_branch
        %576 = sbr.rel (%p573) target = $region84
      $region83: #{tpu_custom_call.1} parent=5 // pred_region
        %s577 = ssub.s32 %s31, 1
        %s578 = sand.u32 %s114, 1
        %s579 = scalar_lea.sflag [#allocation4], %s578
        %s580 = sand.u32 %s114, 1
        %s581 = scalar_lea.vmem [#allocation3], %s580
        // Predicated region
        $region85: #{tpu_custom_call.1} parent=83 // pred_check
          %p582 = pneg %p127
        $region86: #{tpu_custom_call.1} parent=83 // pred_check_branch
          %584 = sbr.rel (%p582) target = $region88
        $region87: #{tpu_custom_call.1} parent=83 // pred_region
          %585 = dma.done %s579, 16
        $region88: #{tpu_custom_call.1} parent=83 // pred_fallthru
          _
        // Predicated region
        $region89: #{tpu_custom_call.1} parent=83 // pred_check
          %p586 = pneg %p148
        $region90: #{tpu_custom_call.1} parent=83 // pred_check_branch
          %588 = sbr.rel (%p586) target = $region92
        $region91: #{tpu_custom_call.1} parent=83 // pred_region
          %589 = dma.done [#allocation7], 256
        $region92: #{tpu_custom_call.1} parent=83 // pred_fallthru
          _
        // Predicated region
        $region93: #{tpu_custom_call.1} parent=83 // pred_check
          %p590 = pneg %p169
        $region94: #{tpu_custom_call.1} parent=83 // pred_check_branch
          %592 = sbr.rel (%p590) target = $region96
        $region95: #{tpu_custom_call.1} parent=83 // pred_region
          %593 = dma.done [#allocation7], 16
        $region96: #{tpu_custom_call.1} parent=83 // pred_fallthru
          _
        // Predicated region
        $region97: #{tpu_custom_call.1} parent=83 // pred_check
          %p594 = pneg %p190
        $region98: #{tpu_custom_call.1} parent=83 // pred_check_branch
          %596 = sbr.rel (%p594) target = $region100
        $region99: #{tpu_custom_call.1} parent=83 // pred_region
          %597 = dma.done [#allocation10], 16
        $region100: #{tpu_custom_call.1} parent=83 // pred_fallthru
          _
        // Predicated region
        $region101: #{tpu_custom_call.1} parent=83 // pred_check
          %p598 = pneg %p274
        $region102: #{tpu_custom_call.1} parent=83 // pred_check_branch
          %600 = sbr.rel (%p598) target = $region104
        $region103: #{tpu_custom_call.1} parent=83 // pred_region
          %601 = dma.done [#allocation10], 48
        $region104: #{tpu_custom_call.1} parent=83 // pred_fallthru
          _
        // Predicated region
        $region105: #{tpu_custom_call.1} parent=83 // pred_check
          %p602 = pneg %p316
        $region106: #{tpu_custom_call.1} parent=83 // pred_check_branch
          %604 = sbr.rel (%p602) target = $region108
        $region107: #{tpu_custom_call.1} parent=83 // pred_region
          %605 = dma.done [#allocation13], 48
        $region108: #{tpu_custom_call.1} parent=83 // pred_fallthru
          _
        %p606 = scmp.lt.s32.totalorder %s40, 1
        %s607 = scalar_select %p606, %s40, 1
        %p608 = scmp.lt.s32.totalorder %s41, 1
        %s609 = scalar_select %p608, %s41, 1
        %s610 = smul.addr %s607, 2
        %s611 = sadd.s32 %s609, %s610
        %s612 = smul.addr %s611, 4
        %s613 = scalar_lea.vmem %s0, %s612
        %p614 = pneg %p71
        %p615 = pneg %p68
        %p616 = scmp.lt.s32.totalorder %s40, 1
        %s617 = scalar_select %p616, %s40, 1
        %p618 = scmp.lt.s32.totalorder %s41, 1
        %s619 = scalar_select %p618, %s41, 1
        %s620 = smul.addr %s617, 2
        %s621 = sadd.s32 %s619, %s620
        %s622 = smul.addr %s621, 8
        %s623 = scalar_lea.vmem %s1, %s622
        %p624 = pneg %p99
        %p625 = pneg %p96
        %s626 = sand.u32 %s114, 1
        %s627 = scalar_lea.sflag [#allocation4], %s626
        %s628 = sand.u32 %s114, 1
        %s629 = scalar_lea.vmem [#allocation3], %s628
        %p630 = pneg %p127
        %p631 = pneg %p124
        %p632 = pneg %p148
        %p633 = pneg %p145
        %p634 = pneg %p169
        %p635 = pneg %p166
        %p636 = pneg %p190
        %p637 = pneg %p187
        %p638 = pneg %p211
        %p639 = pneg %p208
        %p640 = pneg %p232
        %p641 = pneg %p229
        %p642 = pneg %p253
        %p643 = pneg %p250
        %p644 = pneg %p274
        %p645 = pneg %p271
        %p646 = pneg %p295
        %p647 = pneg %p292
        %p648 = pneg %p316
        %p649 = pneg %p313
        %p650 = pneg %p337
        %p651 = pneg %p334
        %p652 = pneg %p358
        %p653 = pneg %p355
        %p654 = pneg %p379
        %p655 = pneg %p376
        %p656 = pneg %p400
        %p657 = pneg %p397
        %p658 = pneg %p426
        %p659 = pneg %p423
        %s660 = sand.u32 %s413, 1
        %s661 = scalar_lea.sflag [#allocation5], %s660
        %s662 = sand.u32 %s413, 1
        %s663 = scalar_lea.vmem [#allocation14], %s662
        %p664 = scmp.lt.s32.totalorder %s40, 1
        %s665 = scalar_select %p664, %s40, 1
        %p666 = scmp.lt.s32.totalorder %s41, 1
        %s667 = scalar_select %p666, %s41, 1
        %s668 = smul.addr %s665, 2
        %s669 = sadd.s32 %s667, %s668
        %s670 = smul.addr %s669, 4
        %s671 = scalar_lea.vmem %s0, %s670
        %p672 = scmp.lt.s32.totalorder %s40, 1
        %s673 = scalar_select %p672, %s40, 1
        %p674 = scmp.lt.s32.totalorder %s41, 1
        %s675 = scalar_select %p674, %s41, 1
        %s676 = smul.addr %s673, 2
        %s677 = sadd.s32 %s675, %s676
        %s678 = smul.addr %s677, 8
        %s679 = scalar_lea.vmem %s1, %s678
        %p681 = scmp.eq.s32.totalorder %s41, 0
        // Predicated region
        $region109: #{tpu_custom_call.1} parent=83 // pred_check
          %p682 = pneg %p681
        $region110: #{tpu_custom_call.1} parent=83 // pred_check_branch
          %684 = sbr.rel (%p682) target = $region112
        $region111: #{tpu_custom_call.1} parent=83 // pred_region
          %vm685 = vcmask 253952
          %686 = vst.msk [vmem:[%s663] sm:$0x1] %vm685, 0.0
          %vm687 = vcmask 0
          %688 = vst.msk [vmem:[#allocation2] sm:$0x1] %vm687, 0.0
        $region112: #{tpu_custom_call.1} parent=83 // pred_fallthru
          _
        %v689 = vld [vmem:[%s671] sm:$0xf]
        %v690 = vld [vmem:[%s679] sm:$0xff]
        %v691 = vld [vmem:[%s581] sm:$0x1]
        %v692 = vld [vmem:[#allocation6] sm:$0xf]
        %v693 = vld [vmem:[#allocation6 + $0x4] sm:$0xf]
        %v694 = vld [vmem:[#allocation6 + $0x8] sm:$0xf]
        %v695 = vld [vmem:[#allocation6 + $0xc] sm:$0xf]
        %v700 = vunpack.c.l.b16 %v692
        %v701 = vunpack.c.l.b16 %v693
        %v702 = vunpack.c.l.b16 %v694
        %v703 = vunpack.c.l.b16 %v695
        %v704 = vpack.c.b16 %v701, %v700
        %v705 = vpack.c.b16 %v703, %v702
        %vm708 = vcmask 261120
        %v710 = vsel %vm708, %v689, 0
        %712 = vmatprep.subr.bf16.mxu0 0
        %713 = vmatpush1.bf16.msra.mxu0 %v704
        %714 = vmatprep.subr.bf16.mxu0 0
        %715 = vmatpush1.bf16.msra.mxu0 %v705
        %716 = vmatprep.subr.bf16.mxu0 0
        %717 = vmatpush1.bf16.msra.mxu0 0
        %718 = vmatprep.subr.bf16.mxu0 0
        %719 = vmatpush1.bf16.msra.mxu0 0
        %720 = vmatprep.subr.bf16.mxu0 0
        %721 = vmatpush1.bf16.msra.mxu0 0
        %722 = vmatprep.subr.bf16.mxu0 0
        %723 = vmatpush1.bf16.msra.mxu0 0
        %724 = vmatprep.subr.bf16.mxu0 0
        %725 = vmatpush1.bf16.msra.mxu0 0
        %726 = vmatprep.subr.bf16.mxu0 0
        %727 = vmatpush1.bf16.msra.mxu0 0
        %728 = vmatprep.subr.bf16.mxu0 0
        %729 = vmatpush1.bf16.msra.mxu0 0
        %730 = vmatprep.subr.bf16.mxu0 0
        %731 = vmatpush1.bf16.msra.mxu0 0
        %732 = vmatprep.subr.bf16.mxu0 0
        %733 = vmatpush1.bf16.msra.mxu0 0
        %734 = vmatprep.subr.bf16.mxu0 0
        %735 = vmatpush1.bf16.msra.mxu0 0
        %736 = vmatprep.subr.bf16.mxu0 0
        %737 = vmatpush1.bf16.msra.mxu0 0
        %738 = vmatprep.subr.bf16.mxu0 0
        %739 = vmatpush1.bf16.msra.mxu0 0
        %740 = vmatprep.subr.bf16.mxu0 0
        %741 = vmatpush1.bf16.msra.mxu0 0
        %742 = vmatprep.subr.bf16.mxu0 0
        %743 = vmatpush1.bf16.msra.mxu0 0
        %744 = vmatprep.mubr.bf16.mxu0 0
        %745 = vmatmul.mubr.bf16.gmra.mrb[0].mxu0 %v710
        %v746 = vpop.f32.mrb[0].mxu0
        %v747 = vadd.f32 0.0, %v746
        %v748 = vpop.f32.mrb[0].mxu0
        %v749 = vpop.f32.mrb[0].mxu0
        %v750 = vpop.f32.mrb[0].mxu0
        %751 = vdwg.mxu0
        %v752 = vld [vmem:[#allocation8] sm:$0x1]
        %754 = vset.pattern.permute.xlu0 0
        %755 = vperm.xlu0 %754, %v690
        %v756 = vpop.permute.xlu0 %755
        %v759 = vlaneseq
        %v760 = vshrl.u32 %v759, 7
        %v761 = vsub.s32 0, %v760
        %v762 = vrot.slane %v752, %v761
        %v764 = vmul.f32 %v756, %v762
        %v765 = vadd.f32 %v747, %v764
        %v766 = vld [vmem:[#allocation9] sm:$0x1]
        %v768 = vlaneseq
        %v769 = vshrl.u32 %v768, 7
        %v770 = vsub.s32 0, %v769
        %v771 = vrot.slane %v766, %v770
        %v773 = vadd.f32 %v765, %v771
        %vm774 = vcmask 57344
        %v775 = vsel %vm774, %v691, 0.0
        %776 = vadd.xlane.f32.xlu0 %v775
        %v777 = vpop.xlane.xlu0 %776
        %vm778 = vcmp.ge.f32.partialorder %v777, 8.0
        %v779 = vsel %vm778, 1, 0
        %v780 = vlaneseq
        %v781 = vshrl.u32 %v780, 7
        %v782 = vsub.s32 0, %v781
        %v783 = vrot.slane %v779, %v782
        %vm784 = vcmp.eq.s32.totalorder %v783, 1
        %v785 = vsel %vm784, 0.0, %v773
        %v786 = vmul.f32 %v691, -1e+09
        loop: start=0, step=1, limit=3
        $region113: #{tpu_custom_call.1} parent=83 // loop_pre_header
          _
        $region114: #{tpu_custom_call.1} parent=83 // loop_header
          %s788 = sphi 0, %s792
          %p789 = scmp.ge.s32.totalorder %s788, 3
          %v793 = vphi %v785, %v1615
        $region115: #{tpu_custom_call.1} parent=83 // loop_header_branch
          %791 = sbr.rel (%p789) target = $region119
        $region116: #{tpu_custom_call.1} parent=83 // loop_body
          %s794 = smul.u32 %s788, 4
          %s795 = smul.addr %s794, 4
          %s796 = scalar_lea.vmem %s6, %s795
          %v797 = vld [vmem:[%s796] sm:$0xf]
          %v798 = vld [vmem:[%s796 + $0x4] sm:$0xf]
          %v799 = vld [vmem:[%s796 + $0x8] sm:$0xf]
          %v800 = vld [vmem:[%s796 + $0xc] sm:$0xf]
          %v801 = vpack.c.bf16 %v793, %v793
          %v806 = vunpack.c.l.b16 %v797
          %v807 = vunpack.c.l.b16 %v798
          %v808 = vunpack.c.l.b16 %v799
          %v809 = vunpack.c.l.b16 %v800
          %v810 = vpack.c.b16 %v807, %v806
          %v811 = vpack.c.b16 %v809, %v808
          %v815 = vsel %vm708, %v801, 0
          %817 = vmatprep.subr.bf16.mxu0 0
          %818 = vmatpush1.bf16.msra.mxu0 %v810
          %819 = vmatprep.subr.bf16.mxu0 0
          %820 = vmatpush1.bf16.msra.mxu0 %v811
          %821 = vmatprep.subr.bf16.mxu0 0
          %822 = vmatpush1.bf16.msra.mxu0 0
          %823 = vmatprep.subr.bf16.mxu0 0
          %824 = vmatpush1.bf16.msra.mxu0 0
          %825 = vmatprep.subr.bf16.mxu0 0
          %826 = vmatpush1.bf16.msra.mxu0 0
          %827 = vmatprep.subr.bf16.mxu0 0
          %828 = vmatpush1.bf16.msra.mxu0 0
          %829 = vmatprep.subr.bf16.mxu0 0
          %830 = vmatpush1.bf16.msra.mxu0 0
          %831 = vmatprep.subr.bf16.mxu0 0
          %832 = vmatpush1.bf16.msra.mxu0 0
          %833 = vmatprep.subr.bf16.mxu0 0
          %834 = vmatpush1.bf16.msra.mxu0 0
          %835 = vmatprep.subr.bf16.mxu0 0
          %836 = vmatpush1.bf16.msra.mxu0 0
          %837 = vmatprep.subr.bf16.mxu0 0
          %838 = vmatpush1.bf16.msra.mxu0 0
          %839 = vmatprep.subr.bf16.mxu0 0
          %840 = vmatpush1.bf16.msra.mxu0 0
          %841 = vmatprep.subr.bf16.mxu0 0
          %842 = vmatpush1.bf16.msra.mxu0 0
          %843 = vmatprep.subr.bf16.mxu0 0
          %844 = vmatpush1.bf16.msra.mxu0 0
          %845 = vmatprep.subr.bf16.mxu0 0
          %846 = vmatpush1.bf16.msra.mxu0 0
          %847 = vmatprep.subr.bf16.mxu0 0
          %848 = vmatpush1.bf16.msra.mxu0 0
          %849 = vmatprep.mubr.bf16.mxu0 0
          %850 = vmatmul.mubr.bf16.gmra.mrb[0].mxu0 %v815
          %v851 = vpop.f32.mrb[0].mxu0
          %v852 = vadd.f32 0.0, %v851
          %v853 = vpop.f32.mrb[0].mxu0
          %v854 = vpop.f32.mrb[0].mxu0
          %v855 = vpop.f32.mrb[0].mxu0
          %856 = vdwg.mxu0
          %s857 = scalar_lea.vmem %s7, %s788
          %v858 = vld [vmem:[%s857] sm:$0x1]
          %v860 = vlaneseq
          %v861 = vshrl.u32 %v860, 7
          %v862 = vsub.s32 0, %v861
          %v863 = vrot.slane %v858, %v862
          %v865 = vadd.f32 %v852, %v863
          %v866 = vmul.f32 %v865, 0.35355338
          %v867 = vpack.c.bf16 %v866, %v866
          %v868 = vpack.c.bf16 %v865, %v865
          %v870 = vlaneseq
          %v871 = vshrl.u32 %v870, 7
          %v872 = vsub.s32 0, %v871
          %v873 = vrot.slane %v786, %v872
          %876 = vrot.lane.b32.xlu0 %v868, 96
          %v877 = vpop.permute.xlu0 %876
          %vm878 = vcmask 64512
          %v880 = vsel %vm878, %v867, 0
          %v883 = vsel %vm878, %v877, 0
          %885 = vmatprep.subr.bf16.mxu0 0
          %886 = vmatpush1.bf16.xpose.msra.mxu0 %v883
          %887 = vmatprep.subr.bf16.mxu0 0
          %888 = vmatpush1.bf16.xpose.msra.mxu0 0
          %889 = vmatprep.subr.bf16.mxu0 0
          %890 = vmatpush1.bf16.xpose.msra.mxu0 0
          %891 = vmatprep.subr.bf16.mxu0 0
          %892 = vmatpush1.bf16.xpose.msra.mxu0 0
          %893 = vmatprep.subr.bf16.mxu0 0
          %894 = vmatpush1.bf16.xpose.msra.mxu0 0
          %895 = vmatprep.subr.bf16.mxu0 0
          %896 = vmatpush1.bf16.xpose.msra.mxu0 0
          %897 = vmatprep.subr.bf16.mxu0 0
          %898 = vmatpush1.bf16.xpose.msra.mxu0 0
          %899 = vmatprep.subr.bf16.mxu0 0
          %900 = vmatpush1.bf16.xpose.msra.mxu0 0
          %901 = vmatprep.subr.bf16.mxu0 0
          %902 = vmatpush1.bf16.xpose.msra.mxu0 0
          %903 = vmatprep.subr.bf16.mxu0 0
          %904 = vmatpush1.bf16.xpose.msra.mxu0 0
          %905 = vmatprep.subr.bf16.mxu0 0
          %906 = vmatpush1.bf16.xpose.msra.mxu0 0
          %907 = vmatprep.subr.bf16.mxu0 0
          %908 = vmatpush1.bf16.xpose.msra.mxu0 0
          %909 = vmatprep.subr.bf16.mxu0 0
          %910 = vmatpush1.bf16.xpose.msra.mxu0 0
          %911 = vmatprep.subr.bf16.mxu0 0
          %912 = vmatpush1.bf16.xpose.msra.mxu0 0
          %913 = vmatprep.subr.bf16.mxu0 0
          %914 = vmatpush1.bf16.xpose.msra.mxu0 0
          %915 = vmatprep.subr.bf16.mxu0 0
          %916 = vmatpush1.bf16.xpose.msra.mxu0 0
          %917 = vmatprep.mubr.bf16.mxu0 0
          %918 = vmatmul.mubr.bf16.gmra.mrb[0].mxu0 %v880
          %v919 = vpop.f32.mrb[0].mxu0
          %v920 = vadd.f32 %v873, %v919
          %v921 = vpop.f32.mrb[0].mxu0
          %v922 = vpop.f32.mrb[0].mxu0
          %v923 = vpop.f32.mrb[0].mxu0
          %924 = vdwg.mxu0
          %v925 = vsel %vm878, %v920, -inf
          %926 = vmax.xlane.f32.xlu0 %v925
          %v927 = vpop.xlane.xlu0 %926
          %v928 = vsub.f32 %v920, %v927
          %v929 = vmul.f32 %v928, 1.442695
          %v930 = vpow.pop %v929
          %v931 = vsel %vm878, %v930, 0.0
          %932 = vadd.xlane.f32.xlu0 %v931
          %v933 = vpop.xlane.xlu0 %932
          %v934 = vrcp.pop %v933
          %v935 = vmul.f32 %v930, %v934
          %v936 = vpack.c.bf16 %v935, %v935
          %937 = vrot.lane.b32.xlu0 %v868, 64
          %v938 = vpop.permute.xlu0 %937
          %v940 = vsel %vm878, %v936, 0
          %vm942 = vcmask 1043456
          %v944 = vsel %vm942, %v938, 0
          %946 = vmatprep.subr.bf16.mxu0 0
          %947 = vmatpush1.bf16.msra.mxu0 %v944
          %948 = vmatprep.subr.bf16.mxu0 0
          %949 = vmatpush1.bf16.msra.mxu0 0
          %950 = vmatprep.subr.bf16.mxu0 0
          %951 = vmatpush1.bf16.msra.mxu0 0
          %952 = vmatprep.subr.bf16.mxu0 0
          %953 = vmatpush1.bf16.msra.mxu0 0
          %954 = vmatprep.subr.bf16.mxu0 0
          %955 = vmatpush1.bf16.msra.mxu0 0
          %956 = vmatprep.subr.bf16.mxu0 0
          %957 = vmatpush1.bf16.msra.mxu0 0
          %958 = vmatprep.subr.bf16.mxu0 0
          %959 = vmatpush1.bf16.msra.mxu0 0
          %960 = vmatprep.subr.bf16.mxu0 0
          %961 = vmatpush1.bf16.msra.mxu0 0
          %962 = vmatprep.subr.bf16.mxu0 0
          %963 = vmatpush1.bf16.msra.mxu0 0
          %964 = vmatprep.subr.bf16.mxu0 0
          %965 = vmatpush1.bf16.msra.mxu0 0
          %966 = vmatprep.subr.bf16.mxu0 0
          %967 = vmatpush1.bf16.msra.mxu0 0
          %968 = vmatprep.subr.bf16.mxu0 0
          %969 = vmatpush1.bf16.msra.mxu0 0
          %970 = vmatprep.subr.bf16.mxu0 0
          %971 = vmatpush1.bf16.msra.mxu0 0
          %972 = vmatprep.subr.bf16.mxu0 0
          %973 = vmatpush1.bf16.msra.mxu0 0
          %974 = vmatprep.subr.bf16.mxu0 0
          %975 = vmatpush1.bf16.msra.mxu0 0
          %976 = vmatprep.subr.bf16.mxu0 0
          %977 = vmatpush1.bf16.msra.mxu0 0
          %978 = vmatprep.mubr.bf16.mxu0 0
          %979 = vmatmul.mubr.bf16.gmra.mrb[0].mxu0 %v940
          %v980 = vpop.f32.mrb[0].mxu0
          %v981 = vadd.f32 0.0, %v980
          %v982 = vpop.f32.mrb[0].mxu0
          %v983 = vpop.f32.mrb[0].mxu0
          %v984 = vpop.f32.mrb[0].mxu0
          %985 = vdwg.mxu0
          %987 = vrot.lane.b32.xlu0 %v867, 120
          %v988 = vpop.permute.xlu0 %987
          %989 = vrot.lane.b32.xlu0 %v868, 88
          %v990 = vpop.permute.xlu0 %989
          %v992 = vsel %vm878, %v988, 0
          %v995 = vsel %vm878, %v990, 0
          %997 = vmatprep.subr.bf16.mxu0 0
          %998 = vmatpush1.bf16.xpose.msra.mxu0 %v995
          %999 = vmatprep.subr.bf16.mxu0 0
          %1000 = vmatpush1.bf16.xpose.msra.mxu0 0
          %1001 = vmatprep.subr.bf16.mxu0 0
          %1002 = vmatpush1.bf16.xpose.msra.mxu0 0
          %1003 = vmatprep.subr.bf16.mxu0 0
          %1004 = vmatpush1.bf16.xpose.msra.mxu0 0
          %1005 = vmatprep.subr.bf16.mxu0 0
          %1006 = vmatpush1.bf16.xpose.msra.mxu0 0
          %1007 = vmatprep.subr.bf16.mxu0 0
          %1008 = vmatpush1.bf16.xpose.msra.mxu0 0
          %1009 = vmatprep.subr.bf16.mxu0 0
          %1010 = vmatpush1.bf16.xpose.msra.mxu0 0
          %1011 = vmatprep.subr.bf16.mxu0 0
          %1012 = vmatpush1.bf16.xpose.msra.mxu0 0
          %1013 = vmatprep.subr.bf16.mxu0 0
          %1014 = vmatpush1.bf16.xpose.msra.mxu0 0
          %1015 = vmatprep.subr.bf16.mxu0 0
          %1016 = vmatpush1.bf16.xpose.msra.mxu0 0
          %1017 = vmatprep.subr.bf16.mxu0 0
          %1018 = vmatpush1.bf16.xpose.msra.mxu0 0
          %1019 = vmatprep.subr.bf16.mxu0 0
          %1020 = vmatpush1.bf16.xpose.msra.mxu0 0
          %1021 = vmatprep.subr.bf16.mxu0 0
          %1022 = vmatpush1.bf16.xpose.msra.mxu0 0
          %1023 = vmatprep.subr.bf16.mxu0 0
          %1024 = vmatpush1.bf16.xpose.msra.mxu0 0
          %1025 = vmatprep.subr.bf16.mxu0 0
          %1026 = vmatpush1.bf16.xpose.msra.mxu0 0
          %1027 = vmatprep.subr.bf16.mxu0 0
          %1028 = vmatpush1.bf16.xpose.msra.mxu0 0
          %1029 = vmatprep.mubr.bf16.mxu0 0
          %1030 = vmatmul.mubr.bf16.gmra.mrb[0].mxu0 %v992
          %v1031 = vpop.f32.mrb[0].mxu0
          %v1032 = vadd.f32 %v873, %v1031
          %v1033 = vpop.f32.mrb[0].mxu0
          %v1034 = vpop.f32.mrb[0].mxu0
          %v1035 = vpop.f32.mrb[0].mxu0
          %1036 = vdwg.mxu0
          %v1037 = vsel %vm878, %v1032, -inf
          %1038 = vmax.xlane.f32.xlu0 %v1037
          %v1039 = vpop.xlane.xlu0 %1038
          %v1040 = vsub.f32 %v1032, %v1039
          %v1041 = vmul.f32 %v1040, 1.442695
          %v1042 = vpow.pop %v1041
          %v1043 = vsel %vm878, %v1042, 0.0
          %1044 = vadd.xlane.f32.xlu0 %v1043
          %v1045 = vpop.xlane.xlu0 %1044
          %v1046 = vrcp.pop %v1045
          %v1047 = vmul.f32 %v1042, %v1046
          %v1048 = vpack.c.bf16 %v1047, %v1047
          %1049 = vrot.lane.b32.xlu0 %v868, 56
          %v1050 = vpop.permute.xlu0 %1049
          %v1052 = vsel %vm878, %v1048, 0
          %v1055 = vsel %vm942, %v1050, 0
          %1057 = vmatprep.subr.bf16.mxu0 0
          %1058 = vmatpush1.bf16.msra.mxu0 %v1055
          %1059 = vmatprep.subr.bf16.mxu0 0
          %1060 = vmatpush1.bf16.msra.mxu0 0
          %1061 = vmatprep.subr.bf16.mxu0 0
          %1062 = vmatpush1.bf16.msra.mxu0 0
          %1063 = vmatprep.subr.bf16.mxu0 0
          %1064 = vmatpush1.bf16.msra.mxu0 0
          %1065 = vmatprep.subr.bf16.mxu0 0
          %1066 = vmatpush1.bf16.msra.mxu0 0
          %1067 = vmatprep.subr.bf16.mxu0 0
          %1068 = vmatpush1.bf16.msra.mxu0 0
          %1069 = vmatprep.subr.bf16.mxu0 0
          %1070 = vmatpush1.bf16.msra.mxu0 0
          %1071 = vmatprep.subr.bf16.mxu0 0
          %1072 = vmatpush1.bf16.msra.mxu0 0
          %1073 = vmatprep.subr.bf16.mxu0 0
          %1074 = vmatpush1.bf16.msra.mxu0 0
          %1075 = vmatprep.subr.bf16.mxu0 0
          %1076 = vmatpush1.bf16.msra.mxu0 0
          %1077 = vmatprep.subr.bf16.mxu0 0
          %1078 = vmatpush1.bf16.msra.mxu0 0
          %1079 = vmatprep.subr.bf16.mxu0 0
          %1080 = vmatpush1.bf16.msra.mxu0 0
          %1081 = vmatprep.subr.bf16.mxu0 0
          %1082 = vmatpush1.bf16.msra.mxu0 0
          %1083 = vmatprep.subr.bf16.mxu0 0
          %1084 = vmatpush1.bf16.msra.mxu0 0
          %1085 = vmatprep.subr.bf16.mxu0 0
          %1086 = vmatpush1.bf16.msra.mxu0 0
          %1087 = vmatprep.subr.bf16.mxu0 0
          %1088 = vmatpush1.bf16.msra.mxu0 0
          %1089 = vmatprep.mubr.bf16.mxu0 0
          %1090 = vmatmul.mubr.bf16.gmra.mrb[0].mxu0 %v1052
          %v1091 = vpop.f32.mrb[0].mxu0
          %v1092 = vadd.f32 0.0, %v1091
          %v1093 = vpop.f32.mrb[0].mxu0
          %v1094 = vpop.f32.mrb[0].mxu0
          %v1095 = vpop.f32.mrb[0].mxu0
          %1096 = vdwg.mxu0
          %1097 = vrot.lane.b32.xlu0 %v867, 112
          %v1098 = vpop.permute.xlu0 %1097
          %1099 = vrot.lane.b32.xlu0 %v868, 80
          %v1100 = vpop.permute.xlu0 %1099
          %v1102 = vsel %vm878, %v1098, 0
          %v1105 = vsel %vm878, %v1100, 0
          %1107 = vmatprep.subr.bf16.mxu0 0
          %1108 = vmatpush1.bf16.xpose.msra.mxu0 %v1105
          %1109 = vmatprep.subr.bf16.mxu0 0
          %1110 = vmatpush1.bf16.xpose.msra.mxu0 0
          %1111 = vmatprep.subr.bf16.mxu0 0
          %1112 = vmatpush1.bf16.xpose.msra.mxu0 0
          %1113 = vmatprep.subr.bf16.mxu0 0
          %1114 = vmatpush1.bf16.xpose.msra.mxu0 0
          %1115 = vmatprep.subr.bf16.mxu0 0
          %1116 = vmatpush1.bf16.xpose.msra.mxu0 0
          %1117 = vmatprep.subr.bf16.mxu0 0
          %1118 = vmatpush1.bf16.xpose.msra.mxu0 0
          %1119 = vmatprep.subr.bf16.mxu0 0
          %1120 = vmatpush1.bf16.xpose.msra.mxu0 0
          %1121 = vmatprep.subr.bf16.mxu0 0
          %1122 = vmatpush1.bf16.xpose.msra.mxu0 0
          %1123 = vmatprep.subr.bf16.mxu0 0
          %1124 = vmatpush1.bf16.xpose.msra.mxu0 0
          %1125 = vmatprep.subr.bf16.mxu0 0
          %1126 = vmatpush1.bf16.xpose.msra.mxu0 0
          %1127 = vmatprep.subr.bf16.mxu0 0
          %1128 = vmatpush1.bf16.xpose.msra.mxu0 0
          %1129 = vmatprep.subr.bf16.mxu0 0
          %1130 = vmatpush1.bf16.xpose.msra.mxu0 0
          %1131 = vmatprep.subr.bf16.mxu0 0
          %1132 = vmatpush1.bf16.xpose.msra.mxu0 0
          %1133 = vmatprep.subr.bf16.mxu0 0
          %1134 = vmatpush1.bf16.xpose.msra.mxu0 0
          %1135 = vmatprep.subr.bf16.mxu0 0
          %1136 = vmatpush1.bf16.xpose.msra.mxu0 0
          %1137 = vmatprep.subr.bf16.mxu0 0
          %1138 = vmatpush1.bf16.xpose.msra.mxu0 0
          %1139 = vmatprep.mubr.bf16.mxu0 0
          %1140 = vmatmul.mubr.bf16.gmra.mrb[0].mxu0 %v1102
          %v1141 = vpop.f32.mrb[0].mxu0
          %v1142 = vadd.f32 %v873, %v1141
          %v1143 = vpop.f32.mrb[0].mxu0
          %v1144 = vpop.f32.mrb[0].mxu0
          %v1145 = vpop.f32.mrb[0].mxu0
          %1146 = vdwg.mxu0
          %v1147 = vsel %vm878, %v1142, -inf
          %1148 = vmax.xlane.f32.xlu0 %v1147
          %v1149 = vpop.xlane.xlu0 %1148
          %v1150 = vsub.f32 %v1142, %v1149
          %v1151 = vmul.f32 %v1150, 1.442695
          %v1152 = vpow.pop %v1151
          %v1153 = vsel %vm878, %v1152, 0.0
          %1154 = vadd.xlane.f32.xlu0 %v1153
          %v1155 = vpop.xlane.xlu0 %1154
          %v1156 = vrcp.pop %v1155
          %v1157 = vmul.f32 %v1152, %v1156
          %v1158 = vpack.c.bf16 %v1157, %v1157
          %1159 = vrot.lane.b32.xlu0 %v868, 48
          %v1160 = vpop.permute.xlu0 %1159
          %v1162 = vsel %vm878, %v1158, 0
          %v1165 = vsel %vm942, %v1160, 0
          %1167 = vmatprep.subr.bf16.mxu0 0
          %1168 = vmatpush1.bf16.msra.mxu0 %v1165
          %1169 = vmatprep.subr.bf16.mxu0 0
          %1170 = vmatpush1.bf16.msra.mxu0 0
          %1171 = vmatprep.subr.bf16.mxu0 0
          %1172 = vmatpush1.bf16.msra.mxu0 0
          %1173 = vmatprep.subr.bf16.mxu0 0
          %1174 = vmatpush1.bf16.msra.mxu0 0
          %1175 = vmatprep.subr.bf16.mxu0 0
          %1176 = vmatpush1.bf16.msra.mxu0 0
          %1177 = vmatprep.subr.bf16.mxu0 0
          %1178 = vmatpush1.bf16.msra.mxu0 0
          %1179 = vmatprep.subr.bf16.mxu0 0
          %1180 = vmatpush1.bf16.msra.mxu0 0
          %1181 = vmatprep.subr.bf16.mxu0 0
          %1182 = vmatpush1.bf16.msra.mxu0 0
          %1183 = vmatprep.subr.bf16.mxu0 0
          %1184 = vmatpush1.bf16.msra.mxu0 0
          %1185 = vmatprep.subr.bf16.mxu0 0
          %1186 = vmatpush1.bf16.msra.mxu0 0
          %1187 = vmatprep.subr.bf16.mxu0 0
          %1188 = vmatpush1.bf16.msra.mxu0 0
          %1189 = vmatprep.subr.bf16.mxu0 0
          %1190 = vmatpush1.bf16.msra.mxu0 0
          %1191 = vmatprep.subr.bf16.mxu0 0
          %1192 = vmatpush1.bf16.msra.mxu0 0
          %1193 = vmatprep.subr.bf16.mxu0 0
          %1194 = vmatpush1.bf16.msra.mxu0 0
          %1195 = vmatprep.subr.bf16.mxu0 0
          %1196 = vmatpush1.bf16.msra.mxu0 0
          %1197 = vmatprep.subr.bf16.mxu0 0
          %1198 = vmatpush1.bf16.msra.mxu0 0
          %1199 = vmatprep.mubr.bf16.mxu0 0
          %1200 = vmatmul.mubr.bf16.gmra.mrb[0].mxu0 %v1162
          %v1201 = vpop.f32.mrb[0].mxu0
          %v1202 = vadd.f32 0.0, %v1201
          %v1203 = vpop.f32.mrb[0].mxu0
          %v1204 = vpop.f32.mrb[0].mxu0
          %v1205 = vpop.f32.mrb[0].mxu0
          %1206 = vdwg.mxu0
          %1207 = vrot.lane.b32.xlu0 %v867, 104
          %v1208 = vpop.permute.xlu0 %1207
          %1209 = vrot.lane.b32.xlu0 %v868, 72
          %v1210 = vpop.permute.xlu0 %1209
          %v1212 = vsel %vm878, %v1208, 0
          %v1215 = vsel %vm878, %v1210, 0
          %1217 = vmatprep.subr.bf16.mxu0 0
          %1218 = vmatpush1.bf16.xpose.msra.mxu0 %v1215
          %1219 = vmatprep.subr.bf16.mxu0 0
          %1220 = vmatpush1.bf16.xpose.msra.mxu0 0
          %1221 = vmatprep.subr.bf16.mxu0 0
          %1222 = vmatpush1.bf16.xpose.msra.mxu0 0
          %1223 = vmatprep.subr.bf16.mxu0 0
          %1224 = vmatpush1.bf16.xpose.msra.mxu0 0
          %1225 = vmatprep.subr.bf16.mxu0 0
          %1226 = vmatpush1.bf16.xpose.msra.mxu0 0
          %1227 = vmatprep.subr.bf16.mxu0 0
          %1228 = vmatpush1.bf16.xpose.msra.mxu0 0
          %1229 = vmatprep.subr.bf16.mxu0 0
          %1230 = vmatpush1.bf16.xpose.msra.mxu0 0
          %1231 = vmatprep.subr.bf16.mxu0 0
          %1232 = vmatpush1.bf16.xpose.msra.mxu0 0
          %1233 = vmatprep.subr.bf16.mxu0 0
          %1234 = vmatpush1.bf16.xpose.msra.mxu0 0
          %1235 = vmatprep.subr.bf16.mxu0 0
          %1236 = vmatpush1.bf16.xpose.msra.mxu0 0
          %1237 = vmatprep.subr.bf16.mxu0 0
          %1238 = vmatpush1.bf16.xpose.msra.mxu0 0
          %1239 = vmatprep.subr.bf16.mxu0 0
          %1240 = vmatpush1.bf16.xpose.msra.mxu0 0
          %1241 = vmatprep.subr.bf16.mxu0 0
          %1242 = vmatpush1.bf16.xpose.msra.mxu0 0
          %1243 = vmatprep.subr.bf16.mxu0 0
          %1244 = vmatpush1.bf16.xpose.msra.mxu0 0
          %1245 = vmatprep.subr.bf16.mxu0 0
          %1246 = vmatpush1.bf16.xpose.msra.mxu0 0
          %1247 = vmatprep.subr.bf16.mxu0 0
          %1248 = vmatpush1.bf16.xpose.msra.mxu0 0
          %1249 = vmatprep.mubr.bf16.mxu0 0
          %1250 = vmatmul.mubr.bf16.gmra.mrb[0].mxu0 %v1212
          %v1251 = vpop.f32.mrb[0].mxu0
          %v1252 = vadd.f32 %v873, %v1251
          %v1253 = vpop.f32.mrb[0].mxu0
          %v1254 = vpop.f32.mrb[0].mxu0
          %v1255 = vpop.f32.mrb[0].mxu0
          %1256 = vdwg.mxu0
          %v1257 = vsel %vm878, %v1252, -inf
          %1258 = vmax.xlane.f32.xlu0 %v1257
          %v1259 = vpop.xlane.xlu0 %1258
          %v1260 = vsub.f32 %v1252, %v1259
          %v1261 = vmul.f32 %v1260, 1.442695
          %v1262 = vpow.pop %v1261
          %v1263 = vsel %vm878, %v1262, 0.0
          %1264 = vadd.xlane.f32.xlu0 %v1263
          %v1265 = vpop.xlane.xlu0 %1264
          %v1266 = vrcp.pop %v1265
          %v1267 = vmul.f32 %v1262, %v1266
          %v1268 = vpack.c.bf16 %v1267, %v1267
          %1269 = vrot.lane.b32.xlu0 %v868, 40
          %v1270 = vpop.permute.xlu0 %1269
          %v1272 = vsel %vm878, %v1268, 0
          %v1275 = vsel %vm942, %v1270, 0
          %1277 = vmatprep.subr.bf16.mxu0 0
          %1278 = vmatpush1.bf16.msra.mxu0 %v1275
          %1279 = vmatprep.subr.bf16.mxu0 0
          %1280 = vmatpush1.bf16.msra.mxu0 0
          %1281 = vmatprep.subr.bf16.mxu0 0
          %1282 = vmatpush1.bf16.msra.mxu0 0
          %1283 = vmatprep.subr.bf16.mxu0 0
          %1284 = vmatpush1.bf16.msra.mxu0 0
          %1285 = vmatprep.subr.bf16.mxu0 0
          %1286 = vmatpush1.bf16.msra.mxu0 0
          %1287 = vmatprep.subr.bf16.mxu0 0
          %1288 = vmatpush1.bf16.msra.mxu0 0
          %1289 = vmatprep.subr.bf16.mxu0 0
          %1290 = vmatpush1.bf16.msra.mxu0 0
          %1291 = vmatprep.subr.bf16.mxu0 0
          %1292 = vmatpush1.bf16.msra.mxu0 0
          %1293 = vmatprep.subr.bf16.mxu0 0
          %1294 = vmatpush1.bf16.msra.mxu0 0
          %1295 = vmatprep.subr.bf16.mxu0 0
          %1296 = vmatpush1.bf16.msra.mxu0 0
          %1297 = vmatprep.subr.bf16.mxu0 0
          %1298 = vmatpush1.bf16.msra.mxu0 0
          %1299 = vmatprep.subr.bf16.mxu0 0
          %1300 = vmatpush1.bf16.msra.mxu0 0
          %1301 = vmatprep.subr.bf16.mxu0 0
          %1302 = vmatpush1.bf16.msra.mxu0 0
          %1303 = vmatprep.subr.bf16.mxu0 0
          %1304 = vmatpush1.bf16.msra.mxu0 0
          %1305 = vmatprep.subr.bf16.mxu0 0
          %1306 = vmatpush1.bf16.msra.mxu0 0
          %1307 = vmatprep.subr.bf16.mxu0 0
          %1308 = vmatpush1.bf16.msra.mxu0 0
          %1309 = vmatprep.mubr.bf16.mxu0 0
          %1310 = vmatmul.mubr.bf16.gmra.mrb[0].mxu0 %v1272
          %v1311 = vpop.f32.mrb[0].mxu0
          %v1312 = vadd.f32 0.0, %v1311
          %v1313 = vpop.f32.mrb[0].mxu0
          %v1314 = vpop.f32.mrb[0].mxu0
          %v1315 = vpop.f32.mrb[0].mxu0
          %1316 = vdwg.mxu0
          %1318 = vrot.lane.b32.xlu0 %v1092, 8
          %v1319 = vpop.permute.xlu0 %1318
          %1322 = vrot.lane.b32.xlu0 %v1202, 16
          %v1323 = vpop.permute.xlu0 %1322
          %1326 = vrot.lane.b32.xlu0 %v1312, 24
          %v1327 = vpop.permute.xlu0 %1326
          %v1329 = vsel %vm878, %v981, %v1319
          %vm1330 = vcmask 130048
          %v1331 = vsel %vm1330, %v1329, %v1323
          %vm1332 = vcmask 195584
          %v1333 = vsel %vm1332, %v1331, %v1327
          %s1334 = smul.addr %s794, 4
          %s1335 = scalar_lea.vmem %s8, %s1334
          %v1336 = vld [vmem:[%s1335] sm:$0xf]
          %v1337 = vld [vmem:[%s1335 + $0x4] sm:$0xf]
          %v1338 = vld [vmem:[%s1335 + $0x8] sm:$0xf]
          %v1339 = vld [vmem:[%s1335 + $0xc] sm:$0xf]
          %v1340 = vpack.c.bf16 %v1333, %v1333
          %v1345 = vunpack.c.l.b16 %v1336
          %v1346 = vunpack.c.l.b16 %v1337
          %v1347 = vunpack.c.l.b16 %v1338
          %v1348 = vunpack.c.l.b16 %v1339
          %v1349 = vpack.c.b16 %v1346, %v1345
          %v1350 = vpack.c.b16 %v1348, %v1347
          %v1354 = vsel %vm708, %v1340, 0
          %1356 = vmatprep.subr.bf16.mxu0 0
          %1357 = vmatpush1.bf16.msra.mxu0 %v1349
          %1358 = vmatprep.subr.bf16.mxu0 0
          %1359 = vmatpush1.bf16.msra.mxu0 %v1350
          %1360 = vmatprep.subr.bf16.mxu0 0
          %1361 = vmatpush1.bf16.msra.mxu0 0
          %1362 = vmatprep.subr.bf16.mxu0 0
          %1363 = vmatpush1.bf16.msra.mxu0 0
          %1364 = vmatprep.subr.bf16.mxu0 0
          %1365 = vmatpush1.bf16.msra.mxu0 0
          %1366 = vmatprep.subr.bf16.mxu0 0
          %1367 = vmatpush1.bf16.msra.mxu0 0
          %1368 = vmatprep.subr.bf16.mxu0 0
          %1369 = vmatpush1.bf16.msra.mxu0 0
          %1370 = vmatprep.subr.bf16.mxu0 0
          %1371 = vmatpush1.bf16.msra.mxu0 0
          %1372 = vmatprep.subr.bf16.mxu0 0
          %1373 = vmatpush1.bf16.msra.mxu0 0
          %1374 = vmatprep.subr.bf16.mxu0 0
          %1375 = vmatpush1.bf16.msra.mxu0 0
          %1376 = vmatprep.subr.bf16.mxu0 0
          %1377 = vmatpush1.bf16.msra.mxu0 0
          %1378 = vmatprep.subr.bf16.mxu0 0
          %1379 = vmatpush1.bf16.msra.mxu0 0
          %1380 = vmatprep.subr.bf16.mxu0 0
          %1381 = vmatpush1.bf16.msra.mxu0 0
          %1382 = vmatprep.subr.bf16.mxu0 0
          %1383 = vmatpush1.bf16.msra.mxu0 0
          %1384 = vmatprep.subr.bf16.mxu0 0
          %1385 = vmatpush1.bf16.msra.mxu0 0
          %1386 = vmatprep.subr.bf16.mxu0 0
          %1387 = vmatpush1.bf16.msra.mxu0 0
          %1388 = vmatprep.mubr.bf16.mxu0 0
          %1389 = vmatmul.mubr.bf16.gmra.mrb[0].mxu0 %v1354
          %v1390 = vpop.f32.mrb[0].mxu0
          %v1391 = vadd.f32 0.0, %v1390
          %v1392 = vpop.f32.mrb[0].mxu0
          %v1393 = vpop.f32.mrb[0].mxu0
          %v1394 = vpop.f32.mrb[0].mxu0
          %1395 = vdwg.mxu0
          %s1396 = scalar_lea.vmem [#allocation11], %s788
          %v1397 = vld [vmem:[%s1396] sm:$0x1]
          %v1399 = vlaneseq
          %v1400 = vshrl.u32 %v1399, 7
          %v1401 = vsub.s32 0, %v1400
          %v1402 = vrot.slane %v1397, %v1401
          %v1404 = vadd.f32 %v1391, %v1402
          %s1405 = scalar_lea.vmem %s14, %s794
          %v1406 = vld [vmem:[%s1405] sm:$0xf]
          %v1407 = vadd.f32 %v793, %v1404
          %v1408 = vsel %vm708, %v1407, 0.0
          %1409 = vadd.xlane.f32.xlu0 %v1408
          %v1410 = vpop.xlane.xlu0 %1409
          %v1411 = vrcp.pop 32.0
          %v1412 = vmul.f32 %v1410, %v1411
          %v1413 = vsub.f32 %v1407, %v1412
          %v1414 = vmul.f32 %v1413, %v1413
          %v1415 = vsel %vm708, %v1414, 0.0
          %1416 = vadd.xlane.f32.xlu0 %v1415
          %v1417 = vpop.xlane.xlu0 %1416
          %v1418 = vmul.f32 %v1417, %v1411
          %v1419 = vadd.f32 %v1418, 1e-05
          %v1420 = vrsqrt.pop %v1419
          %v1421 = vmul.f32 %v1413, %v1420
          %v1422 = vlaneseq
          %v1423 = vshrl.u32 %v1422, 7
          %v1424 = vsub.s32 0, %v1423
          %v1425 = vrot.slane %v1406, %v1424
          %v1426 = vmul.f32 %v1421, %v1425
          %v1427 = vlaneseq
          %v1428 = vshrl.u32 %v1427, 7
          %v1429 = vsub.s32 1, %v1428
          %v1430 = vrot.slane %v1406, %v1429
          %v1431 = vadd.f32 %v1426, %v1430
          %v1432 = vpack.c.bf16 %v1431, %v1431
          %s1433 = smul.addr %s794, 4
          %s1434 = scalar_lea.vmem %s10, %s1433
          %v1435 = vld [vmem:[%s1434] sm:$0xf]
          %v1436 = vld [vmem:[%s1434 + $0x4] sm:$0xf]
          %v1437 = vld [vmem:[%s1434 + $0x8] sm:$0xf]
          %v1438 = vld [vmem:[%s1434 + $0xc] sm:$0xf]
          %s1439 = scalar_lea.vmem [#allocation12], %s788
          %v1440 = vld [vmem:[%s1439] sm:$0x1]
          %v1442 = vlaneseq
          %v1443 = vshrl.u32 %v1442, 7
          %v1444 = vsub.s32 0, %v1443
          %v1445 = vrot.slane %v1440, %v1444
          %v1451 = vunpack.c.l.b16 %v1435
          %v1452 = vunpack.c.l.b16 %v1436
          %v1453 = vunpack.c.l.b16 %v1437
          %v1454 = vunpack.c.l.b16 %v1438
          %v1455 = vpack.c.b16 %v1452, %v1451
          %v1456 = vpack.c.b16 %v1454, %v1453
          %v1460 = vsel %vm708, %v1432, 0
          %1462 = vmatprep.subr.bf16.mxu0 0
          %1463 = vmatpush1.bf16.msra.mxu0 %v1455
          %1464 = vmatprep.subr.bf16.mxu0 0
          %1465 = vmatpush1.bf16.msra.mxu0 %v1456
          %1466 = vmatprep.subr.bf16.mxu0 0
          %1467 = vmatpush1.bf16.msra.mxu0 0
          %1468 = vmatprep.subr.bf16.mxu0 0
          %1469 = vmatpush1.bf16.msra.mxu0 0
          %1470 = vmatprep.subr.bf16.mxu0 0
          %1471 = vmatpush1.bf16.msra.mxu0 0
          %1472 = vmatprep.subr.bf16.mxu0 0
          %1473 = vmatpush1.bf16.msra.mxu0 0
          %1474 = vmatprep.subr.bf16.mxu0 0
          %1475 = vmatpush1.bf16.msra.mxu0 0
          %1476 = vmatprep.subr.bf16.mxu0 0
          %1477 = vmatpush1.bf16.msra.mxu0 0
          %1478 = vmatprep.subr.bf16.mxu0 0
          %1479 = vmatpush1.bf16.msra.mxu0 0
          %1480 = vmatprep.subr.bf16.mxu0 0
          %1481 = vmatpush1.bf16.msra.mxu0 0
          %1482 = vmatprep.subr.bf16.mxu0 0
          %1483 = vmatpush1.bf16.msra.mxu0 0
          %1484 = vmatprep.subr.bf16.mxu0 0
          %1485 = vmatpush1.bf16.msra.mxu0 0
          %1486 = vmatprep.subr.bf16.mxu0 0
          %1487 = vmatpush1.bf16.msra.mxu0 0
          %1488 = vmatprep.subr.bf16.mxu0 0
          %1489 = vmatpush1.bf16.msra.mxu0 0
          %1490 = vmatprep.subr.bf16.mxu0 0
          %1491 = vmatpush1.bf16.msra.mxu0 0
          %1492 = vmatprep.subr.bf16.mxu0 0
          %1493 = vmatpush1.bf16.msra.mxu0 0
          %1494 = vmatprep.mubr.bf16.mxu0 0
          %1495 = vmatmul.mubr.bf16.gmra.mrb[0].mxu0 %v1460
          %v1496 = vpop.f32.mrb[0].mxu0
          %v1497 = vadd.f32 %v1445, %v1496
          %v1498 = vpop.f32.mrb[0].mxu0
          %v1499 = vpop.f32.mrb[0].mxu0
          %v1500 = vpop.f32.mrb[0].mxu0
          %1501 = vdwg.mxu0
          %v1502 = vmax.f32 %v1497, 0.0
          %v1503 = vpack.c.bf16 %v1502, %v1502
          %s1504 = smul.u32 %s788, 8
          %s1505 = smul.addr %s1504, 4
          %s1506 = scalar_lea.vmem %s12, %s1505
          %v1507 = vld [vmem:[%s1506] sm:$0xf]
          %v1508 = vld [vmem:[%s1506 + $0x4] sm:$0xf]
          %v1509 = vld [vmem:[%s1506 + $0x8] sm:$0xf]
          %v1510 = vld [vmem:[%s1506 + $0xc] sm:$0xf]
          %v1511 = vld [vmem:[%s1506 + $0x10] sm:$0xf]
          %v1512 = vld [vmem:[%s1506 + $0x14] sm:$0xf]
          %v1513 = vld [vmem:[%s1506 + $0x18] sm:$0xf]
          %v1514 = vld [vmem:[%s1506 + $0x1c] sm:$0xf]
          %v1523 = vunpack.c.l.b16 %v1507
          %v1524 = vunpack.c.l.b16 %v1508
          %v1525 = vunpack.c.l.b16 %v1509
          %v1526 = vunpack.c.l.b16 %v1510
          %v1527 = vunpack.c.l.b16 %v1511
          %v1528 = vunpack.c.l.b16 %v1512
          %v1529 = vunpack.c.l.b16 %v1513
          %v1530 = vunpack.c.l.b16 %v1514
          %v1531 = vpack.c.b16 %v1524, %v1523
          %v1532 = vpack.c.b16 %v1526, %v1525
          %v1533 = vpack.c.b16 %v1528, %v1527
          %v1534 = vpack.c.b16 %v1530, %v1529
          %vm1539 = vcmask 523264
          %v1541 = vsel %vm1539, %v1503, 0
          %1543 = vmatprep.subr.bf16.mxu0 0
          %1544 = vmatpush1.bf16.msra.mxu0 %v1531
          %1545 = vmatprep.subr.bf16.mxu0 0
          %1546 = vmatpush1.bf16.msra.mxu0 %v1532
          %1547 = vmatprep.subr.bf16.mxu0 0
          %1548 = vmatpush1.bf16.msra.mxu0 %v1533
          %1549 = vmatprep.subr.bf16.mxu0 0
          %1550 = vmatpush1.bf16.msra.mxu0 %v1534
          %1551 = vmatprep.subr.bf16.mxu0 0
          %1552 = vmatpush1.bf16.msra.mxu0 0
          %1553 = vmatprep.subr.bf16.mxu0 0
          %1554 = vmatpush1.bf16.msra.mxu0 0
          %1555 = vmatprep.subr.bf16.mxu0 0
          %1556 = vmatpush1.bf16.msra.mxu0 0
          %1557 = vmatprep.subr.bf16.mxu0 0
          %1558 = vmatpush1.bf16.msra.mxu0 0
          %1559 = vmatprep.subr.bf16.mxu0 0
          %1560 = vmatpush1.bf16.msra.mxu0 0
          %1561 = vmatprep.subr.bf16.mxu0 0
          %1562 = vmatpush1.bf16.msra.mxu0 0
          %1563 = vmatprep.subr.bf16.mxu0 0
          %1564 = vmatpush1.bf16.msra.mxu0 0
          %1565 = vmatprep.subr.bf16.mxu0 0
          %1566 = vmatpush1.bf16.msra.mxu0 0
          %1567 = vmatprep.subr.bf16.mxu0 0
          %1568 = vmatpush1.bf16.msra.mxu0 0
          %1569 = vmatprep.subr.bf16.mxu0 0
          %1570 = vmatpush1.bf16.msra.mxu0 0
          %1571 = vmatprep.subr.bf16.mxu0 0
          %1572 = vmatpush1.bf16.msra.mxu0 0
          %1573 = vmatprep.subr.bf16.mxu0 0
          %1574 = vmatpush1.bf16.msra.mxu0 0
          %1575 = vmatprep.mubr.bf16.mxu0 0
          %1576 = vmatmul.mubr.bf16.gmra.mrb[0].mxu0 %v1541
          %v1577 = vpop.f32.mrb[0].mxu0
          %v1578 = vadd.f32 0.0, %v1577
          %v1579 = vpop.f32.mrb[0].mxu0
          %v1580 = vpop.f32.mrb[0].mxu0
          %v1581 = vpop.f32.mrb[0].mxu0
          %1582 = vdwg.mxu0
          %s1583 = scalar_lea.vmem %s13, %s788
          %v1584 = vld [vmem:[%s1583] sm:$0x1]
          %v1586 = vlaneseq
          %v1587 = vshrl.u32 %v1586, 7
          %v1588 = vsub.s32 0, %v1587
          %v1589 = vrot.slane %v1584, %v1588
          %v1591 = vadd.f32 %v1578, %v1589
          %v1592 = vadd.f32 %v1431, %v1591
          %v1593 = vsel %vm708, %v1592, 0.0
          %1594 = vadd.xlane.f32.xlu0 %v1593
          %v1595 = vpop.xlane.xlu0 %1594
          %v1596 = vmul.f32 %v1595, %v1411
          %v1597 = vsub.f32 %v1592, %v1596
          %v1598 = vmul.f32 %v1597, %v1597
          %v1599 = vsel %vm708, %v1598, 0.0
          %1600 = vadd.xlane.f32.xlu0 %v1599
          %v1601 = vpop.xlane.xlu0 %1600
          %v1602 = vmul.f32 %v1601, %v1411
          %v1603 = vadd.f32 %v1602, 1e-05
          %v1604 = vrsqrt.pop %v1603
          %v1605 = vmul.f32 %v1597, %v1604
          %v1606 = vlaneseq
          %v1607 = vshrl.u32 %v1606, 7
          %v1608 = vsub.s32 2, %v1607
          %v1609 = vrot.slane %v1406, %v1608
          %v1610 = vmul.f32 %v1605, %v1609
          %v1611 = vlaneseq
          %v1612 = vshrl.u32 %v1611, 7
          %v1613 = vsub.s32 3, %v1612
          %v1614 = vrot.slane %v1406, %v1613
          %v1615 = vadd.f32 %v1610, %v1614
        $region117: #{tpu_custom_call.1} parent=83 // loop_footer
          %s792 = sadd.s32 1, %s788
        $region118: #{tpu_custom_call.1} parent=83 // loop_footer_branch
          %787 = sbr.rel target = $region114
        $region119: #{tpu_custom_call.1} parent=83 // loop_exit
          _
        %v1616 = vld [vmem:[%s15] sm:$0x3]
        %v1617 = vsel %vm708, %v793, 0.0
        %1618 = vadd.xlane.f32.xlu0 %v1617
        %v1619 = vpop.xlane.xlu0 %1618
        %v1620 = vrcp.pop 32.0
        %v1621 = vmul.f32 %v1619, %v1620
        %v1622 = vsub.f32 %v793, %v1621
        %v1623 = vmul.f32 %v1622, %v1622
        %v1624 = vsel %vm708, %v1623, 0.0
        %1625 = vadd.xlane.f32.xlu0 %v1624
        %v1626 = vpop.xlane.xlu0 %1625
        %v1627 = vmul.f32 %v1626, %v1620
        %v1628 = vadd.f32 %v1627, 1e-05
        %v1629 = vrsqrt.pop %v1628
        %v1630 = vmul.f32 %v1622, %v1629
        %v1631 = vlaneseq
        %v1632 = vshrl.u32 %v1631, 7
        %v1633 = vsub.s32 0, %v1632
        %v1634 = vrot.slane %v1616, %v1633
        %v1635 = vmul.f32 %v1630, %v1634
        %v1636 = vlaneseq
        %v1637 = vshrl.u32 %v1636, 7
        %v1638 = vsub.s32 1, %v1637
        %v1639 = vrot.slane %v1616, %v1638
        %v1640 = vadd.f32 %v1635, %v1639
        %v1641 = vsel %vm784, 1e-05, %v1640
        %v1642 = vld [vmem:[%s663] sm:$0x1]
        %v1643 = vsel %vm708, %v1641, 0.0
        %v1644 = vrot.slane %v1643, 4
        %v1645 = vadd.f32 %v1643, %v1644
        %v1646 = vrot.slane %v1645, 2
        %v1647 = vadd.f32 %v1645, %v1646
        %v1648 = vrot.slane %v1647, 1
        %v1649 = vadd.f32 %v1647, %v1648
        %v1650 = vadd.f32 %v1642, %v1649
        %vm1651 = vcmask 253952
        %1652 = vst.msk [vmem:[%s663] sm:$0x1] %vm1651, %v1650
        %v1653 = vld [vmem:[#allocation2] sm:$0x1]
        %v1654 = vsub.f32 1.0, %v691
        %v1655 = vsel %vm774, %v1654, 0.0
        %1656 = vadd.xlane.f32.xlu0 %v1655
        %v1657 = vpop.xlane.xlu0 %1656
        %v1658 = vadd.f32 %v1653, %v1657
        %vm1659 = vcmask 0
        %1660 = vst.msk [vmem:[#allocation2] sm:$0x1] %vm1659, %v1658
        %p1661 = scmp.eq.s32.totalorder %s41, 1
        // Predicated region
        $region120: #{tpu_custom_call.1} parent=83 // pred_check
          %p1662 = pneg %p1661
        $region121: #{tpu_custom_call.1} parent=83 // pred_check_branch
          %1664 = sbr.rel (%p1662) target = $region123
        $region122: #{tpu_custom_call.1} parent=83 // pred_region
          %v1665 = vld [vmem:[#allocation2] sm:$0x1]
          %v1666 = vmax.f32 %v1665, 1.0
          %v1667 = vld [vmem:[%s663] sm:$0x1]
          %1669 = vset.pattern.permute.xlu0 0
          %1670 = vperm.xlu0 %1669, %v1666
          %v1671 = vpop.permute.xlu0 %1670
          %v1673 = vlaneseq
          %v1674 = vshrl.u32 %v1673, 7
          %v1675 = vsub.s32 0, %v1674
          %v1676 = vrot.slane %v1671, %v1675
          %v1677 = vrcp.pop %v1676
          %v1678 = vmul.f32 %v1667, %v1677
          %1679 = vst.msk [vmem:[%s663] sm:$0x1] %vm1651, %v1678
        $region123: #{tpu_custom_call.1} parent=83 // pred_fallthru
          _
        %s1680 = sand.u32 %s413, 1
        %s1681 = scalar_lea.sflag [#allocation5], %s1680
        %s1682 = sand.u32 %s413, 1
        %s1683 = scalar_lea.vmem [#allocation14], %s1682
        // Predicated region
        $region124: #{tpu_custom_call.1} parent=83 // pred_check
          %p1684 = pneg %p423
        $region125: #{tpu_custom_call.1} parent=83 // pred_check_branch
          %1686 = sbr.rel (%p1684) target = $region127
        $region126: #{tpu_custom_call.1} parent=83 // pred_region
          %s1688 = ssub.s32 16, 16
          %1689 = vsyncadd %s1681, %s1688
          %s1690 = smul.addr %s40, 16
          %s1691 = scalar_lea.hbm %s16, %s1690
          %s1693 = sshll.u32 %s1683, 4
          %s1694 = int_to_ptr.vmem [resolvable:$true] %s1693
          %1696 = dma.vmem_to_hbm [thread:$0]  %s1694, 16, %s1691, %s1681
        $region127: #{tpu_custom_call.1} parent=83 // pred_fallthru
          _
      $region84: #{tpu_custom_call.1} parent=5 // pred_fallthru
        _
      %p1697 = scmp.le.s32.totalorder 2, %s31
      // Predicated region
      $region128: #{tpu_custom_call.1} parent=5 // pred_check
        %p1698 = pneg %p1697
      $region129: #{tpu_custom_call.1} parent=5 // pred_check_branch
        %1700 = sbr.rel (%p1698) target = $region131
      $region130: #{tpu_custom_call.1} parent=5 // pred_region
        %s1701 = ssub.s32 %s31, 2
        // Predicated region
        $region132: #{tpu_custom_call.1} parent=130 // pred_check
          %p1702 = pneg %p429
        $region133: #{tpu_custom_call.1} parent=130 // pred_check_branch
          %1704 = sbr.rel (%p1702) target = $region135
        $region134: #{tpu_custom_call.1} parent=130 // pred_region
          %s1705 = sand.u32 %s414, 1
          %s1706 = scalar_lea.sflag [#allocation5], %s1705
          %s1707 = sand.u32 %s414, 1
          %s1708 = scalar_lea.vmem [#allocation14], %s1707
          %1709 = dma.done %s1706, 16
        $region135: #{tpu_custom_call.1} parent=130 // pred_fallthru
          _
      $region131: #{tpu_custom_call.1} parent=5 // pred_fallthru
        _
    $region6: #{tpu_custom_call.1} parent=1 // loop_footer
      %s35 = sadd.s32 1, %s31
    $region7: #{tpu_custom_call.1} parent=1 // loop_footer_branch
      %30 = sbr.rel target = $region3
    $region8: #{tpu_custom_call.1} parent=1 // loop_exit
      _
    %1710 = vsyncpa [#allocation4], 1
    %s1711 = scalar_lea.sflag [#allocation4], 1
    %1712 = vsyncpa %s1711, 1
    %1713 = vsyncpa [#allocation7], 1
    %1714 = vsyncpa [#allocation10], 1
    %1715 = vsyncpa [#allocation13], 1
    %1716 = vsyncpa [#allocation5], 1
    %s1717 = scalar_lea.sflag [#allocation5], 1
    %1718 = vsyncpa %s1717, 1

</llo_original>
